<compile_context>
chip_gen: v7x
topology: tpu7x:2x2x1
jax: 0.10.0
libtpu: 0.0.40
codegen_flags: <defaults>
</compile_context>

<pallas_src>
import functools
import math

import jax
import jax.numpy as jnp
from jax.experimental import pallas as pl
from jax.experimental.pallas import tpu as pltpu

NEG_INF = -1e9
VMEM_LIMIT_BYTES = 32 * 1024 * 1024
# Matmul tiles: 512x512 bf16 inputs double-buffered + 512x512 f32 accumulator
# is ~5 MiB -> safe on v5e (16 MiB scoped default w/ override), v6e, v7x.
TM_MAX, TN_MAX, TK_MAX = 512, 512, 512
# Attention flash tiles (budgeted for v7x's 64 MiB VMEM).
ATTN_TQ_MAX, ATTN_TK_MAX = 256, 256


def _round_up(x, m):
    return ((x + m - 1) // m) * m


def _pad_axis(x, axis, target):
    pad = target - x.shape[axis]
    if pad == 0:
        return x
    widths = [(0, 0)] * x.ndim
    widths[axis] = (0, pad)
    return jnp.pad(x, widths)


# ----------------------------------------------------------------------------
# Tiled matmul (+ bias, + optional ReLU epilogue)
# ----------------------------------------------------------------------------

def _matmul_kernel(x_ref, w_ref, b_ref, o_ref, acc_ref, *, activation):
    @pl.when(pl.program_id(2) == 0)
    def _():
        acc_ref[...] = jnp.zeros_like(acc_ref)

    acc_ref[...] += jnp.dot(x_ref[...], w_ref[...],
                            preferred_element_type=jnp.float32)

    @pl.when(pl.program_id(2) == pl.num_programs(2) - 1)
    def _():
        out = acc_ref[...] + b_ref[...]
        if activation == "relu":
            out = jnp.maximum(out, 0.0)
        o_ref[...] = out.astype(o_ref.dtype)


def linear(x, w, b, *, activation=None, out_dtype=jnp.bfloat16):
    """(..., K) @ (K, N) + (N,)  via tiled bf16 MXU matmul, f32 accumulation.

    Weights/biases are expected pre-cast (bf16 / f32) by prepare_params();
    astype below is a no-op in that case.  Padding is a no-op for real model
    dims (multiples of 128) and only triggers on tiny test shapes.
    """
    lead = x.shape[:-1]
    K = x.shape[-1]
    N = w.shape[-1]
    x2 = x.reshape(-1, K)
    if x2.dtype != jnp.bfloat16:
        x2 = x2.astype(jnp.bfloat16)
    w2 = w if w.dtype == jnp.bfloat16 else w.astype(jnp.bfloat16)
    b2 = b.astype(jnp.float32).reshape(1, N)
    M = x2.shape[0]

    tm = min(TM_MAX, _round_up(M, 16))          # 16: bf16 packs 2 rows/sublane
    tn = min(TN_MAX, _round_up(N, 128))
    tk = min(TK_MAX, _round_up(K, 128))
    Mp, Np, Kp = _round_up(M, tm), _round_up(N, tn), _round_up(K, tk)

    x2 = _pad_axis(_pad_axis(x2, 0, Mp), 1, Kp)
    w2 = _pad_axis(_pad_axis(w2, 0, Kp), 1, Np)
    b2 = _pad_axis(b2, 1, Np)

    out = pl.pallas_call(
        functools.partial(_matmul_kernel, activation=activation),
        out_shape=jax.ShapeDtypeStruct((Mp, Np), out_dtype),
        grid=(Mp // tm, Np // tn, Kp // tk),
        in_specs=[
            pl.BlockSpec((tm, tk), lambda i, j, k: (i, k)),
            pl.BlockSpec((tk, tn), lambda i, j, k: (k, j)),
            pl.BlockSpec((1, tn), lambda i, j, k: (0, j)),
        ],
        out_specs=pl.BlockSpec((tm, tn), lambda i, j, k: (i, j)),
        scratch_shapes=[pltpu.VMEM((tm, tn), jnp.float32)],
        compiler_params=pltpu.CompilerParams(
            dimension_semantics=("parallel", "parallel", "arbitrary"),
            vmem_limit_bytes=VMEM_LIMIT_BYTES),
    )(x2, w2, b2)
    return out[:M, :N].reshape(*lead, N)


# ----------------------------------------------------------------------------
# Fused  LayerNorm(x [+ residual]) [* non_pad_mask]   (static flags)
# ----------------------------------------------------------------------------

def _layernorm_kernel(x_ref, *rest, eps, has_residual, has_mask):
    idx = 0
    x = x_ref[...].astype(jnp.float32)
    if has_residual:
        x = x + rest[idx][...].astype(jnp.float32)
        idx += 1
    if has_mask:
        m = rest[idx][...]
        idx += 1
    g_ref, b_ref, o_ref = rest[idx], rest[idx + 1], rest[idx + 2]

    mu = jnp.mean(x, axis=-1, keepdims=True)
    var = jnp.mean((x - mu) ** 2, axis=-1, keepdims=True)
    y = (x - mu) * jax.lax.rsqrt(var + eps)
    y = y * g_ref[...] + b_ref[...]
    if has_mask:
        y = y * m
    o_ref[...] = y.astype(o_ref.dtype)


def layer_norm_fused(x, gamma, beta, residual=None, out_mask=None,
                     eps=1e-5, out_dtype=jnp.bfloat16):
    lead = x.shape[:-1]
    D = x.shape[-1]
    x2 = x.reshape(-1, D)
    M = x2.shape[0]
    has_residual = residual is not None
    has_mask = out_mask is not None

    tm = min(256, _round_up(M, 16))
    Mp = _round_up(M, tm)
    x2 = _pad_axis(x2, 0, Mp)

    operands = [x2]
    in_specs = [pl.BlockSpec((tm, D), lambda i: (i, 0))]
    if has_residual:
        operands.append(_pad_axis(residual.reshape(-1, D), 0, Mp))
        in_specs.append(pl.BlockSpec((tm, D), lambda i: (i, 0)))
    if has_mask:
        operands.append(_pad_axis(out_mask.reshape(-1, 1).astype(jnp.float32),
                                  0, Mp))
        in_specs.append(pl.BlockSpec((tm, 1), lambda i: (i, 0)))
    operands += [gamma.astype(jnp.float32).reshape(1, D),
                 beta.astype(jnp.float32).reshape(1, D)]
    in_specs += [pl.BlockSpec((1, D), lambda i: (0, 0)),
                 pl.BlockSpec((1, D), lambda i: (0, 0))]

    out = pl.pallas_call(
        functools.partial(_layernorm_kernel, eps=eps,
                          has_residual=has_residual, has_mask=has_mask),
        out_shape=jax.ShapeDtypeStruct((Mp, D), out_dtype),
        grid=(Mp // tm,),
        in_specs=in_specs,
        out_specs=pl.BlockSpec((tm, D), lambda i: (i, 0)),
        compiler_params=pltpu.CompilerParams(
            dimension_semantics=("parallel",),
            vmem_limit_bytes=VMEM_LIMIT_BYTES),
    )(*operands)
    return out[:M].reshape(*lead, D)


# ----------------------------------------------------------------------------
# Flash-style attention: grid=(batch, q-tiles, k-tiles), online softmax,
# key-pad + optional causal mask built in-kernel, all heads per step.
# Softmax scale is pre-folded into the query projection (see prepare_params).
# ----------------------------------------------------------------------------

def _flash_attention_kernel(q_ref, k_ref, v_ref, kp_ref, o_ref,
                            m_sc, l_sc, acc_sc, *, causal, tq, tk):
    ki = pl.program_id(2)

    @pl.when(ki == 0)
    def _():
        m_sc[...] = jnp.full_like(m_sc, NEG_INF)
        l_sc[...] = jnp.zeros_like(l_sc)
        acc_sc[...] = jnp.zeros_like(acc_sc)

    q = q_ref[0]                                  # (H, tq, dk) bf16, pre-scaled
    k = k_ref[0]                                  # (H, tk, dk) bf16
    s = jnp.einsum("hqd,hkd->hqk", q, k,
                   preferred_element_type=jnp.float32)          # (H, tq, tk)

    allowed = jnp.broadcast_to(kp_ref[0] > 0.5, (tq, tk))       # key padding
    if causal:
        qi = pl.program_id(1)
        row = jax.lax.broadcasted_iota(jnp.int32, (tq, tk), 0) + qi * tq
        col = jax.lax.broadcasted_iota(jnp.int32, (tq, tk), 1) + ki * tk
        allowed = jnp.logical_and(allowed, row >= col)
    s = jnp.where(allowed[None, :, :], s, NEG_INF)

    m_prev = m_sc[...]
    m_new = jnp.maximum(m_prev, jnp.max(s, axis=-1, keepdims=True))
    alpha = jnp.exp(m_prev - m_new)
    p = jnp.exp(s - m_new)
    l_sc[...] = alpha * l_sc[...] + jnp.sum(p, axis=-1, keepdims=True)
    acc_sc[...] = alpha * acc_sc[...] + jnp.einsum(
        "hqk,hkd->hqd", p.astype(jnp.bfloat16), v_ref[0],
        preferred_element_type=jnp.float32)
    m_sc[...] = m_new

    @pl.when(ki == pl.num_programs(2) - 1)
    def _():
        o_ref[0] = (acc_sc[...] *
                    pl.reciprocal(l_sc[...], approx=False)).astype(o_ref.dtype)


def scaled_dot_attention(q, k, v, key_pad, causal):
    """q: (N, H, Tq, dk) (already scaled), k/v: (N, H, Tk, dk),
    key_pad: (N, Tk) in {0,1}."""
    N, H, Tq, dk = q.shape
    Tk = k.shape[2]

    tq = _round_up(Tq, 16) if Tq <= ATTN_TQ_MAX else ATTN_TQ_MAX
    tk = _round_up(Tk, 16) if Tk <= ATTN_TK_MAX else ATTN_TK_MAX
    Tq_p, Tk_p = _round_up(Tq, tq), _round_up(Tk, tk)

    q = _pad_axis(q, 2, Tq_p).astype(jnp.bfloat16)
    k = _pad_axis(k, 2, Tk_p).astype(jnp.bfloat16)
    v = _pad_axis(v, 2, Tk_p).astype(jnp.bfloat16)
    kp = _pad_axis(key_pad.astype(jnp.float32), 1, Tk_p).reshape(N, 1, Tk_p)

    kern = functools.partial(_flash_attention_kernel,
                             causal=causal, tq=tq, tk=tk)
    out = pl.pallas_call(
        kern,
        out_shape=jax.ShapeDtypeStruct((N, H, Tq_p, dk), jnp.bfloat16),
        grid=(N, Tq_p // tq, Tk_p // tk),
        in_specs=[
            pl.BlockSpec((1, H, tq, dk), lambda b, qi, ki: (b, 0, qi, 0)),
            pl.BlockSpec((1, H, tk, dk), lambda b, qi, ki: (b, 0, ki, 0)),
            pl.BlockSpec((1, H, tk, dk), lambda b, qi, ki: (b, 0, ki, 0)),
            pl.BlockSpec((1, 1, tk), lambda b, qi, ki: (b, 0, ki)),
        ],
        out_specs=pl.BlockSpec((1, H, tq, dk), lambda b, qi, ki: (b, 0, qi, 0)),
        scratch_shapes=[
            pltpu.VMEM((H, tq, 1), jnp.float32),     # running max
            pltpu.VMEM((H, tq, 1), jnp.float32),     # running denominator
            pltpu.VMEM((H, tq, dk), jnp.float32),    # output accumulator
        ],
        compiler_params=pltpu.CompilerParams(
            dimension_semantics=("parallel", "parallel", "arbitrary"),
            vmem_limit_bytes=VMEM_LIMIT_BYTES),
    )(q, k, v, kp)
    return out[:, :, :Tq, :]


# ----------------------------------------------------------------------------
# Model glue (plain JAX around the Pallas kernels)
# ----------------------------------------------------------------------------

def sinusoid_pos_enc(max_len, d_model):
    pos = jnp.arange(max_len)[:, None].astype(jnp.float32)
    i = jnp.arange(d_model)[None, :]
    angle = pos / jnp.power(10000.0, (2.0 * (i // 2)) / d_model)
    pe = jnp.where(i % 2 == 0, jnp.sin(angle), jnp.cos(angle))
    return pe.astype(jnp.float32)  # (max_len, d_model)


def length_mask(lengths, T):
    return (jnp.arange(T)[None, :] < lengths[:, None]).astype(jnp.float32)


def multi_head_attention(x_q, x_kv, key_pad, causal, non_pad, p, n_head, dk,
                         self_attn):
    """Post-norm MHA.  key_pad: (N, Tk), non_pad: (N, Tq, 1)."""
    N, Tq, _ = x_q.shape
    Tk = x_kv.shape[1]
    Hd = n_head * dk
    residual = x_q

    if self_attn:
        qkv = linear(x_q, p["w_qkv"], p["b_qkv"])                 # (N, Tq, 3*Hd)
        q, k, v = qkv[..., :Hd], qkv[..., Hd:2 * Hd], qkv[..., 2 * Hd:]
    else:
        q = linear(x_q, p["wq"], p["bq"])
        kv = linear(x_kv, p["w_kv"], p["b_kv"])                   # (N, Tk, 2*Hd)
        k, v = kv[..., :Hd], kv[..., Hd:]

    # TODO(synk): head split/merge kept as XLA layout plumbing (dk < 128).
    def to_heads(t, T):
        return t.reshape(N, T, n_head, dk).transpose(0, 2, 1, 3)  # (N, H, T, dk)

    ctx = scaled_dot_attention(to_heads(q, Tq), to_heads(k, Tk), to_heads(v, Tk),
                               key_pad, causal)
    ctx = ctx.transpose(0, 2, 1, 3).reshape(N, Tq, Hd)
    out = linear(ctx, p["wo"], p["bo"])
    return layer_norm_fused(out, p["ln_g"], p["ln_b"],
                            residual=residual, out_mask=non_pad)


def positionwise_ffn(x, non_pad, p):
    residual = x
    h = linear(x, p["w1"], p["b1"], activation="relu")   # fused bias + ReLU
    h = linear(h, p["w2"], p["b2"])
    return layer_norm_fused(h, p["ln_g"], p["ln_b"],
                            residual=residual, out_mask=non_pad)


def encoder_forward(params, padded_input, input_lengths, cfg):
    N, Ti, _ = padded_input.shape
    key_pad = length_mask(input_lengths, Ti)                       # (N, Ti)
    non_pad = key_pad[:, :, None]                                  # (N, Ti, 1)

    x = linear(padded_input, params["in_w"], params["in_b"])
    x = layer_norm_fused(x, params["in_ln_g"], params["in_ln_b"])
    x = x + params["pos_enc"][:Ti][None, :, :]

    for lp in params["layers"]:
        x = multi_head_attention(x, x, key_pad, False, non_pad,
                                 lp["attn"], cfg["n_head"], cfg["dk"],
                                 self_attn=True)
        x = positionwise_ffn(x, non_pad, lp["ffn"])
    return {"enc_output": x}


def decoder_forward(params, padded_target, encoder_out, input_lengths,
                    target_lengths, cfg):
    # TODO(synk): the reference decoder prepends <sos>/appends <eos> and builds
    # an ignore-id gold; here logits are produced directly for padded_target.
    N, To = padded_target.shape
    Ti = encoder_out.shape[1]

    tgt_key_pad = length_mask(target_lengths, To)                  # (N, To)
    enc_key_pad = length_mask(input_lengths, Ti)                   # (N, Ti)
    non_pad = tgt_key_pad[:, :, None]                              # (N, To, 1)

    emb = jnp.take(params["emb"], padded_target, axis=0)           # (N, To, d)
    x = emb * math.sqrt(cfg["d_model"]) + params["pos_enc"][:To][None, :, :]

    for lp in params["layers"]:
        x = multi_head_attention(x, x, tgt_key_pad, True, non_pad,
                                 lp["slf_attn"], cfg["n_head"], cfg["dk"],
                                 self_attn=True)
        x = multi_head_attention(x, encoder_out, enc_key_pad, False, non_pad,
                                 lp["enc_attn"], cfg["n_head"], cfg["dk"],
                                 self_attn=False)
        x = positionwise_ffn(x, non_pad, lp["ffn"])

    seq_logits = linear(x, params["prj_w"], params["prj_b"],
                        out_dtype=jnp.float32)                     # (N, To, V)
    return {"seq_logits": seq_logits, "dec_output": x}


def transformer_forward(params, padded_input, input_lengths, padded_target,
                        target_lengths, cfg):
    enc_out = encoder_forward(params["encoder"], padded_input, input_lengths, cfg)
    dec_out = decoder_forward(params["decoder"], padded_target,
                              enc_out["enc_output"], input_lengths,
                              target_lengths, cfg)
    dec_out.update(enc_out)
    return dec_out


# ----------------------------------------------------------------------------
# Parameter init (xavier-uniform, as in the module) + one-time prep:
# bf16 weight cast, QKV/KV fusion, softmax-scale folded into q projection.
# ----------------------------------------------------------------------------

def xavier(key, shape):
    bound = math.sqrt(6.0 / (shape[0] + shape[1]))
    return jax.random.uniform(key, shape, jnp.float32, -bound, bound)


def init_attn_params(key, d_model, n_head, dk):
    ks = jax.random.split(key, 4)
    return {
        "wq": xavier(ks[0], (d_model, n_head * dk)), "bq": jnp.zeros((n_head * dk,)),
        "wk": xavier(ks[1], (d_model, n_head * dk)), "bk": jnp.zeros((n_head * dk,)),
        "wv": xavier(ks[2], (d_model, n_head * dk)), "bv": jnp.zeros((n_head * dk,)),
        "wo": xavier(ks[3], (n_head * dk, d_model)), "bo": jnp.zeros((d_model,)),
        "ln_g": jnp.ones((d_model,)), "ln_b": jnp.zeros((d_model,)),
    }


def init_ffn_params(key, d_model, d_ff):
    k1, k2 = jax.random.split(key)
    return {
        "w1": xavier(k1, (d_model, d_ff)), "b1": jnp.zeros((d_ff,)),
        "w2": xavier(k2, (d_ff, d_model)), "b2": jnp.zeros((d_model,)),
        "ln_g": jnp.ones((d_model,)), "ln_b": jnp.zeros((d_model,)),
    }


def init_params(key, cfg):
    d_model, d_ff, n_head, dk = cfg["d_model"], cfg["d_ff"], cfg["n_head"], cfg["dk"]
    k_enc, k_dec = jax.random.split(key)

    eks = jax.random.split(k_enc, 1 + 2 * cfg["n_layers_enc"])
    enc_layers = []
    for l in range(cfg["n_layers_enc"]):
        enc_layers.append({
            "attn": init_attn_params(eks[1 + 2 * l], d_model, n_head, dk),
            "ffn": init_ffn_params(eks[2 + 2 * l], d_model, d_ff),
        })
    encoder = {
        "in_w": xavier(eks[0], (cfg["d_input"], d_model)),
        "in_b": jnp.zeros((d_model,)),
        "in_ln_g": jnp.ones((d_model,)), "in_ln_b": jnp.zeros((d_model,)),
        "pos_enc": sinusoid_pos_enc(cfg["max_len"], d_model),
        "layers": enc_layers,
    }

    dks = jax.random.split(k_dec, 2 + 3 * cfg["n_layers_dec"])
    dec_layers = []
    for l in range(cfg["n_layers_dec"]):
        dec_layers.append({
            "slf_attn": init_attn_params(dks[2 + 3 * l], d_model, n_head, dk),
            "enc_attn": init_attn_params(dks[3 + 3 * l], d_model, n_head, dk),
            "ffn": init_ffn_params(dks[4 + 3 * l], d_model, d_ff),
        })
    decoder = {
        "emb": xavier(dks[0], (cfg["vocab"], d_model)),
        "prj_w": xavier(dks[1], (d_model, cfg["vocab"])),
        "prj_b": jnp.zeros((cfg["vocab"],)),
        "pos_enc": sinusoid_pos_enc(cfg["max_len"], d_model),
        "layers": dec_layers,
    }
    return {"encoder": encoder, "decoder": decoder}


def prepare_params(params, cfg):
    """One-time parameter prep: bf16 weight cast, fused QKV/KV projections,
    softmax scale 1/sqrt(dk) folded into the query projection."""
    dk = cfg["dk"]
    scale = 1.0 / math.sqrt(dk)

    def prep_attn(p, self_attn):
        wq = p["wq"] * scale          # fold softmax scale into q projection
        bq = p["bq"] * scale
        out = {
            "wo": p["wo"].astype(jnp.bfloat16), "bo": p["bo"].astype(jnp.float32),
            "ln_g": p["ln_g"].astype(jnp.float32), "ln_b": p["ln_b"].astype(jnp.float32),
        }
        if self_attn:
            out["w_qkv"] = jnp.concatenate([wq, p["wk"], p["wv"]], axis=1).astype(jnp.bfloat16)
            out["b_qkv"] = jnp.concatenate([bq, p["bk"], p["bv"]], axis=0).astype(jnp.float32)
        else:
            out["wq"] = wq.astype(jnp.bfloat16)
            out["bq"] = bq.astype(jnp.float32)
            out["w_kv"] = jnp.concatenate([p["wk"], p["wv"]], axis=1).astype(jnp.bfloat16)
            out["b_kv"] = jnp.concatenate([p["bk"], p["bv"]], axis=0).astype(jnp.float32)
        return out

    def prep_ffn(p):
        return {
            "w1": p["w1"].astype(jnp.bfloat16), "b1": p["b1"].astype(jnp.float32),
            "w2": p["w2"].astype(jnp.bfloat16), "b2": p["b2"].astype(jnp.float32),
            "ln_g": p["ln_g"].astype(jnp.float32), "ln_b": p["ln_b"].astype(jnp.float32),
        }

    enc = params["encoder"]
    encoder = {
        "in_w": enc["in_w"].astype(jnp.bfloat16),
        "in_b": enc["in_b"].astype(jnp.float32),
        "in_ln_g": enc["in_ln_g"].astype(jnp.float32),
        "in_ln_b": enc["in_ln_b"].astype(jnp.float32),
        "pos_enc": enc["pos_enc"],
        "layers": [{"attn": prep_attn(l["attn"], True), "ffn": prep_ffn(l["ffn"])}
                   for l in enc["layers"]],
    }
    dec = params["decoder"]
    decoder = {
        "emb": dec["emb"],
        "prj_w": dec["prj_w"].astype(jnp.bfloat16),
        "prj_b": dec["prj_b"].astype(jnp.float32),
        "pos_enc": dec["pos_enc"],
        "layers": [{"slf_attn": prep_attn(l["slf_attn"], True),
                    "enc_attn": prep_attn(l["enc_attn"], False),
                    "ffn": prep_ffn(l["ffn"])} for l in dec["layers"]],
    }
    return {"encoder": encoder, "decoder": decoder}


# ----------------------------------------------------------------------------

if __name__ == "__main__":
    cfg = dict(d_input=8, d_model=32, d_ff=64, n_head=4, dk=8,
               vocab=16, n_layers_enc=2, n_layers_dec=2, max_len=64)

    N, Ti, To = 2, 16, 8

    key = jax.random.PRNGKey(0)
    k_in, k_tgt, k_par = jax.random.split(key, 3)

    padded_input = jax.random.normal(k_in, (N, Ti, cfg["d_input"]), jnp.float32)
    input_lengths = jnp.array([16, 12], dtype=jnp.int32)
    padded_target = jax.random.randint(k_tgt, (N, To), 0, cfg["vocab"], jnp.int32)
    target_lengths = jnp.array([8, 6], dtype=jnp.int32)

    params = prepare_params(init_params(k_par, cfg), cfg)

    fwd = jax.jit(lambda p, pi, il, pt, tl:
                  transformer_forward(p, pi, il, pt, tl, cfg))
    outputs = fwd(params, padded_input, input_lengths,
                  padded_target, target_lengths)
    jax.block_until_ready(outputs)

    assert outputs["enc_output"].shape == (N, Ti, cfg["d_model"])
    assert outputs["seq_logits"].shape == (N, To, cfg["vocab"])
    assert bool(jnp.all(jnp.isfinite(outputs["seq_logits"])))
    assert bool(jnp.all(jnp.isfinite(outputs["enc_output"].astype(jnp.float32))))

    print("KERNEL_OK")
</pallas_src>

<mosaic_0001>
module attributes {stable_mosaic.version = 11 : i64} {
  func.func @_matmul_kernel(%arg0: i32, %arg1: i32, %arg2: i32, %arg3: memref<16x128xbf16, #tpu.memory_space<vmem>>, %arg4: memref<128x128xbf16, #tpu.memory_space<vmem>>, %arg5: memref<1x128xf32, #tpu.memory_space<vmem>>, %arg6: memref<16x128xbf16, #tpu.memory_space<vmem>>, %arg7: memref<16x128xf32, #tpu.memory_space<vmem>>) attributes {dimension_semantics = [#tpu.dimension_semantics<parallel>, #tpu.dimension_semantics<parallel>, #tpu.dimension_semantics<arbitrary>], iteration_bounds = array<i64: 1, 1, 1>, scalar_prefetch = 0 : i64, scratch_operands = 1 : i64, tpu.core_type = #tpu.core_type<tc>, window_params = [{transform_indices = @transform_0, window_bounds = array<i64: 16, 128>}, {transform_indices = @transform_1, window_bounds = array<i64: 128, 128>}, {transform_indices = @transform_2, window_bounds = array<i64: 1, 128>}, {transform_indices = @transform_3, window_bounds = array<i64: 16, 128>}]} {
    %c0_i32 = arith.constant 0 : i32
    %0 = arith.cmpi eq, %arg2, %c0_i32 : i32
    %1 = arith.extui %0 : i1 to i32
    %c0_i32_0 = arith.constant 0 : i32
    %2 = arith.cmpi ne, %1, %c0_i32_0 : i32
    scf.if %2 {
      %cst_10 = arith.constant 0.000000e+00 : f32
      %12 = vector.broadcast %cst_10 : f32 to vector<16x128xf32>
      %c0_11 = arith.constant 0 : index
      %c0_12 = arith.constant 0 : index
      %13 = vector.load %arg7[%c0_11, %c0_12] : memref<16x128xf32, #tpu.memory_space<vmem>>, vector<16x128xf32>
      tpu.vector_store %arg7[%c0_11, %c0_12], %12 {strides = array<i32>} : memref<16x128xf32, #tpu.memory_space<vmem>>, vector<16x128xf32>,
    } else {
    }
    %c0 = arith.constant 0 : index
    %c0_1 = arith.constant 0 : index
    %3 = vector.load %arg7[%c0, %c0_1] : memref<16x128xf32, #tpu.memory_space<vmem>>, vector<16x128xf32>
    %c0_2 = arith.constant 0 : index
    %c0_3 = arith.constant 0 : index
    %4 = vector.load %arg3[%c0_2, %c0_3] : memref<16x128xbf16, #tpu.memory_space<vmem>>, vector<16x128xbf16>
    %c0_4 = arith.constant 0 : index
    %c0_5 = arith.constant 0 : index
    %5 = vector.load %arg4[%c0_4, %c0_5] : memref<128x128xbf16, #tpu.memory_space<vmem>>, vector<128x128xbf16>
    %cst = arith.constant dense<0.000000e+00> : vector<16x128xf32>
    %6 = tpu.matmul %4, %5, %cst {dimension_numbers = #tpu.dot_dimension_numbers<[1], [0], [0], [1], [0, 0, 1, 1], [], []>} : vector<16x128xbf16>, vector<128x128xbf16>, vector<16x128xf32> -> vector<16x128xf32>
    %7 = arith.addf %3, %6 : vector<16x128xf32>
    %c0_6 = arith.constant 0 : index
    %c0_7 = arith.constant 0 : index
    %8 = vector.load %arg7[%c0_6, %c0_7] : memref<16x128xf32, #tpu.memory_space<vmem>>, vector<16x128xf32>
    tpu.vector_store %arg7[%c0_6, %c0_7], %7 {strides = array<i32>} : memref<16x128xf32, #tpu.memory_space<vmem>>, vector<16x128xf32>,
    %c0_i32_8 = arith.constant 0 : i32
    %9 = arith.cmpi eq, %arg2, %c0_i32_8 : i32
    %10 = arith.extui %9 : i1 to i32
    %c0_i32_9 = arith.constant 0 : i32
    %11 = arith.cmpi ne, %10, %c0_i32_9 : i32
    scf.if %11 {
      %c0_10 = arith.constant 0 : index
      %c0_11 = arith.constant 0 : index
      %12 = vector.load %arg7[%c0_10, %c0_11] : memref<16x128xf32, #tpu.memory_space<vmem>>, vector<16x128xf32>
      %c0_12 = arith.constant 0 : index
      %c0_13 = arith.constant 0 : index
      %13 = vector.load %arg5[%c0_12, %c0_13] : memref<1x128xf32, #tpu.memory_space<vmem>>, vector<1x128xf32>
      %14 = vector.broadcast %13 : vector<1x128xf32> to vector<16x128xf32>
      %15 = arith.addf %12, %14 : vector<16x128xf32>
      %16 = arith.truncf %15 : vector<16x128xf32> to vector<16x128xbf16>
      %c0_14 = arith.constant 0 : index
      %c0_15 = arith.constant 0 : index
      %17 = vector.load %arg6[%c0_14, %c0_15] : memref<16x128xbf16, #tpu.memory_space<vmem>>, vector<16x128xbf16>
      tpu.vector_store %arg6[%c0_14, %c0_15], %16 {strides = array<i32>} : memref<16x128xbf16, #tpu.memory_space<vmem>>, vector<16x128xbf16>,
    } else {
    }
    return
  }
  func.func @transform_0(%arg0: i32, %arg1: i32, %arg2: i32) -> (i32, i32) {
    %c0_i32 = arith.constant 0 : i32
    return %arg0, %arg2 : i32, i32
  }
  func.func @transform_1(%arg0: i32, %arg1: i32, %arg2: i32) -> (i32, i32) {
    %c0_i32 = arith.constant 0 : i32
    return %arg2, %arg1 : i32, i32
  }
  func.func @transform_2(%arg0: i32, %arg1: i32, %arg2: i32) -> (i32, i32) {
    %c0_i32 = arith.constant 0 : i32
    %c0_i32_0 = arith.constant 0 : i32
    return %c0_i32, %arg1 : i32, i32
  }
  func.func @transform_3(%arg0: i32, %arg1: i32, %arg2: i32) -> (i32, i32) {
    %c0_i32 = arith.constant 0 : i32
    return %arg0, %arg1 : i32, i32
  }
}

module attributes {stable_mosaic.version = 11 : i64} {
  func.func @_flash_attention_kernel(%arg0: i32, %arg1: i32, %arg2: i32, %arg3: memref<1x4x16x8xbf16, #tpu.memory_space<vmem>>, %arg4: memref<1x4x16x8xbf16, #tpu.memory_space<vmem>>, %arg5: memref<1x4x16x8xbf16, #tpu.memory_space<vmem>>, %arg6: memref<1x1x16xf32, #tpu.memory_space<vmem>>, %arg7: memref<1x4x16x8xbf16, #tpu.memory_space<vmem>>, %arg8: memref<4x16x1xf32, #tpu.memory_space<vmem>>, %arg9: memref<4x16x1xf32, #tpu.memory_space<vmem>>, %arg10: memref<4x16x8xf32, #tpu.memory_space<vmem>>) attributes {dimension_semantics = [#tpu.dimension_semantics<parallel>, #tpu.dimension_semantics<parallel>, #tpu.dimension_semantics<arbitrary>], iteration_bounds = array<i64: 2, 1, 1>, scalar_prefetch = 0 : i64, scratch_operands = 3 : i64, tpu.core_type = #tpu.core_type<tc>, window_params = [{transform_indices = @transform_0, window_bounds = array<i64: 1, 4, 16, 8>}, {transform_indices = @transform_1, window_bounds = array<i64: 1, 4, 16, 8>}, {transform_indices = @transform_2, window_bounds = array<i64: 1, 4, 16, 8>}, {transform_indices = @transform_3, window_bounds = array<i64: 1, 1, 16>}, {transform_indices = @transform_4, window_bounds = array<i64: 1, 4, 16, 8>}]} {
    %c0_i32 = arith.constant 0 : i32
    %0 = arith.cmpi eq, %arg2, %c0_i32 : i32
    %1 = arith.extui %0 : i1 to i32
    %c0_i32_0 = arith.constant 0 : i32
    %2 = arith.cmpi ne, %1, %c0_i32_0 : i32
    scf.if %2 {
      %cst_41 = arith.constant -1.000000e+09 : f32
      %57 = vector.broadcast %cst_41 : f32 to vector<4x16x1xf32>
      %c0_42 = arith.constant 0 : index
      %c0_43 = arith.constant 0 : index
      %c0_44 = arith.constant 0 : index
      %58 = vector.load %arg8[%c0_42, %c0_43, %c0_44] : memref<4x16x1xf32, #tpu.memory_space<vmem>>, vector<4x16x1xf32>
      tpu.vector_store %arg8[%c0_42, %c0_43, %c0_44], %57 {strides = array<i32>} : memref<4x16x1xf32, #tpu.memory_space<vmem>>, vector<4x16x1xf32>,
      %cst_45 = arith.constant 0.000000e+00 : f32
      %59 = vector.broadcast %cst_45 : f32 to vector<4x16x1xf32>
      %c0_46 = arith.constant 0 : index
      %c0_47 = arith.constant 0 : index
      %c0_48 = arith.constant 0 : index
      %60 = vector.load %arg9[%c0_46, %c0_47, %c0_48] : memref<4x16x1xf32, #tpu.memory_space<vmem>>, vector<4x16x1xf32>
      tpu.vector_store %arg9[%c0_46, %c0_47, %c0_48], %59 {strides = array<i32>} : memref<4x16x1xf32, #tpu.memory_space<vmem>>, vector<4x16x1xf32>,
      %cst_49 = arith.constant 0.000000e+00 : f32
      %61 = vector.broadcast %cst_49 : f32 to vector<4x16x8xf32>
      %c0_50 = arith.constant 0 : index
      %c0_51 = arith.constant 0 : index
      %c0_52 = arith.constant 0 : index
      %62 = vector.load %arg10[%c0_50, %c0_51, %c0_52] : memref<4x16x8xf32, #tpu.memory_space<vmem>>, vector<4x16x8xf32>
      tpu.vector_store %arg10[%c0_50, %c0_51, %c0_52], %61 {strides = array<i32>} : memref<4x16x8xf32, #tpu.memory_space<vmem>>, vector<4x16x8xf32>,
    } else {
    }
    %c0 = arith.constant 0 : index
    %c0_1 = arith.constant 0 : index
    %c0_2 = arith.constant 0 : index
    %c0_3 = arith.constant 0 : index
    %3 = vector.load %arg3[%c0, %c0_1, %c0_2, %c0_3] : memref<1x4x16x8xbf16, #tpu.memory_space<vmem>>, vector<1x4x16x8xbf16>
    %4 = vector.shape_cast %3 : vector<1x4x16x8xbf16> to vector<4x16x8xbf16>
    %c0_4 = arith.constant 0 : index
    %c0_5 = arith.constant 0 : index
    %c0_6 = arith.constant 0 : index
    %c0_7 = arith.constant 0 : index
    %5 = vector.load %arg4[%c0_4, %c0_5, %c0_6, %c0_7] : memref<1x4x16x8xbf16, #tpu.memory_space<vmem>>, vector<1x4x16x8xbf16>
    %6 = vector.shape_cast %5 : vector<1x4x16x8xbf16> to vector<4x16x8xbf16>
    "tpu.trace_start"() <{level = 10 : i32, message = "hqd,hkd->hqk"}> : () -> ()
    %cst = arith.constant dense<0.000000e+00> : vector<4x16x16xf32>
    %7 = tpu.matmul %4, %6, %cst {dimension_numbers = #tpu.dot_dimension_numbers<[2], [2], [1], [1], [0, 0, 0, 1, 1, 1], [0], [0]>} : vector<4x16x8xbf16>, vector<4x16x8xbf16>, vector<4x16x16xf32> -> vector<4x16x16xf32>
    "tpu.trace_stop"() : () -> ()
    %c0_8 = arith.constant 0 : index
    %c0_9 = arith.constant 0 : index
    %c0_10 = arith.constant 0 : index
    %8 = vector.load %arg6[%c0_8, %c0_9, %c0_10] : memref<1x1x16xf32, #tpu.memory_space<vmem>>, vector<1x1x16xf32>
    %9 = vector.shape_cast %8 : vector<1x1x16xf32> to vector<1x16xf32>
    %cst_11 = arith.constant 5.000000e-01 : f32
    %10 = vector.broadcast %cst_11 : f32 to vector<1x16xf32>
    %11 = arith.cmpf ogt, %9, %10 : vector<1x16xf32>
    %12 = vector.shape_cast %11 : vector<1x16xi1> to vector<1x16xi1>
    %13 = vector.broadcast %12 : vector<1x16xi1> to vector<16x16xi1>
    %14 = tpu.iota {dimensions = array<i32: 0>} : vector<16x16xi32>
    %c16_i32 = arith.constant 16 : i32
    %15 = arith.muli %arg1, %c16_i32 : i32
    %16 = vector.broadcast %15 : i32 to vector<16x16xi32>
    %17 = arith.addi %14, %16 : vector<16x16xi32>
    %18 = tpu.iota {dimensions = array<i32: 1>} : vector<16x16xi32>
    %c16_i32_12 = arith.constant 16 : i32
    %19 = arith.muli %arg2, %c16_i32_12 : i32
    %20 = vector.broadcast %19 : i32 to vector<16x16xi32>
    %21 = arith.addi %18, %20 : vector<16x16xi32>
    %22 = arith.cmpi sge, %17, %21 : vector<16x16xi32>
    %23 = arith.andi %13, %22 : vector<16x16xi1>
    %24 = vector.shape_cast %23 : vector<16x16xi1> to vector<1x16x16xi1>
    %cst_13 = arith.constant -1.000000e+09 : f32
    %25 = vector.shape_cast %24 : vector<1x16x16xi1> to vector<1x16x16xi1>
    %26 = vector.broadcast %25 : vector<1x16x16xi1> to vector<4x16x16xi1>
    %27 = vector.broadcast %cst_13 : f32 to vector<4x16x16xf32>
    %28 = arith.select %26, %7, %27 : vector<4x16x16xi1>, vector<4x16x16xf32>
    %c0_14 = arith.constant 0 : index
    %c0_15 = arith.constant 0 : index
    %c0_16 = arith.constant 0 : index
    %29 = vector.load %arg8[%c0_14, %c0_15, %c0_16] : memref<4x16x1xf32, #tpu.memory_space<vmem>>, vector<4x16x1xf32>
    %cst_17 = arith.constant dense<0xFF800000> : vector<4x16xf32>
    %30 = vector.multi_reduction <maximumf>, %28, %cst_17 [2] : vector<4x16x16xf32> to vector<4x16xf32>
    %31 = vector.shape_cast %30 : vector<4x16xf32> to vector<4x16x1xf32>
    %32 = arith.maximumf %29, %31 : vector<4x16x1xf32>
    %33 = arith.subf %29, %32 : vector<4x16x1xf32>
    %34 = math.exp %33 : vector<4x16x1xf32>
    %35 = vector.broadcast %32 : vector<4x16x1xf32> to vector<4x16x16xf32>
    %36 = arith.subf %28, %35 : vector<4x16x16xf32>
    %37 = math.exp %36 : vector<4x16x16xf32>
    %c0_18 = arith.constant 0 : index
    %c0_19 = arith.constant 0 : index
    %c0_20 = arith.constant 0 : index
    %38 = vector.load %arg9[%c0_18, %c0_19, %c0_20] : memref<4x16x1xf32, #tpu.memory_space<vmem>>, vector<4x16x1xf32>
    %39 = arith.mulf %34, %38 : vector<4x16x1xf32>
    %cst_21 = arith.constant dense<0.000000e+00> : vector<4x16xf32>
    %40 = vector.multi_reduction <add>, %37, %cst_21 [2] : vector<4x16x16xf32> to vector<4x16xf32>
    %41 = vector.shape_cast %40 : vector<4x16xf32> to vector<4x16x1xf32>
    %42 = arith.addf %39, %41 : vector<4x16x1xf32>
    %c0_22 = arith.constant 0 : index
    %c0_23 = arith.constant 0 : index
    %c0_24 = arith.constant 0 : index
    %43 = vector.load %arg9[%c0_22, %c0_23, %c0_24] : memref<4x16x1xf32, #tpu.memory_space<vmem>>, vector<4x16x1xf32>
    tpu.vector_store %arg9[%c0_22, %c0_23, %c0_24], %42 {strides = array<i32>} : memref<4x16x1xf32, #tpu.memory_space<vmem>>, vector<4x16x1xf32>,
    %c0_25 = arith.constant 0 : index
    %c0_26 = arith.constant 0 : index
    %c0_27 = arith.constant 0 : index
    %44 = vector.load %arg10[%c0_25, %c0_26, %c0_27] : memref<4x16x8xf32, #tpu.memory_space<vmem>>, vector<4x16x8xf32>
    %45 = vector.broadcast %34 : vector<4x16x1xf32> to vector<4x16x8xf32>
    %46 = arith.mulf %45, %44 : vector<4x16x8xf32>
    %47 = arith.truncf %37 : vector<4x16x16xf32> to vector<4x16x16xbf16>
    %c0_28 = arith.constant 0 : index
    %c0_29 = arith.constant 0 : index
    %c0_30 = arith.constant 0 : index
    %c0_31 = arith.constant 0 : index
    %48 = vector.load %arg5[%c0_28, %c0_29, %c0_30, %c0_31] : memref<1x4x16x8xbf16, #tpu.memory_space<vmem>>, vector<1x4x16x8xbf16>
    %49 = vector.shape_cast %48 : vector<1x4x16x8xbf16> to vector<4x16x8xbf16>
    "tpu.trace_start"() <{level = 10 : i32, message = "hqk,hkd->hqd"}> : () -> ()
    %cst_32 = arith.constant dense<0.000000e+00> : vector<4x16x8xf32>
    %50 = tpu.matmul %47, %49, %cst_32 {dimension_numbers = #tpu.dot_dimension_numbers<[2], [1], [1], [2], [0, 0, 0, 1, 1, 2], [0], [0]>} : vector<4x16x16xbf16>, vector<4x16x8xbf16>, vector<4x16x8xf32> -> vector<4x16x8xf32>
    "tpu.trace_stop"() : () -> ()
    %51 = arith.addf %46, %50 : vector<4x16x8xf32>
    %c0_33 = arith.constant 0 : index
    %c0_34 = arith.constant 0 : index
    %c0_35 = arith.constant 0 : index
    %52 = vector.load %arg10[%c0_33, %c0_34, %c0_35] : memref<4x16x8xf32, #tpu.memory_space<vmem>>, vector<4x16x8xf32>
    tpu.vector_store %arg10[%c0_33, %c0_34, %c0_35], %51 {strides = array<i32>} : memref<4x16x8xf32, #tpu.memory_space<vmem>>, vector<4x16x8xf32>,
    %c0_36 = arith.constant 0 : index
    %c0_37 = arith.constant 0 : index
    %c0_38 = arith.constant 0 : index
    %53 = vector.load %arg8[%c0_36, %c0_37, %c0_38] : memref<4x16x1xf32, #tpu.memory_space<vmem>>, vector<4x16x1xf32>
    tpu.vector_store %arg8[%c0_36, %c0_37, %c0_38], %32 {strides = array<i32>} : memref<4x16x1xf32, #tpu.memory_space<vmem>>, vector<4x16x1xf32>,
    %c0_i32_39 = arith.constant 0 : i32
    %54 = arith.cmpi eq, %arg2, %c0_i32_39 : i32
    %55 = arith.extui %54 : i1 to i32
    %c0_i32_40 = arith.constant 0 : i32
    %56 = arith.cmpi ne, %55, %c0_i32_40 : i32
    scf.if %56 {
      %c0_41 = arith.constant 0 : index
      %c0_42 = arith.constant 0 : index
      %c0_43 = arith.constant 0 : index
      %57 = vector.load %arg10[%c0_41, %c0_42, %c0_43] : memref<4x16x8xf32, #tpu.memory_space<vmem>>, vector<4x16x8xf32>
      %c0_44 = arith.constant 0 : index
      %c0_45 = arith.constant 0 : index
      %c0_46 = arith.constant 0 : index
      %58 = vector.load %arg9[%c0_44, %c0_45, %c0_46] : memref<4x16x1xf32, #tpu.memory_space<vmem>>, vector<4x16x1xf32>
      %59 = tpu.reciprocal %58 : vector<4x16x1xf32> -> vector<4x16x1xf32>
      %60 = vector.broadcast %59 : vector<4x16x1xf32> to vector<4x16x8xf32>
      %61 = arith.mulf %57, %60 : vector<4x16x8xf32>
      %62 = arith.truncf %61 : vector<4x16x8xf32> to vector<4x16x8xbf16>
      %c0_47 = arith.constant 0 : index
      %c0_48 = arith.constant 0 : index
      %c0_49 = arith.constant 0 : index
      %c0_50 = arith.constant 0 : index
      %63 = vector.load %arg7[%c0_47, %c0_48, %c0_49, %c0_50] : memref<1x4x16x8xbf16, #tpu.memory_space<vmem>>, vector<1x4x16x8xbf16>
      %64 = vector.shape_cast %63 : vector<1x4x16x8xbf16> to vector<4x16x8xbf16>
      %65 = vector.shape_cast %62 : vector<4x16x8xbf16> to vector<1x4x16x8xbf16>
      tpu.vector_store %arg7[%c0_47, %c0_48, %c0_49, %c0_50], %65 {strides = array<i32>} : memref<1x4x16x8xbf16, #tpu.memory_space<vmem>>, vector<1x4x16x8xbf16>,
    } else {
    }
    return
  }
  func.func @transform_0(%arg0: i32, %arg1: i32, %arg2: i32) -> (i32, i32, i32, i32) {
    %c0_i32 = arith.constant 0 : i32
    %c0_i32_0 = arith.constant 0 : i32
    %c0_i32_1 = arith.constant 0 : i32
    return %arg0, %c0_i32, %arg1, %c0_i32_0 : i32, i32, i32, i32
  }
  func.func @transform_1(%arg0: i32, %arg1: i32, %arg2: i32) -> (i32, i32, i32, i32) {
    %c0_i32 = arith.constant 0 : i32
    %c0_i32_0 = arith.constant 0 : i32
    %c0_i32_1 = arith.constant 0 : i32
    return %arg0, %c0_i32, %arg2, %c0_i32_0 : i32, i32, i32, i32
  }
  func.func @transform_2(%arg0: i32, %arg1: i32, %arg2: i32) -> (i32, i32, i32, i32) {
    %c0_i32 = arith.constant 0 : i32
    %c0_i32_0 = arith.constant 0 : i32
    %c0_i32_1 = arith.constant 0 : i32
    return %arg0, %c0_i32, %arg2, %c0_i32_0 : i32, i32, i32, i32
  }
  func.func @transform_3(%arg0: i32, %arg1: i32, %arg2: i32) -> (i32, i32, i32) {
    %c0_i32 = arith.constant 0 : i32
    %c0_i32_0 = arith.constant 0 : i32
    return %arg0, %c0_i32, %arg2 : i32, i32, i32
  }
  func.func @transform_4(%arg0: i32, %arg1: i32, %arg2: i32) -> (i32, i32, i32, i32) {
    %c0_i32 = arith.constant 0 : i32
    %c0_i32_0 = arith.constant 0 : i32
    %c0_i32_1 = arith.constant 0 : i32
    return %arg0, %c0_i32, %arg1, %c0_i32_0 : i32, i32, i32, i32
  }
}

module attributes {stable_mosaic.version = 11 : i64} {
  func.func @_layernorm_kernel(%arg0: i32, %arg1: memref<16x32xbf16, #tpu.memory_space<vmem>>, %arg2: memref<16x32xf32, #tpu.memory_space<vmem>>, %arg3: memref<16x1xf32, #tpu.memory_space<vmem>>, %arg4: memref<1x32xf32, #tpu.memory_space<vmem>>, %arg5: memref<1x32xf32, #tpu.memory_space<vmem>>, %arg6: memref<16x32xbf16, #tpu.memory_space<vmem>>) attributes {dimension_semantics = [#tpu.dimension_semantics<parallel>], iteration_bounds = array<i64: 1>, scalar_prefetch = 0 : i64, scratch_operands = 0 : i64, tpu.core_type = #tpu.core_type<tc>, window_params = [{transform_indices = @transform_0, window_bounds = array<i64: 16, 32>}, {transform_indices = @transform_1, window_bounds = array<i64: 16, 32>}, {transform_indices = @transform_2, window_bounds = array<i64: 16, 1>}, {pipeline_mode = #tpu.pipeline_mode<synchronous>, transform_indices = @transform_3, window_bounds = array<i64: 1, 32>}, {pipeline_mode = #tpu.pipeline_mode<synchronous>, transform_indices = @transform_4, window_bounds = array<i64: 1, 32>}, {transform_indices = @transform_5, window_bounds = array<i64: 16, 32>}]} {
    %c0 = arith.constant 0 : index
    %c0_0 = arith.constant 0 : index
    %0 = vector.load %arg1[%c0, %c0_0] : memref<16x32xbf16, #tpu.memory_space<vmem>>, vector<16x32xbf16>
    %1 = arith.extf %0 : vector<16x32xbf16> to vector<16x32xf32>
    %c0_1 = arith.constant 0 : index
    %c0_2 = arith.constant 0 : index
    %2 = vector.load %arg2[%c0_1, %c0_2] : memref<16x32xf32, #tpu.memory_space<vmem>>, vector<16x32xf32>
    %3 = arith.addf %1, %2 : vector<16x32xf32>
    %c0_3 = arith.constant 0 : index
    %c0_4 = arith.constant 0 : index
    %4 = vector.load %arg3[%c0_3, %c0_4] : memref<16x1xf32, #tpu.memory_space<vmem>>, vector<16x1xf32>
    %cst = arith.constant dense<0.000000e+00> : vector<16xf32>
    %5 = vector.multi_reduction <add>, %3, %cst [1] : vector<16x32xf32> to vector<16xf32>
    %6 = vector.shape_cast %5 : vector<16xf32> to vector<16x1xf32>
    %cst_5 = arith.constant 3.200000e+01 : f32
    %7 = vector.broadcast %cst_5 : f32 to vector<16x1xf32>
    %8 = arith.divf %6, %7 : vector<16x1xf32>
    %9 = vector.broadcast %8 : vector<16x1xf32> to vector<16x32xf32>
    %10 = arith.subf %3, %9 : vector<16x32xf32>
    %11 = arith.mulf %10, %10 : vector<16x32xf32>
    %cst_6 = arith.constant dense<0.000000e+00> : vector<16xf32>
    %12 = vector.multi_reduction <add>, %11, %cst_6 [1] : vector<16x32xf32> to vector<16xf32>
    %13 = vector.shape_cast %12 : vector<16xf32> to vector<16x1xf32>
    %cst_7 = arith.constant 3.200000e+01 : f32
    %14 = vector.broadcast %cst_7 : f32 to vector<16x1xf32>
    %15 = arith.divf %13, %14 : vector<16x1xf32>
    %16 = vector.broadcast %8 : vector<16x1xf32> to vector<16x32xf32>
    %17 = arith.subf %3, %16 : vector<16x32xf32>
    %cst_8 = arith.constant 9.99999974E-6 : f32
    %18 = vector.broadcast %cst_8 : f32 to vector<16x1xf32>
    %19 = arith.addf %15, %18 : vector<16x1xf32>
    %20 = math.rsqrt %19 : vector<16x1xf32>
    %21 = vector.broadcast %20 : vector<16x1xf32> to vector<16x32xf32>
    %22 = arith.mulf %17, %21 : vector<16x32xf32>
    %c0_9 = arith.constant 0 : index
    %c0_10 = arith.constant 0 : index
    %23 = vector.load %arg4[%c0_9, %c0_10] : memref<1x32xf32, #tpu.memory_space<vmem>>, vector<1x32xf32>
    %24 = vector.broadcast %23 : vector<1x32xf32> to vector<16x32xf32>
    %25 = arith.mulf %22, %24 : vector<16x32xf32>
    %c0_11 = arith.constant 0 : index
    %c0_12 = arith.constant 0 : index
    %26 = vector.load %arg5[%c0_11, %c0_12] : memref<1x32xf32, #tpu.memory_space<vmem>>, vector<1x32xf32>
    %27 = vector.broadcast %26 : vector<1x32xf32> to vector<16x32xf32>
    %28 = arith.addf %25, %27 : vector<16x32xf32>
    %29 = vector.broadcast %4 : vector<16x1xf32> to vector<16x32xf32>
    %30 = arith.mulf %28, %29 : vector<16x32xf32>
    %31 = arith.truncf %30 : vector<16x32xf32> to vector<16x32xbf16>
    %c0_13 = arith.constant 0 : index
    %c0_14 = arith.constant 0 : index
    %32 = vector.load %arg6[%c0_13, %c0_14] : memref<16x32xbf16, #tpu.memory_space<vmem>>, vector<16x32xbf16>
    tpu.vector_store %arg6[%c0_13, %c0_14], %31 {strides = array<i32>} : memref<16x32xbf16, #tpu.memory_space<vmem>>, vector<16x32xbf16>,
    return
  }
  func.func @transform_0(%arg0: i32) -> (i32, i32) {
    %c0_i32 = arith.constant 0 : i32
    %c0_i32_0 = arith.constant 0 : i32
    return %arg0, %c0_i32 : i32, i32
  }
  func.func @transform_1(%arg0: i32) -> (i32, i32) {
    %c0_i32 = arith.constant 0 : i32
    %c0_i32_0 = arith.constant 0 : i32
    return %arg0, %c0_i32 : i32, i32
  }
  func.func @transform_2(%arg0: i32) -> (i32, i32) {
    %c0_i32 = arith.constant 0 : i32
    %c0_i32_0 = arith.constant 0 : i32
    return %arg0, %c0_i32 : i32, i32
  }
  func.func @transform_3(%arg0: i32) -> (i32, i32) {
    %c0_i32 = arith.constant 0 : i32
    %c0_i32_0 = arith.constant 0 : i32
    %c0_i32_1 = arith.constant 0 : i32
    return %c0_i32, %c0_i32_0 : i32, i32
  }
  func.func @transform_4(%arg0: i32) -> (i32, i32) {
    %c0_i32 = arith.constant 0 : i32
    %c0_i32_0 = arith.constant 0 : i32
    %c0_i32_1 = arith.constant 0 : i32
    return %c0_i32, %c0_i32_0 : i32, i32
  }
  func.func @transform_5(%arg0: i32) -> (i32, i32) {
    %c0_i32 = arith.constant 0 : i32
    %c0_i32_0 = arith.constant 0 : i32
    return %arg0, %c0_i32 : i32, i32
  }
}

module attributes {stable_mosaic.version = 11 : i64} {
  func.func @_matmul_kernel(%arg0: i32, %arg1: i32, %arg2: i32, %arg3: memref<32x128xbf16, #tpu.memory_space<vmem>>, %arg4: memref<128x128xbf16, #tpu.memory_space<vmem>>, %arg5: memref<1x128xf32, #tpu.memory_space<vmem>>, %arg6: memref<32x128xbf16, #tpu.memory_space<vmem>>, %arg7: memref<32x128xf32, #tpu.memory_space<vmem>>) attributes {dimension_semantics = [#tpu.dimension_semantics<parallel>, #tpu.dimension_semantics<parallel>, #tpu.dimension_semantics<arbitrary>], iteration_bounds = array<i64: 1, 1, 1>, scalar_prefetch = 0 : i64, scratch_operands = 1 : i64, tpu.core_type = #tpu.core_type<tc>, window_params = [{transform_indices = @transform_0, window_bounds = array<i64: 32, 128>}, {transform_indices = @transform_1, window_bounds = array<i64: 128, 128>}, {transform_indices = @transform_2, window_bounds = array<i64: 1, 128>}, {transform_indices = @transform_3, window_bounds = array<i64: 32, 128>}]} {
    %c0_i32 = arith.constant 0 : i32
    %0 = arith.cmpi eq, %arg2, %c0_i32 : i32
    %1 = arith.extui %0 : i1 to i32
    %c0_i32_0 = arith.constant 0 : i32
    %2 = arith.cmpi ne, %1, %c0_i32_0 : i32
    scf.if %2 {
      %cst_10 = arith.constant 0.000000e+00 : f32
      %12 = vector.broadcast %cst_10 : f32 to vector<32x128xf32>
      %c0_11 = arith.constant 0 : index
      %c0_12 = arith.constant 0 : index
      %13 = vector.load %arg7[%c0_11, %c0_12] : memref<32x128xf32, #tpu.memory_space<vmem>>, vector<32x128xf32>
      tpu.vector_store %arg7[%c0_11, %c0_12], %12 {strides = array<i32>} : memref<32x128xf32, #tpu.memory_space<vmem>>, vector<32x128xf32>,
    } else {
    }
    %c0 = arith.constant 0 : index
    %c0_1 = arith.constant 0 : index
    %3 = vector.load %arg7[%c0, %c0_1] : memref<32x128xf32, #tpu.memory_space<vmem>>, vector<32x128xf32>
    %c0_2 = arith.constant 0 : index
    %c0_3 = arith.constant 0 : index
    %4 = vector.load %arg3[%c0_2, %c0_3] : memref<32x128xbf16, #tpu.memory_space<vmem>>, vector<32x128xbf16>
    %c0_4 = arith.constant 0 : index
    %c0_5 = arith.constant 0 : index
    %5 = vector.load %arg4[%c0_4, %c0_5] : memref<128x128xbf16, #tpu.memory_space<vmem>>, vector<128x128xbf16>
    %cst = arith.constant dense<0.000000e+00> : vector<32x128xf32>
    %6 = tpu.matmul %4, %5, %cst {dimension_numbers = #tpu.dot_dimension_numbers<[1], [0], [0], [1], [0, 0, 1, 1], [], []>} : vector<32x128xbf16>, vector<128x128xbf16>, vector<32x128xf32> -> vector<32x128xf32>
    %7 = arith.addf %3, %6 : vector<32x128xf32>
    %c0_6 = arith.constant 0 : index
    %c0_7 = arith.constant 0 : index
    %8 = vector.load %arg7[%c0_6, %c0_7] : memref<32x128xf32, #tpu.memory_space<vmem>>, vector<32x128xf32>
    tpu.vector_store %arg7[%c0_6, %c0_7], %7 {strides = array<i32>} : memref<32x128xf32, #tpu.memory_space<vmem>>, vector<32x128xf32>,
    %c0_i32_8 = arith.constant 0 : i32
    %9 = arith.cmpi eq, %arg2, %c0_i32_8 : i32
    %10 = arith.extui %9 : i1 to i32
    %c0_i32_9 = arith.constant 0 : i32
    %11 = arith.cmpi ne, %10, %c0_i32_9 : i32
    scf.if %11 {
      %c0_10 = arith.constant 0 : index
      %c0_11 = arith.constant 0 : index
      %12 = vector.load %arg7[%c0_10, %c0_11] : memref<32x128xf32, #tpu.memory_space<vmem>>, vector<32x128xf32>
      %c0_12 = arith.constant 0 : index
      %c0_13 = arith.constant 0 : index
      %13 = vector.load %arg5[%c0_12, %c0_13] : memref<1x128xf32, #tpu.memory_space<vmem>>, vector<1x128xf32>
      %14 = vector.broadcast %13 : vector<1x128xf32> to vector<32x128xf32>
      %15 = arith.addf %12, %14 : vector<32x128xf32>
      %16 = arith.truncf %15 : vector<32x128xf32> to vector<32x128xbf16>
      %c0_14 = arith.constant 0 : index
      %c0_15 = arith.constant 0 : index
      %17 = vector.load %arg6[%c0_14, %c0_15] : memref<32x128xbf16, #tpu.memory_space<vmem>>, vector<32x128xbf16>
      tpu.vector_store %arg6[%c0_14, %c0_15], %16 {strides = array<i32>} : memref<32x128xbf16, #tpu.memory_space<vmem>>, vector<32x128xbf16>,
    } else {
    }
    return
  }
  func.func @transform_0(%arg0: i32, %arg1: i32, %arg2: i32) -> (i32, i32) {
    %c0_i32 = arith.constant 0 : i32
    return %arg0, %arg2 : i32, i32
  }
  func.func @transform_1(%arg0: i32, %arg1: i32, %arg2: i32) -> (i32, i32) {
    %c0_i32 = arith.constant 0 : i32
    return %arg2, %arg1 : i32, i32
  }
  func.func @transform_2(%arg0: i32, %arg1: i32, %arg2: i32) -> (i32, i32) {
    %c0_i32 = arith.constant 0 : i32
    %c0_i32_0 = arith.constant 0 : i32
    return %c0_i32, %arg1 : i32, i32
  }
  func.func @transform_3(%arg0: i32, %arg1: i32, %arg2: i32) -> (i32, i32) {
    %c0_i32 = arith.constant 0 : i32
    return %arg0, %arg1 : i32, i32
  }
}

module attributes {stable_mosaic.version = 11 : i64} {
  func.func @_layernorm_kernel(%arg0: i32, %arg1: memref<32x32xbf16, #tpu.memory_space<vmem>>, %arg2: memref<1x32xf32, #tpu.memory_space<vmem>>, %arg3: memref<1x32xf32, #tpu.memory_space<vmem>>, %arg4: memref<32x32xbf16, #tpu.memory_space<vmem>>) attributes {dimension_semantics = [#tpu.dimension_semantics<parallel>], iteration_bounds = array<i64: 1>, scalar_prefetch = 0 : i64, scratch_operands = 0 : i64, tpu.core_type = #tpu.core_type<tc>, window_params = [{transform_indices = @transform_0, window_bounds = array<i64: 32, 32>}, {pipeline_mode = #tpu.pipeline_mode<synchronous>, transform_indices = @transform_1, window_bounds = array<i64: 1, 32>}, {pipeline_mode = #tpu.pipeline_mode<synchronous>, transform_indices = @transform_2, window_bounds = array<i64: 1, 32>}, {transform_indices = @transform_3, window_bounds = array<i64: 32, 32>}]} {
    %c0 = arith.constant 0 : index
    %c0_0 = arith.constant 0 : index
    %0 = vector.load %arg1[%c0, %c0_0] : memref<32x32xbf16, #tpu.memory_space<vmem>>, vector<32x32xbf16>
    %1 = arith.extf %0 : vector<32x32xbf16> to vector<32x32xf32>
    %cst = arith.constant dense<0.000000e+00> : vector<32xf32>
    %2 = vector.multi_reduction <add>, %1, %cst [1] : vector<32x32xf32> to vector<32xf32>
    %3 = vector.shape_cast %2 : vector<32xf32> to vector<32x1xf32>
    %cst_1 = arith.constant 3.200000e+01 : f32
    %4 = vector.broadcast %cst_1 : f32 to vector<32x1xf32>
    %5 = arith.divf %3, %4 : vector<32x1xf32>
    %6 = vector.broadcast %5 : vector<32x1xf32> to vector<32x32xf32>
    %7 = arith.subf %1, %6 : vector<32x32xf32>
    %8 = arith.mulf %7, %7 : vector<32x32xf32>
    %cst_2 = arith.constant dense<0.000000e+00> : vector<32xf32>
    %9 = vector.multi_reduction <add>, %8, %cst_2 [1] : vector<32x32xf32> to vector<32xf32>
    %10 = vector.shape_cast %9 : vector<32xf32> to vector<32x1xf32>
    %cst_3 = arith.constant 3.200000e+01 : f32
    %11 = vector.broadcast %cst_3 : f32 to vector<32x1xf32>
    %12 = arith.divf %10, %11 : vector<32x1xf32>
    %13 = vector.broadcast %5 : vector<32x1xf32> to vector<32x32xf32>
    %14 = arith.subf %1, %13 : vector<32x32xf32>
    %cst_4 = arith.constant 9.99999974E-6 : f32
    %15 = vector.broadcast %cst_4 : f32 to vector<32x1xf32>
    %16 = arith.addf %12, %15 : vector<32x1xf32>
    %17 = math.rsqrt %16 : vector<32x1xf32>
    %18 = vector.broadcast %17 : vector<32x1xf32> to vector<32x32xf32>
    %19 = arith.mulf %14, %18 : vector<32x32xf32>
    %c0_5 = arith.constant 0 : index
    %c0_6 = arith.constant 0 : index
    %20 = vector.load %arg2[%c0_5, %c0_6] : memref<1x32xf32, #tpu.memory_space<vmem>>, vector<1x32xf32>
    %21 = vector.broadcast %20 : vector<1x32xf32> to vector<32x32xf32>
    %22 = arith.mulf %19, %21 : vector<32x32xf32>
    %c0_7 = arith.constant 0 : index
    %c0_8 = arith.constant 0 : index
    %23 = vector.load %arg3[%c0_7, %c0_8] : memref<1x32xf32, #tpu.memory_space<vmem>>, vector<1x32xf32>
    %24 = vector.broadcast %23 : vector<1x32xf32> to vector<32x32xf32>
    %25 = arith.addf %22, %24 : vector<32x32xf32>
    %26 = arith.truncf %25 : vector<32x32xf32> to vector<32x32xbf16>
    %c0_9 = arith.constant 0 : index
    %c0_10 = arith.constant 0 : index
    %27 = vector.load %arg4[%c0_9, %c0_10] : memref<32x32xbf16, #tpu.memory_space<vmem>>, vector<32x32xbf16>
    tpu.vector_store %arg4[%c0_9, %c0_10], %26 {strides = array<i32>} : memref<32x32xbf16, #tpu.memory_space<vmem>>, vector<32x32xbf16>,
    return
  }
  func.func @transform_0(%arg0: i32) -> (i32, i32) {
    %c0_i32 = arith.constant 0 : i32
    %c0_i32_0 = arith.constant 0 : i32
    return %arg0, %c0_i32 : i32, i32
  }
  func.func @transform_1(%arg0: i32) -> (i32, i32) {
    %c0_i32 = arith.constant 0 : i32
    %c0_i32_0 = arith.constant 0 : i32
    %c0_i32_1 = arith.constant 0 : i32
    return %c0_i32, %c0_i32_0 : i32, i32
  }
  func.func @transform_2(%arg0: i32) -> (i32, i32) {
    %c0_i32 = arith.constant 0 : i32
    %c0_i32_0 = arith.constant 0 : i32
    %c0_i32_1 = arith.constant 0 : i32
    return %c0_i32, %c0_i32_0 : i32, i32
  }
  func.func @transform_3(%arg0: i32) -> (i32, i32) {
    %c0_i32 = arith.constant 0 : i32
    %c0_i32_0 = arith.constant 0 : i32
    return %arg0, %c0_i32 : i32, i32
  }
}

module attributes {stable_mosaic.version = 11 : i64} {
  func.func @_flash_attention_kernel(%arg0: i32, %arg1: i32, %arg2: i32, %arg3: memref<1x4x16x8xbf16, #tpu.memory_space<vmem>>, %arg4: memref<1x4x16x8xbf16, #tpu.memory_space<vmem>>, %arg5: memref<1x4x16x8xbf16, #tpu.memory_space<vmem>>, %arg6: memref<1x1x16xf32, #tpu.memory_space<vmem>>, %arg7: memref<1x4x16x8xbf16, #tpu.memory_space<vmem>>, %arg8: memref<4x16x1xf32, #tpu.memory_space<vmem>>, %arg9: memref<4x16x1xf32, #tpu.memory_space<vmem>>, %arg10: memref<4x16x8xf32, #tpu.memory_space<vmem>>) attributes {dimension_semantics = [#tpu.dimension_semantics<parallel>, #tpu.dimension_semantics<parallel>, #tpu.dimension_semantics<arbitrary>], iteration_bounds = array<i64: 2, 1, 1>, scalar_prefetch = 0 : i64, scratch_operands = 3 : i64, tpu.core_type = #tpu.core_type<tc>, window_params = [{transform_indices = @transform_0, window_bounds = array<i64: 1, 4, 16, 8>}, {transform_indices = @transform_1, window_bounds = array<i64: 1, 4, 16, 8>}, {transform_indices = @transform_2, window_bounds = array<i64: 1, 4, 16, 8>}, {transform_indices = @transform_3, window_bounds = array<i64: 1, 1, 16>}, {transform_indices = @transform_4, window_bounds = array<i64: 1, 4, 16, 8>}]} {
    %c0_i32 = arith.constant 0 : i32
    %0 = arith.cmpi eq, %arg2, %c0_i32 : i32
    %1 = arith.extui %0 : i1 to i32
    %c0_i32_0 = arith.constant 0 : i32
    %2 = arith.cmpi ne, %1, %c0_i32_0 : i32
    scf.if %2 {
      %cst_40 = arith.constant -1.000000e+09 : f32
      %47 = vector.broadcast %cst_40 : f32 to vector<4x16x1xf32>
      %c0_41 = arith.constant 0 : index
      %c0_42 = arith.constant 0 : index
      %c0_43 = arith.constant 0 : index
      %48 = vector.load %arg8[%c0_41, %c0_42, %c0_43] : memref<4x16x1xf32, #tpu.memory_space<vmem>>, vector<4x16x1xf32>
      tpu.vector_store %arg8[%c0_41, %c0_42, %c0_43], %47 {strides = array<i32>} : memref<4x16x1xf32, #tpu.memory_space<vmem>>, vector<4x16x1xf32>,
      %cst_44 = arith.constant 0.000000e+00 : f32
      %49 = vector.broadcast %cst_44 : f32 to vector<4x16x1xf32>
      %c0_45 = arith.constant 0 : index
      %c0_46 = arith.constant 0 : index
      %c0_47 = arith.constant 0 : index
      %50 = vector.load %arg9[%c0_45, %c0_46, %c0_47] : memref<4x16x1xf32, #tpu.memory_space<vmem>>, vector<4x16x1xf32>
      tpu.vector_store %arg9[%c0_45, %c0_46, %c0_47], %49 {strides = array<i32>} : memref<4x16x1xf32, #tpu.memory_space<vmem>>, vector<4x16x1xf32>,
      %cst_48 = arith.constant 0.000000e+00 : f32
      %51 = vector.broadcast %cst_48 : f32 to vector<4x16x8xf32>
      %c0_49 = arith.constant 0 : index
      %c0_50 = arith.constant 0 : index
      %c0_51 = arith.constant 0 : index
      %52 = vector.load %arg10[%c0_49, %c0_50, %c0_51] : memref<4x16x8xf32, #tpu.memory_space<vmem>>, vector<4x16x8xf32>
      tpu.vector_store %arg10[%c0_49, %c0_50, %c0_51], %51 {strides = array<i32>} : memref<4x16x8xf32, #tpu.memory_space<vmem>>, vector<4x16x8xf32>,
    } else {
    }
    %c0 = arith.constant 0 : index
    %c0_1 = arith.constant 0 : index
    %c0_2 = arith.constant 0 : index
    %c0_3 = arith.constant 0 : index
    %3 = vector.load %arg3[%c0, %c0_1, %c0_2, %c0_3] : memref<1x4x16x8xbf16, #tpu.memory_space<vmem>>, vector<1x4x16x8xbf16>
    %4 = vector.shape_cast %3 : vector<1x4x16x8xbf16> to vector<4x16x8xbf16>
    %c0_4 = arith.constant 0 : index
    %c0_5 = arith.constant 0 : index
    %c0_6 = arith.constant 0 : index
    %c0_7 = arith.constant 0 : index
    %5 = vector.load %arg4[%c0_4, %c0_5, %c0_6, %c0_7] : memref<1x4x16x8xbf16, #tpu.memory_space<vmem>>, vector<1x4x16x8xbf16>
    %6 = vector.shape_cast %5 : vector<1x4x16x8xbf16> to vector<4x16x8xbf16>
    "tpu.trace_start"() <{level = 10 : i32, message = "hqd,hkd->hqk"}> : () -> ()
    %cst = arith.constant dense<0.000000e+00> : vector<4x16x16xf32>
    %7 = tpu.matmul %4, %6, %cst {dimension_numbers = #tpu.dot_dimension_numbers<[2], [2], [1], [1], [0, 0, 0, 1, 1, 1], [0], [0]>} : vector<4x16x8xbf16>, vector<4x16x8xbf16>, vector<4x16x16xf32> -> vector<4x16x16xf32>
    "tpu.trace_stop"() : () -> ()
    %c0_8 = arith.constant 0 : index
    %c0_9 = arith.constant 0 : index
    %c0_10 = arith.constant 0 : index
    %8 = vector.load %arg6[%c0_8, %c0_9, %c0_10] : memref<1x1x16xf32, #tpu.memory_space<vmem>>, vector<1x1x16xf32>
    %9 = vector.shape_cast %8 : vector<1x1x16xf32> to vector<1x16xf32>
    %cst_11 = arith.constant 5.000000e-01 : f32
    %10 = vector.broadcast %cst_11 : f32 to vector<1x16xf32>
    %11 = arith.cmpf ogt, %9, %10 : vector<1x16xf32>
    %12 = vector.shape_cast %11 : vector<1x16xi1> to vector<1x16xi1>
    %13 = vector.broadcast %12 : vector<1x16xi1> to vector<16x16xi1>
    %14 = vector.shape_cast %13 : vector<16x16xi1> to vector<1x16x16xi1>
    %cst_12 = arith.constant -1.000000e+09 : f32
    %15 = vector.shape_cast %14 : vector<1x16x16xi1> to vector<1x16x16xi1>
    %16 = vector.broadcast %15 : vector<1x16x16xi1> to vector<4x16x16xi1>
    %17 = vector.broadcast %cst_12 : f32 to vector<4x16x16xf32>
    %18 = arith.select %16, %7, %17 : vector<4x16x16xi1>, vector<4x16x16xf32>
    %c0_13 = arith.constant 0 : index
    %c0_14 = arith.constant 0 : index
    %c0_15 = arith.constant 0 : index
    %19 = vector.load %arg8[%c0_13, %c0_14, %c0_15] : memref<4x16x1xf32, #tpu.memory_space<vmem>>, vector<4x16x1xf32>
    %cst_16 = arith.constant dense<0xFF800000> : vector<4x16xf32>
    %20 = vector.multi_reduction <maximumf>, %18, %cst_16 [2] : vector<4x16x16xf32> to vector<4x16xf32>
    %21 = vector.shape_cast %20 : vector<4x16xf32> to vector<4x16x1xf32>
    %22 = arith.maximumf %19, %21 : vector<4x16x1xf32>
    %23 = arith.subf %19, %22 : vector<4x16x1xf32>
    %24 = math.exp %23 : vector<4x16x1xf32>
    %25 = vector.broadcast %22 : vector<4x16x1xf32> to vector<4x16x16xf32>
    %26 = arith.subf %18, %25 : vector<4x16x16xf32>
    %27 = math.exp %26 : vector<4x16x16xf32>
    %c0_17 = arith.constant 0 : index
    %c0_18 = arith.constant 0 : index
    %c0_19 = arith.constant 0 : index
    %28 = vector.load %arg9[%c0_17, %c0_18, %c0_19] : memref<4x16x1xf32, #tpu.memory_space<vmem>>, vector<4x16x1xf32>
    %29 = arith.mulf %24, %28 : vector<4x16x1xf32>
    %cst_20 = arith.constant dense<0.000000e+00> : vector<4x16xf32>
    %30 = vector.multi_reduction <add>, %27, %cst_20 [2] : vector<4x16x16xf32> to vector<4x16xf32>
    %31 = vector.shape_cast %30 : vector<4x16xf32> to vector<4x16x1xf32>
    %32 = arith.addf %29, %31 : vector<4x16x1xf32>
    %c0_21 = arith.constant 0 : index
    %c0_22 = arith.constant 0 : index
    %c0_23 = arith.constant 0 : index
    %33 = vector.load %arg9[%c0_21, %c0_22, %c0_23] : memref<4x16x1xf32, #tpu.memory_space<vmem>>, vector<4x16x1xf32>
    tpu.vector_store %arg9[%c0_21, %c0_22, %c0_23], %32 {strides = array<i32>} : memref<4x16x1xf32, #tpu.memory_space<vmem>>, vector<4x16x1xf32>,
    %c0_24 = arith.constant 0 : index
    %c0_25 = arith.constant 0 : index
    %c0_26 = arith.constant 0 : index
    %34 = vector.load %arg10[%c0_24, %c0_25, %c0_26] : memref<4x16x8xf32, #tpu.memory_space<vmem>>, vector<4x16x8xf32>
    %35 = vector.broadcast %24 : vector<4x16x1xf32> to vector<4x16x8xf32>
    %36 = arith.mulf %35, %34 : vector<4x16x8xf32>
    %37 = arith.truncf %27 : vector<4x16x16xf32> to vector<4x16x16xbf16>
    %c0_27 = arith.constant 0 : index
    %c0_28 = arith.constant 0 : index
    %c0_29 = arith.constant 0 : index
    %c0_30 = arith.constant 0 : index
    %38 = vector.load %arg5[%c0_27, %c0_28, %c0_29, %c0_30] : memref<1x4x16x8xbf16, #tpu.memory_space<vmem>>, vector<1x4x16x8xbf16>
    %39 = vector.shape_cast %38 : vector<1x4x16x8xbf16> to vector<4x16x8xbf16>
    "tpu.trace_start"() <{level = 10 : i32, message = "hqk,hkd->hqd"}> : () -> ()
    %cst_31 = arith.constant dense<0.000000e+00> : vector<4x16x8xf32>
    %40 = tpu.matmul %37, %39, %cst_31 {dimension_numbers = #tpu.dot_dimension_numbers<[2], [1], [1], [2], [0, 0, 0, 1, 1, 2], [0], [0]>} : vector<4x16x16xbf16>, vector<4x16x8xbf16>, vector<4x16x8xf32> -> vector<4x16x8xf32>
    "tpu.trace_stop"() : () -> ()
    %41 = arith.addf %36, %40 : vector<4x16x8xf32>
    %c0_32 = arith.constant 0 : index
    %c0_33 = arith.constant 0 : index
    %c0_34 = arith.constant 0 : index
    %42 = vector.load %arg10[%c0_32, %c0_33, %c0_34] : memref<4x16x8xf32, #tpu.memory_space<vmem>>, vector<4x16x8xf32>
    tpu.vector_store %arg10[%c0_32, %c0_33, %c0_34], %41 {strides = array<i32>} : memref<4x16x8xf32, #tpu.memory_space<vmem>>, vector<4x16x8xf32>,
    %c0_35 = arith.constant 0 : index
    %c0_36 = arith.constant 0 : index
    %c0_37 = arith.constant 0 : index
    %43 = vector.load %arg8[%c0_35, %c0_36, %c0_37] : memref<4x16x1xf32, #tpu.memory_space<vmem>>, vector<4x16x1xf32>
    tpu.vector_store %arg8[%c0_35, %c0_36, %c0_37], %22 {strides = array<i32>} : memref<4x16x1xf32, #tpu.memory_space<vmem>>, vector<4x16x1xf32>,
    %c0_i32_38 = arith.constant 0 : i32
    %44 = arith.cmpi eq, %arg2, %c0_i32_38 : i32
    %45 = arith.extui %44 : i1 to i32
    %c0_i32_39 = arith.constant 0 : i32
    %46 = arith.cmpi ne, %45, %c0_i32_39 : i32
    scf.if %46 {
      %c0_40 = arith.constant 0 : index
      %c0_41 = arith.constant 0 : index
      %c0_42 = arith.constant 0 : index
      %47 = vector.load %arg10[%c0_40, %c0_41, %c0_42] : memref<4x16x8xf32, #tpu.memory_space<vmem>>, vector<4x16x8xf32>
      %c0_43 = arith.constant 0 : index
      %c0_44 = arith.constant 0 : index
      %c0_45 = arith.constant 0 : index
      %48 = vector.load %arg9[%c0_43, %c0_44, %c0_45] : memref<4x16x1xf32, #tpu.memory_space<vmem>>, vector<4x16x1xf32>
      %49 = tpu.reciprocal %48 : vector<4x16x1xf32> -> vector<4x16x1xf32>
      %50 = vector.broadcast %49 : vector<4x16x1xf32> to vector<4x16x8xf32>
      %51 = arith.mulf %47, %50 : vector<4x16x8xf32>
      %52 = arith.truncf %51 : vector<4x16x8xf32> to vector<4x16x8xbf16>
      %c0_46 = arith.constant 0 : index
      %c0_47 = arith.constant 0 : index
      %c0_48 = arith.constant 0 : index
      %c0_49 = arith.constant 0 : index
      %53 = vector.load %arg7[%c0_46, %c0_47, %c0_48, %c0_49] : memref<1x4x16x8xbf16, #tpu.memory_space<vmem>>, vector<1x4x16x8xbf16>
      %54 = vector.shape_cast %53 : vector<1x4x16x8xbf16> to vector<4x16x8xbf16>
      %55 = vector.shape_cast %52 : vector<4x16x8xbf16> to vector<1x4x16x8xbf16>
      tpu.vector_store %arg7[%c0_46, %c0_47, %c0_48, %c0_49], %55 {strides = array<i32>} : memref<1x4x16x8xbf16, #tpu.memory_space<vmem>>, vector<1x4x16x8xbf16>,
    } else {
    }
    return
  }
  func.func @transform_0(%arg0: i32, %arg1: i32, %arg2: i32) -> (i32, i32, i32, i32) {
    %c0_i32 = arith.constant 0 : i32
    %c0_i32_0 = arith.constant 0 : i32
    %c0_i32_1 = arith.constant 0 : i32
    return %arg0, %c0_i32, %arg1, %c0_i32_0 : i32, i32, i32, i32
  }
  func.func @transform_1(%arg0: i32, %arg1: i32, %arg2: i32) -> (i32, i32, i32, i32) {
    %c0_i32 = arith.constant 0 : i32
    %c0_i32_0 = arith.constant 0 : i32
    %c0_i32_1 = arith.constant 0 : i32
    return %arg0, %c0_i32, %arg2, %c0_i32_0 : i32, i32, i32, i32
  }
  func.func @transform_2(%arg0: i32, %arg1: i32, %arg2: i32) -> (i32, i32, i32, i32) {
    %c0_i32 = arith.constant 0 : i32
    %c0_i32_0 = arith.constant 0 : i32
    %c0_i32_1 = arith.constant 0 : i32
    return %arg0, %c0_i32, %arg2, %c0_i32_0 : i32, i32, i32, i32
  }
  func.func @transform_3(%arg0: i32, %arg1: i32, %arg2: i32) -> (i32, i32, i32) {
    %c0_i32 = arith.constant 0 : i32
    %c0_i32_0 = arith.constant 0 : i32
    return %arg0, %c0_i32, %arg2 : i32, i32, i32
  }
  func.func @transform_4(%arg0: i32, %arg1: i32, %arg2: i32) -> (i32, i32, i32, i32) {
    %c0_i32 = arith.constant 0 : i32
    %c0_i32_0 = arith.constant 0 : i32
    %c0_i32_1 = arith.constant 0 : i32
    return %arg0, %c0_i32, %arg1, %c0_i32_0 : i32, i32, i32, i32
  }
}

module attributes {stable_mosaic.version = 11 : i64} {
  func.func @_layernorm_kernel(%arg0: i32, %arg1: memref<32x32xbf16, #tpu.memory_space<vmem>>, %arg2: memref<32x32xf32, #tpu.memory_space<vmem>>, %arg3: memref<32x1xf32, #tpu.memory_space<vmem>>, %arg4: memref<1x32xf32, #tpu.memory_space<vmem>>, %arg5: memref<1x32xf32, #tpu.memory_space<vmem>>, %arg6: memref<32x32xbf16, #tpu.memory_space<vmem>>) attributes {dimension_semantics = [#tpu.dimension_semantics<parallel>], iteration_bounds = array<i64: 1>, scalar_prefetch = 0 : i64, scratch_operands = 0 : i64, tpu.core_type = #tpu.core_type<tc>, window_params = [{transform_indices = @transform_0, window_bounds = array<i64: 32, 32>}, {transform_indices = @transform_1, window_bounds = array<i64: 32, 32>}, {transform_indices = @transform_2, window_bounds = array<i64: 32, 1>}, {pipeline_mode = #tpu.pipeline_mode<synchronous>, transform_indices = @transform_3, window_bounds = array<i64: 1, 32>}, {pipeline_mode = #tpu.pipeline_mode<synchronous>, transform_indices = @transform_4, window_bounds = array<i64: 1, 32>}, {transform_indices = @transform_5, window_bounds = array<i64: 32, 32>}]} {
    %c0 = arith.constant 0 : index
    %c0_0 = arith.constant 0 : index
    %0 = vector.load %arg1[%c0, %c0_0] : memref<32x32xbf16, #tpu.memory_space<vmem>>, vector<32x32xbf16>
    %1 = arith.extf %0 : vector<32x32xbf16> to vector<32x32xf32>
    %c0_1 = arith.constant 0 : index
    %c0_2 = arith.constant 0 : index
    %2 = vector.load %arg2[%c0_1, %c0_2] : memref<32x32xf32, #tpu.memory_space<vmem>>, vector<32x32xf32>
    %3 = arith.addf %1, %2 : vector<32x32xf32>
    %c0_3 = arith.constant 0 : index
    %c0_4 = arith.constant 0 : index
    %4 = vector.load %arg3[%c0_3, %c0_4] : memref<32x1xf32, #tpu.memory_space<vmem>>, vector<32x1xf32>
    %cst = arith.constant dense<0.000000e+00> : vector<32xf32>
    %5 = vector.multi_reduction <add>, %3, %cst [1] : vector<32x32xf32> to vector<32xf32>
    %6 = vector.shape_cast %5 : vector<32xf32> to vector<32x1xf32>
    %cst_5 = arith.constant 3.200000e+01 : f32
    %7 = vector.broadcast %cst_5 : f32 to vector<32x1xf32>
    %8 = arith.divf %6, %7 : vector<32x1xf32>
    %9 = vector.broadcast %8 : vector<32x1xf32> to vector<32x32xf32>
    %10 = arith.subf %3, %9 : vector<32x32xf32>
    %11 = arith.mulf %10, %10 : vector<32x32xf32>
    %cst_6 = arith.constant dense<0.000000e+00> : vector<32xf32>
    %12 = vector.multi_reduction <add>, %11, %cst_6 [1] : vector<32x32xf32> to vector<32xf32>
    %13 = vector.shape_cast %12 : vector<32xf32> to vector<32x1xf32>
    %cst_7 = arith.constant 3.200000e+01 : f32
    %14 = vector.broadcast %cst_7 : f32 to vector<32x1xf32>
    %15 = arith.divf %13, %14 : vector<32x1xf32>
    %16 = vector.broadcast %8 : vector<32x1xf32> to vector<32x32xf32>
    %17 = arith.subf %3, %16 : vector<32x32xf32>
    %cst_8 = arith.constant 9.99999974E-6 : f32
    %18 = vector.broadcast %cst_8 : f32 to vector<32x1xf32>
    %19 = arith.addf %15, %18 : vector<32x1xf32>
    %20 = math.rsqrt %19 : vector<32x1xf32>
    %21 = vector.broadcast %20 : vector<32x1xf32> to vector<32x32xf32>
    %22 = arith.mulf %17, %21 : vector<32x32xf32>
    %c0_9 = arith.constant 0 : index
    %c0_10 = arith.constant 0 : index
    %23 = vector.load %arg4[%c0_9, %c0_10] : memref<1x32xf32, #tpu.memory_space<vmem>>, vector<1x32xf32>
    %24 = vector.broadcast %23 : vector<1x32xf32> to vector<32x32xf32>
    %25 = arith.mulf %22, %24 : vector<32x32xf32>
    %c0_11 = arith.constant 0 : index
    %c0_12 = arith.constant 0 : index
    %26 = vector.load %arg5[%c0_11, %c0_12] : memref<1x32xf32, #tpu.memory_space<vmem>>, vector<1x32xf32>
    %27 = vector.broadcast %26 : vector<1x32xf32> to vector<32x32xf32>
    %28 = arith.addf %25, %27 : vector<32x32xf32>
    %29 = vector.broadcast %4 : vector<32x1xf32> to vector<32x32xf32>
    %30 = arith.mulf %28, %29 : vector<32x32xf32>
    %31 = arith.truncf %30 : vector<32x32xf32> to vector<32x32xbf16>
    %c0_13 = arith.constant 0 : index
    %c0_14 = arith.constant 0 : index
    %32 = vector.load %arg6[%c0_13, %c0_14] : memref<32x32xbf16, #tpu.memory_space<vmem>>, vector<32x32xbf16>
    tpu.vector_store %arg6[%c0_13, %c0_14], %31 {strides = array<i32>} : memref<32x32xbf16, #tpu.memory_space<vmem>>, vector<32x32xbf16>,
    return
  }
  func.func @transform_0(%arg0: i32) -> (i32, i32) {
    %c0_i32 = arith.constant 0 : i32
    %c0_i32_0 = arith.constant 0 : i32
    return %arg0, %c0_i32 : i32, i32
  }
  func.func @transform_1(%arg0: i32) -> (i32, i32) {
    %c0_i32 = arith.constant 0 : i32
    %c0_i32_0 = arith.constant 0 : i32
    return %arg0, %c0_i32 : i32, i32
  }
  func.func @transform_2(%arg0: i32) -> (i32, i32) {
    %c0_i32 = arith.constant 0 : i32
    %c0_i32_0 = arith.constant 0 : i32
    return %arg0, %c0_i32 : i32, i32
  }
  func.func @transform_3(%arg0: i32) -> (i32, i32) {
    %c0_i32 = arith.constant 0 : i32
    %c0_i32_0 = arith.constant 0 : i32
    %c0_i32_1 = arith.constant 0 : i32
    return %c0_i32, %c0_i32_0 : i32, i32
  }
  func.func @transform_4(%arg0: i32) -> (i32, i32) {
    %c0_i32 = arith.constant 0 : i32
    %c0_i32_0 = arith.constant 0 : i32
    %c0_i32_1 = arith.constant 0 : i32
    return %c0_i32, %c0_i32_0 : i32, i32
  }
  func.func @transform_5(%arg0: i32) -> (i32, i32) {
    %c0_i32 = arith.constant 0 : i32
    %c0_i32_0 = arith.constant 0 : i32
    return %arg0, %c0_i32 : i32, i32
  }
}

module attributes {stable_mosaic.version = 11 : i64} {
  func.func @_matmul_kernel(%arg0: i32, %arg1: i32, %arg2: i32, %arg3: memref<32x128xbf16, #tpu.memory_space<vmem>>, %arg4: memref<128x128xbf16, #tpu.memory_space<vmem>>, %arg5: memref<1x128xf32, #tpu.memory_space<vmem>>, %arg6: memref<32x128xbf16, #tpu.memory_space<vmem>>, %arg7: memref<32x128xf32, #tpu.memory_space<vmem>>) attributes {dimension_semantics = [#tpu.dimension_semantics<parallel>, #tpu.dimension_semantics<parallel>, #tpu.dimension_semantics<arbitrary>], iteration_bounds = array<i64: 1, 1, 1>, scalar_prefetch = 0 : i64, scratch_operands = 1 : i64, tpu.core_type = #tpu.core_type<tc>, window_params = [{transform_indices = @transform_0, window_bounds = array<i64: 32, 128>}, {transform_indices = @transform_1, window_bounds = array<i64: 128, 128>}, {transform_indices = @transform_2, window_bounds = array<i64: 1, 128>}, {transform_indices = @transform_3, window_bounds = array<i64: 32, 128>}]} {
    %c0_i32 = arith.constant 0 : i32
    %0 = arith.cmpi eq, %arg2, %c0_i32 : i32
    %1 = arith.extui %0 : i1 to i32
    %c0_i32_0 = arith.constant 0 : i32
    %2 = arith.cmpi ne, %1, %c0_i32_0 : i32
    scf.if %2 {
      %cst_10 = arith.constant 0.000000e+00 : f32
      %12 = vector.broadcast %cst_10 : f32 to vector<32x128xf32>
      %c0_11 = arith.constant 0 : index
      %c0_12 = arith.constant 0 : index
      %13 = vector.load %arg7[%c0_11, %c0_12] : memref<32x128xf32, #tpu.memory_space<vmem>>, vector<32x128xf32>
      tpu.vector_store %arg7[%c0_11, %c0_12], %12 {strides = array<i32>} : memref<32x128xf32, #tpu.memory_space<vmem>>, vector<32x128xf32>,
    } else {
    }
    %c0 = arith.constant 0 : index
    %c0_1 = arith.constant 0 : index
    %3 = vector.load %arg7[%c0, %c0_1] : memref<32x128xf32, #tpu.memory_space<vmem>>, vector<32x128xf32>
    %c0_2 = arith.constant 0 : index
    %c0_3 = arith.constant 0 : index
    %4 = vector.load %arg3[%c0_2, %c0_3] : memref<32x128xbf16, #tpu.memory_space<vmem>>, vector<32x128xbf16>
    %c0_4 = arith.constant 0 : index
    %c0_5 = arith.constant 0 : index
    %5 = vector.load %arg4[%c0_4, %c0_5] : memref<128x128xbf16, #tpu.memory_space<vmem>>, vector<128x128xbf16>
    %cst = arith.constant dense<0.000000e+00> : vector<32x128xf32>
    %6 = tpu.matmul %4, %5, %cst {dimension_numbers = #tpu.dot_dimension_numbers<[1], [0], [0], [1], [0, 0, 1, 1], [], []>} : vector<32x128xbf16>, vector<128x128xbf16>, vector<32x128xf32> -> vector<32x128xf32>
    %7 = arith.addf %3, %6 : vector<32x128xf32>
    %c0_6 = arith.constant 0 : index
    %c0_7 = arith.constant 0 : index
    %8 = vector.load %arg7[%c0_6, %c0_7] : memref<32x128xf32, #tpu.memory_space<vmem>>, vector<32x128xf32>
    tpu.vector_store %arg7[%c0_6, %c0_7], %7 {strides = array<i32>} : memref<32x128xf32, #tpu.memory_space<vmem>>, vector<32x128xf32>,
    %c0_i32_8 = arith.constant 0 : i32
    %9 = arith.cmpi eq, %arg2, %c0_i32_8 : i32
    %10 = arith.extui %9 : i1 to i32
    %c0_i32_9 = arith.constant 0 : i32
    %11 = arith.cmpi ne, %10, %c0_i32_9 : i32
    scf.if %11 {
      %c0_10 = arith.constant 0 : index
      %c0_11 = arith.constant 0 : index
      %12 = vector.load %arg7[%c0_10, %c0_11] : memref<32x128xf32, #tpu.memory_space<vmem>>, vector<32x128xf32>
      %c0_12 = arith.constant 0 : index
      %c0_13 = arith.constant 0 : index
      %13 = vector.load %arg5[%c0_12, %c0_13] : memref<1x128xf32, #tpu.memory_space<vmem>>, vector<1x128xf32>
      %14 = vector.broadcast %13 : vector<1x128xf32> to vector<32x128xf32>
      %15 = arith.addf %12, %14 : vector<32x128xf32>
      %cst_14 = arith.constant 0.000000e+00 : f32
      %16 = vector.broadcast %cst_14 : f32 to vector<32x128xf32>
      %17 = arith.maximumf %15, %16 : vector<32x128xf32>
      %18 = arith.truncf %17 : vector<32x128xf32> to vector<32x128xbf16>
      %c0_15 = arith.constant 0 : index
      %c0_16 = arith.constant 0 : index
      %19 = vector.load %arg6[%c0_15, %c0_16] : memref<32x128xbf16, #tpu.memory_space<vmem>>, vector<32x128xbf16>
      tpu.vector_store %arg6[%c0_15, %c0_16], %18 {strides = array<i32>} : memref<32x128xbf16, #tpu.memory_space<vmem>>, vector<32x128xbf16>,
    } else {
    }
    return
  }
  func.func @transform_0(%arg0: i32, %arg1: i32, %arg2: i32) -> (i32, i32) {
    %c0_i32 = arith.constant 0 : i32
    return %arg0, %arg2 : i32, i32
  }
  func.func @transform_1(%arg0: i32, %arg1: i32, %arg2: i32) -> (i32, i32) {
    %c0_i32 = arith.constant 0 : i32
    return %arg2, %arg1 : i32, i32
  }
  func.func @transform_2(%arg0: i32, %arg1: i32, %arg2: i32) -> (i32, i32) {
    %c0_i32 = arith.constant 0 : i32
    %c0_i32_0 = arith.constant 0 : i32
    return %c0_i32, %arg1 : i32, i32
  }
  func.func @transform_3(%arg0: i32, %arg1: i32, %arg2: i32) -> (i32, i32) {
    %c0_i32 = arith.constant 0 : i32
    return %arg0, %arg1 : i32, i32
  }
}

module attributes {stable_mosaic.version = 11 : i64} {
  func.func @_layernorm_kernel(%arg0: i32, %arg1: memref<32x32xbf16, #tpu.memory_space<vmem>>, %arg2: memref<32x32xbf16, #tpu.memory_space<vmem>>, %arg3: memref<32x1xf32, #tpu.memory_space<vmem>>, %arg4: memref<1x32xf32, #tpu.memory_space<vmem>>, %arg5: memref<1x32xf32, #tpu.memory_space<vmem>>, %arg6: memref<32x32xbf16, #tpu.memory_space<vmem>>) attributes {dimension_semantics = [#tpu.dimension_semantics<parallel>], iteration_bounds = array<i64: 1>, scalar_prefetch = 0 : i64, scratch_operands = 0 : i64, tpu.core_type = #tpu.core_type<tc>, window_params = [{transform_indices = @transform_0, window_bounds = array<i64: 32, 32>}, {transform_indices = @transform_1, window_bounds = array<i64: 32, 32>}, {transform_indices = @transform_2, window_bounds = array<i64: 32, 1>}, {pipeline_mode = #tpu.pipeline_mode<synchronous>, transform_indices = @transform_3, window_bounds = array<i64: 1, 32>}, {pipeline_mode = #tpu.pipeline_mode<synchronous>, transform_indices = @transform_4, window_bounds = array<i64: 1, 32>}, {transform_indices = @transform_5, window_bounds = array<i64: 32, 32>}]} {
    %c0 = arith.constant 0 : index
    %c0_0 = arith.constant 0 : index
    %0 = vector.load %arg1[%c0, %c0_0] : memref<32x32xbf16, #tpu.memory_space<vmem>>, vector<32x32xbf16>
    %1 = arith.extf %0 : vector<32x32xbf16> to vector<32x32xf32>
    %c0_1 = arith.constant 0 : index
    %c0_2 = arith.constant 0 : index
    %2 = vector.load %arg2[%c0_1, %c0_2] : memref<32x32xbf16, #tpu.memory_space<vmem>>, vector<32x32xbf16>
    %3 = arith.extf %2 : vector<32x32xbf16> to vector<32x32xf32>
    %4 = arith.addf %1, %3 : vector<32x32xf32>
    %c0_3 = arith.constant 0 : index
    %c0_4 = arith.constant 0 : index
    %5 = vector.load %arg3[%c0_3, %c0_4] : memref<32x1xf32, #tpu.memory_space<vmem>>, vector<32x1xf32>
    %cst = arith.constant dense<0.000000e+00> : vector<32xf32>
    %6 = vector.multi_reduction <add>, %4, %cst [1] : vector<32x32xf32> to vector<32xf32>
    %7 = vector.shape_cast %6 : vector<32xf32> to vector<32x1xf32>
    %cst_5 = arith.constant 3.200000e+01 : f32
    %8 = vector.broadcast %cst_5 : f32 to vector<32x1xf32>
    %9 = arith.divf %7, %8 : vector<32x1xf32>
    %10 = vector.broadcast %9 : vector<32x1xf32> to vector<32x32xf32>
    %11 = arith.subf %4, %10 : vector<32x32xf32>
    %12 = arith.mulf %11, %11 : vector<32x32xf32>
    %cst_6 = arith.constant dense<0.000000e+00> : vector<32xf32>
    %13 = vector.multi_reduction <add>, %12, %cst_6 [1] : vector<32x32xf32> to vector<32xf32>
    %14 = vector.shape_cast %13 : vector<32xf32> to vector<32x1xf32>
    %cst_7 = arith.constant 3.200000e+01 : f32
    %15 = vector.broadcast %cst_7 : f32 to vector<32x1xf32>
    %16 = arith.divf %14, %15 : vector<32x1xf32>
    %17 = vector.broadcast %9 : vector<32x1xf32> to vector<32x32xf32>
    %18 = arith.subf %4, %17 : vector<32x32xf32>
    %cst_8 = arith.constant 9.99999974E-6 : f32
    %19 = vector.broadcast %cst_8 : f32 to vector<32x1xf32>
    %20 = arith.addf %16, %19 : vector<32x1xf32>
    %21 = math.rsqrt %20 : vector<32x1xf32>
    %22 = vector.broadcast %21 : vector<32x1xf32> to vector<32x32xf32>
    %23 = arith.mulf %18, %22 : vector<32x32xf32>
    %c0_9 = arith.constant 0 : index
    %c0_10 = arith.constant 0 : index
    %24 = vector.load %arg4[%c0_9, %c0_10] : memref<1x32xf32, #tpu.memory_space<vmem>>, vector<1x32xf32>
    %25 = vector.broadcast %24 : vector<1x32xf32> to vector<32x32xf32>
    %26 = arith.mulf %23, %25 : vector<32x32xf32>
    %c0_11 = arith.constant 0 : index
    %c0_12 = arith.constant 0 : index
    %27 = vector.load %arg5[%c0_11, %c0_12] : memref<1x32xf32, #tpu.memory_space<vmem>>, vector<1x32xf32>
    %28 = vector.broadcast %27 : vector<1x32xf32> to vector<32x32xf32>
    %29 = arith.addf %26, %28 : vector<32x32xf32>
    %30 = vector.broadcast %5 : vector<32x1xf32> to vector<32x32xf32>
    %31 = arith.mulf %29, %30 : vector<32x32xf32>
    %32 = arith.truncf %31 : vector<32x32xf32> to vector<32x32xbf16>
    %c0_13 = arith.constant 0 : index
    %c0_14 = arith.constant 0 : index
    %33 = vector.load %arg6[%c0_13, %c0_14] : memref<32x32xbf16, #tpu.memory_space<vmem>>, vector<32x32xbf16>
    tpu.vector_store %arg6[%c0_13, %c0_14], %32 {strides = array<i32>} : memref<32x32xbf16, #tpu.memory_space<vmem>>, vector<32x32xbf16>,
    return
  }
  func.func @transform_0(%arg0: i32) -> (i32, i32) {
    %c0_i32 = arith.constant 0 : i32
    %c0_i32_0 = arith.constant 0 : i32
    return %arg0, %c0_i32 : i32, i32
  }
  func.func @transform_1(%arg0: i32) -> (i32, i32) {
    %c0_i32 = arith.constant 0 : i32
    %c0_i32_0 = arith.constant 0 : i32
    return %arg0, %c0_i32 : i32, i32
  }
  func.func @transform_2(%arg0: i32) -> (i32, i32) {
    %c0_i32 = arith.constant 0 : i32
    %c0_i32_0 = arith.constant 0 : i32
    return %arg0, %c0_i32 : i32, i32
  }
  func.func @transform_3(%arg0: i32) -> (i32, i32) {
    %c0_i32 = arith.constant 0 : i32
    %c0_i32_0 = arith.constant 0 : i32
    %c0_i32_1 = arith.constant 0 : i32
    return %c0_i32, %c0_i32_0 : i32, i32
  }
  func.func @transform_4(%arg0: i32) -> (i32, i32) {
    %c0_i32 = arith.constant 0 : i32
    %c0_i32_0 = arith.constant 0 : i32
    %c0_i32_1 = arith.constant 0 : i32
    return %c0_i32, %c0_i32_0 : i32, i32
  }
  func.func @transform_5(%arg0: i32) -> (i32, i32) {
    %c0_i32 = arith.constant 0 : i32
    %c0_i32_0 = arith.constant 0 : i32
    return %arg0, %c0_i32 : i32, i32
  }
}

module attributes {stable_mosaic.version = 11 : i64} {
  func.func @_layernorm_kernel(%arg0: i32, %arg1: memref<16x32xbf16, #tpu.memory_space<vmem>>, %arg2: memref<16x32xbf16, #tpu.memory_space<vmem>>, %arg3: memref<16x1xf32, #tpu.memory_space<vmem>>, %arg4: memref<1x32xf32, #tpu.memory_space<vmem>>, %arg5: memref<1x32xf32, #tpu.memory_space<vmem>>, %arg6: memref<16x32xbf16, #tpu.memory_space<vmem>>) attributes {dimension_semantics = [#tpu.dimension_semantics<parallel>], iteration_bounds = array<i64: 1>, scalar_prefetch = 0 : i64, scratch_operands = 0 : i64, tpu.core_type = #tpu.core_type<tc>, window_params = [{transform_indices = @transform_0, window_bounds = array<i64: 16, 32>}, {transform_indices = @transform_1, window_bounds = array<i64: 16, 32>}, {transform_indices = @transform_2, window_bounds = array<i64: 16, 1>}, {pipeline_mode = #tpu.pipeline_mode<synchronous>, transform_indices = @transform_3, window_bounds = array<i64: 1, 32>}, {pipeline_mode = #tpu.pipeline_mode<synchronous>, transform_indices = @transform_4, window_bounds = array<i64: 1, 32>}, {transform_indices = @transform_5, window_bounds = array<i64: 16, 32>}]} {
    %c0 = arith.constant 0 : index
    %c0_0 = arith.constant 0 : index
    %0 = vector.load %arg1[%c0, %c0_0] : memref<16x32xbf16, #tpu.memory_space<vmem>>, vector<16x32xbf16>
    %1 = arith.extf %0 : vector<16x32xbf16> to vector<16x32xf32>
    %c0_1 = arith.constant 0 : index
    %c0_2 = arith.constant 0 : index
    %2 = vector.load %arg2[%c0_1, %c0_2] : memref<16x32xbf16, #tpu.memory_space<vmem>>, vector<16x32xbf16>
    %3 = arith.extf %2 : vector<16x32xbf16> to vector<16x32xf32>
    %4 = arith.addf %1, %3 : vector<16x32xf32>
    %c0_3 = arith.constant 0 : index
    %c0_4 = arith.constant 0 : index
    %5 = vector.load %arg3[%c0_3, %c0_4] : memref<16x1xf32, #tpu.memory_space<vmem>>, vector<16x1xf32>
    %cst = arith.constant dense<0.000000e+00> : vector<16xf32>
    %6 = vector.multi_reduction <add>, %4, %cst [1] : vector<16x32xf32> to vector<16xf32>
    %7 = vector.shape_cast %6 : vector<16xf32> to vector<16x1xf32>
    %cst_5 = arith.constant 3.200000e+01 : f32
    %8 = vector.broadcast %cst_5 : f32 to vector<16x1xf32>
    %9 = arith.divf %7, %8 : vector<16x1xf32>
    %10 = vector.broadcast %9 : vector<16x1xf32> to vector<16x32xf32>
    %11 = arith.subf %4, %10 : vector<16x32xf32>
    %12 = arith.mulf %11, %11 : vector<16x32xf32>
    %cst_6 = arith.constant dense<0.000000e+00> : vector<16xf32>
    %13 = vector.multi_reduction <add>, %12, %cst_6 [1] : vector<16x32xf32> to vector<16xf32>
    %14 = vector.shape_cast %13 : vector<16xf32> to vector<16x1xf32>
    %cst_7 = arith.constant 3.200000e+01 : f32
    %15 = vector.broadcast %cst_7 : f32 to vector<16x1xf32>
    %16 = arith.divf %14, %15 : vector<16x1xf32>
    %17 = vector.broadcast %9 : vector<16x1xf32> to vector<16x32xf32>
    %18 = arith.subf %4, %17 : vector<16x32xf32>
    %cst_8 = arith.constant 9.99999974E-6 : f32
    %19 = vector.broadcast %cst_8 : f32 to vector<16x1xf32>
    %20 = arith.addf %16, %19 : vector<16x1xf32>
    %21 = math.rsqrt %20 : vector<16x1xf32>
    %22 = vector.broadcast %21 : vector<16x1xf32> to vector<16x32xf32>
    %23 = arith.mulf %18, %22 : vector<16x32xf32>
    %c0_9 = arith.constant 0 : index
    %c0_10 = arith.constant 0 : index
    %24 = vector.load %arg4[%c0_9, %c0_10] : memref<1x32xf32, #tpu.memory_space<vmem>>, vector<1x32xf32>
    %25 = vector.broadcast %24 : vector<1x32xf32> to vector<16x32xf32>
    %26 = arith.mulf %23, %25 : vector<16x32xf32>
    %c0_11 = arith.constant 0 : index
    %c0_12 = arith.constant 0 : index
    %27 = vector.load %arg5[%c0_11, %c0_12] : memref<1x32xf32, #tpu.memory_space<vmem>>, vector<1x32xf32>
    %28 = vector.broadcast %27 : vector<1x32xf32> to vector<16x32xf32>
    %29 = arith.addf %26, %28 : vector<16x32xf32>
    %30 = vector.broadcast %5 : vector<16x1xf32> to vector<16x32xf32>
    %31 = arith.mulf %29, %30 : vector<16x32xf32>
    %32 = arith.truncf %31 : vector<16x32xf32> to vector<16x32xbf16>
    %c0_13 = arith.constant 0 : index
    %c0_14 = arith.constant 0 : index
    %33 = vector.load %arg6[%c0_13, %c0_14] : memref<16x32xbf16, #tpu.memory_space<vmem>>, vector<16x32xbf16>
    tpu.vector_store %arg6[%c0_13, %c0_14], %32 {strides = array<i32>} : memref<16x32xbf16, #tpu.memory_space<vmem>>, vector<16x32xbf16>,
    return
  }
  func.func @transform_0(%arg0: i32) -> (i32, i32) {
    %c0_i32 = arith.constant 0 : i32
    %c0_i32_0 = arith.constant 0 : i32
    return %arg0, %c0_i32 : i32, i32
  }
  func.func @transform_1(%arg0: i32) -> (i32, i32) {
    %c0_i32 = arith.constant 0 : i32
    %c0_i32_0 = arith.constant 0 : i32
    return %arg0, %c0_i32 : i32, i32
  }
  func.func @transform_2(%arg0: i32) -> (i32, i32) {
    %c0_i32 = arith.constant 0 : i32
    %c0_i32_0 = arith.constant 0 : i32
    return %arg0, %c0_i32 : i32, i32
  }
  func.func @transform_3(%arg0: i32) -> (i32, i32) {
    %c0_i32 = arith.constant 0 : i32
    %c0_i32_0 = arith.constant 0 : i32
    %c0_i32_1 = arith.constant 0 : i32
    return %c0_i32, %c0_i32_0 : i32, i32
  }
  func.func @transform_4(%arg0: i32) -> (i32, i32) {
    %c0_i32 = arith.constant 0 : i32
    %c0_i32_0 = arith.constant 0 : i32
    %c0_i32_1 = arith.constant 0 : i32
    return %c0_i32, %c0_i32_0 : i32, i32
  }
  func.func @transform_5(%arg0: i32) -> (i32, i32) {
    %c0_i32 = arith.constant 0 : i32
    %c0_i32_0 = arith.constant 0 : i32
    return %arg0, %c0_i32 : i32, i32
  }
}

module attributes {stable_mosaic.version = 11 : i64} {
  func.func @_matmul_kernel(%arg0: i32, %arg1: i32, %arg2: i32, %arg3: memref<16x128xbf16, #tpu.memory_space<vmem>>, %arg4: memref<128x128xbf16, #tpu.memory_space<vmem>>, %arg5: memref<1x128xf32, #tpu.memory_space<vmem>>, %arg6: memref<16x128xbf16, #tpu.memory_space<vmem>>, %arg7: memref<16x128xf32, #tpu.memory_space<vmem>>) attributes {dimension_semantics = [#tpu.dimension_semantics<parallel>, #tpu.dimension_semantics<parallel>, #tpu.dimension_semantics<arbitrary>], iteration_bounds = array<i64: 1, 1, 1>, scalar_prefetch = 0 : i64, scratch_operands = 1 : i64, tpu.core_type = #tpu.core_type<tc>, window_params = [{transform_indices = @transform_0, window_bounds = array<i64: 16, 128>}, {transform_indices = @transform_1, window_bounds = array<i64: 128, 128>}, {transform_indices = @transform_2, window_bounds = array<i64: 1, 128>}, {transform_indices = @transform_3, window_bounds = array<i64: 16, 128>}]} {
    %c0_i32 = arith.constant 0 : i32
    %0 = arith.cmpi eq, %arg2, %c0_i32 : i32
    %1 = arith.extui %0 : i1 to i32
    %c0_i32_0 = arith.constant 0 : i32
    %2 = arith.cmpi ne, %1, %c0_i32_0 : i32
    scf.if %2 {
      %cst_10 = arith.constant 0.000000e+00 : f32
      %12 = vector.broadcast %cst_10 : f32 to vector<16x128xf32>
      %c0_11 = arith.constant 0 : index
      %c0_12 = arith.constant 0 : index
      %13 = vector.load %arg7[%c0_11, %c0_12] : memref<16x128xf32, #tpu.memory_space<vmem>>, vector<16x128xf32>
      tpu.vector_store %arg7[%c0_11, %c0_12], %12 {strides = array<i32>} : memref<16x128xf32, #tpu.memory_space<vmem>>, vector<16x128xf32>,
    } else {
    }
    %c0 = arith.constant 0 : index
    %c0_1 = arith.constant 0 : index
    %3 = vector.load %arg7[%c0, %c0_1] : memref<16x128xf32, #tpu.memory_space<vmem>>, vector<16x128xf32>
    %c0_2 = arith.constant 0 : index
    %c0_3 = arith.constant 0 : index
    %4 = vector.load %arg3[%c0_2, %c0_3] : memref<16x128xbf16, #tpu.memory_space<vmem>>, vector<16x128xbf16>
    %c0_4 = arith.constant 0 : index
    %c0_5 = arith.constant 0 : index
    %5 = vector.load %arg4[%c0_4, %c0_5] : memref<128x128xbf16, #tpu.memory_space<vmem>>, vector<128x128xbf16>
    %cst = arith.constant dense<0.000000e+00> : vector<16x128xf32>
    %6 = tpu.matmul %4, %5, %cst {dimension_numbers = #tpu.dot_dimension_numbers<[1], [0], [0], [1], [0, 0, 1, 1], [], []>} : vector<16x128xbf16>, vector<128x128xbf16>, vector<16x128xf32> -> vector<16x128xf32>
    %7 = arith.addf %3, %6 : vector<16x128xf32>
    %c0_6 = arith.constant 0 : index
    %c0_7 = arith.constant 0 : index
    %8 = vector.load %arg7[%c0_6, %c0_7] : memref<16x128xf32, #tpu.memory_space<vmem>>, vector<16x128xf32>
    tpu.vector_store %arg7[%c0_6, %c0_7], %7 {strides = array<i32>} : memref<16x128xf32, #tpu.memory_space<vmem>>, vector<16x128xf32>,
    %c0_i32_8 = arith.constant 0 : i32
    %9 = arith.cmpi eq, %arg2, %c0_i32_8 : i32
    %10 = arith.extui %9 : i1 to i32
    %c0_i32_9 = arith.constant 0 : i32
    %11 = arith.cmpi ne, %10, %c0_i32_9 : i32
    scf.if %11 {
      %c0_10 = arith.constant 0 : index
      %c0_11 = arith.constant 0 : index
      %12 = vector.load %arg7[%c0_10, %c0_11] : memref<16x128xf32, #tpu.memory_space<vmem>>, vector<16x128xf32>
      %c0_12 = arith.constant 0 : index
      %c0_13 = arith.constant 0 : index
      %13 = vector.load %arg5[%c0_12, %c0_13] : memref<1x128xf32, #tpu.memory_space<vmem>>, vector<1x128xf32>
      %14 = vector.broadcast %13 : vector<1x128xf32> to vector<16x128xf32>
      %15 = arith.addf %12, %14 : vector<16x128xf32>
      %cst_14 = arith.constant 0.000000e+00 : f32
      %16 = vector.broadcast %cst_14 : f32 to vector<16x128xf32>
      %17 = arith.maximumf %15, %16 : vector<16x128xf32>
      %18 = arith.truncf %17 : vector<16x128xf32> to vector<16x128xbf16>
      %c0_15 = arith.constant 0 : index
      %c0_16 = arith.constant 0 : index
      %19 = vector.load %arg6[%c0_15, %c0_16] : memref<16x128xbf16, #tpu.memory_space<vmem>>, vector<16x128xbf16>
      tpu.vector_store %arg6[%c0_15, %c0_16], %18 {strides = array<i32>} : memref<16x128xbf16, #tpu.memory_space<vmem>>, vector<16x128xbf16>,
    } else {
    }
    return
  }
  func.func @transform_0(%arg0: i32, %arg1: i32, %arg2: i32) -> (i32, i32) {
    %c0_i32 = arith.constant 0 : i32
    return %arg0, %arg2 : i32, i32
  }
  func.func @transform_1(%arg0: i32, %arg1: i32, %arg2: i32) -> (i32, i32) {
    %c0_i32 = arith.constant 0 : i32
    return %arg2, %arg1 : i32, i32
  }
  func.func @transform_2(%arg0: i32, %arg1: i32, %arg2: i32) -> (i32, i32) {
    %c0_i32 = arith.constant 0 : i32
    %c0_i32_0 = arith.constant 0 : i32
    return %c0_i32, %arg1 : i32, i32
  }
  func.func @transform_3(%arg0: i32, %arg1: i32, %arg2: i32) -> (i32, i32) {
    %c0_i32 = arith.constant 0 : i32
    return %arg0, %arg1 : i32, i32
  }
}

module attributes {stable_mosaic.version = 11 : i64} {
  func.func @_matmul_kernel(%arg0: i32, %arg1: i32, %arg2: i32, %arg3: memref<16x128xbf16, #tpu.memory_space<vmem>>, %arg4: memref<128x128xbf16, #tpu.memory_space<vmem>>, %arg5: memref<1x128xf32, #tpu.memory_space<vmem>>, %arg6: memref<16x128xf32, #tpu.memory_space<vmem>>, %arg7: memref<16x128xf32, #tpu.memory_space<vmem>>) attributes {dimension_semantics = [#tpu.dimension_semantics<parallel>, #tpu.dimension_semantics<parallel>, #tpu.dimension_semantics<arbitrary>], iteration_bounds = array<i64: 1, 1, 1>, scalar_prefetch = 0 : i64, scratch_operands = 1 : i64, tpu.core_type = #tpu.core_type<tc>, window_params = [{transform_indices = @transform_0, window_bounds = array<i64: 16, 128>}, {transform_indices = @transform_1, window_bounds = array<i64: 128, 128>}, {transform_indices = @transform_2, window_bounds = array<i64: 1, 128>}, {transform_indices = @transform_3, window_bounds = array<i64: 16, 128>}]} {
    %c0_i32 = arith.constant 0 : i32
    %0 = arith.cmpi eq, %arg2, %c0_i32 : i32
    %1 = arith.extui %0 : i1 to i32
    %c0_i32_0 = arith.constant 0 : i32
    %2 = arith.cmpi ne, %1, %c0_i32_0 : i32
    scf.if %2 {
      %cst_10 = arith.constant 0.000000e+00 : f32
      %12 = vector.broadcast %cst_10 : f32 to vector<16x128xf32>
      %c0_11 = arith.constant 0 : index
      %c0_12 = arith.constant 0 : index
      %13 = vector.load %arg7[%c0_11, %c0_12] : memref<16x128xf32, #tpu.memory_space<vmem>>, vector<16x128xf32>
      tpu.vector_store %arg7[%c0_11, %c0_12], %12 {strides = array<i32>} : memref<16x128xf32, #tpu.memory_space<vmem>>, vector<16x128xf32>,
    } else {
    }
    %c0 = arith.constant 0 : index
    %c0_1 = arith.constant 0 : index
    %3 = vector.load %arg7[%c0, %c0_1] : memref<16x128xf32, #tpu.memory_space<vmem>>, vector<16x128xf32>
    %c0_2 = arith.constant 0 : index
    %c0_3 = arith.constant 0 : index
    %4 = vector.load %arg3[%c0_2, %c0_3] : memref<16x128xbf16, #tpu.memory_space<vmem>>, vector<16x128xbf16>
    %c0_4 = arith.constant 0 : index
    %c0_5 = arith.constant 0 : index
    %5 = vector.load %arg4[%c0_4, %c0_5] : memref<128x128xbf16, #tpu.memory_space<vmem>>, vector<128x128xbf16>
    %cst = arith.constant dense<0.000000e+00> : vector<16x128xf32>
    %6 = tpu.matmul %4, %5, %cst {dimension_numbers = #tpu.dot_dimension_numbers<[1], [0], [0], [1], [0, 0, 1, 1], [], []>} : vector<16x128xbf16>, vector<128x128xbf16>, vector<16x128xf32> -> vector<16x128xf32>
    %7 = arith.addf %3, %6 : vector<16x128xf32>
    %c0_6 = arith.constant 0 : index
    %c0_7 = arith.constant 0 : index
    %8 = vector.load %arg7[%c0_6, %c0_7] : memref<16x128xf32, #tpu.memory_space<vmem>>, vector<16x128xf32>
    tpu.vector_store %arg7[%c0_6, %c0_7], %7 {strides = array<i32>} : memref<16x128xf32, #tpu.memory_space<vmem>>, vector<16x128xf32>,
    %c0_i32_8 = arith.constant 0 : i32
    %9 = arith.cmpi eq, %arg2, %c0_i32_8 : i32
    %10 = arith.extui %9 : i1 to i32
    %c0_i32_9 = arith.constant 0 : i32
    %11 = arith.cmpi ne, %10, %c0_i32_9 : i32
    scf.if %11 {
      %c0_10 = arith.constant 0 : index
      %c0_11 = arith.constant 0 : index
      %12 = vector.load %arg7[%c0_10, %c0_11] : memref<16x128xf32, #tpu.memory_space<vmem>>, vector<16x128xf32>
      %c0_12 = arith.constant 0 : index
      %c0_13 = arith.constant 0 : index
      %13 = vector.load %arg5[%c0_12, %c0_13] : memref<1x128xf32, #tpu.memory_space<vmem>>, vector<1x128xf32>
      %14 = vector.broadcast %13 : vector<1x128xf32> to vector<16x128xf32>
      %15 = arith.addf %12, %14 : vector<16x128xf32>
      %c0_14 = arith.constant 0 : index
      %c0_15 = arith.constant 0 : index
      %16 = vector.load %arg6[%c0_14, %c0_15] : memref<16x128xf32, #tpu.memory_space<vmem>>, vector<16x128xf32>
      tpu.vector_store %arg6[%c0_14, %c0_15], %15 {strides = array<i32>} : memref<16x128xf32, #tpu.memory_space<vmem>>, vector<16x128xf32>,
    } else {
    }
    return
  }
  func.func @transform_0(%arg0: i32, %arg1: i32, %arg2: i32) -> (i32, i32) {
    %c0_i32 = arith.constant 0 : i32
    return %arg0, %arg2 : i32, i32
  }
  func.func @transform_1(%arg0: i32, %arg1: i32, %arg2: i32) -> (i32, i32) {
    %c0_i32 = arith.constant 0 : i32
    return %arg2, %arg1 : i32, i32
  }
  func.func @transform_2(%arg0: i32, %arg1: i32, %arg2: i32) -> (i32, i32) {
    %c0_i32 = arith.constant 0 : i32
    %c0_i32_0 = arith.constant 0 : i32
    return %c0_i32, %arg1 : i32, i32
  }
  func.func @transform_3(%arg0: i32, %arg1: i32, %arg2: i32) -> (i32, i32) {
    %c0_i32 = arith.constant 0 : i32
    return %arg0, %arg1 : i32, i32
  }
}

</mosaic_0001>

<llo_original>
// kernel: _lambda_.57
$region0: #{_lambda_.57}
  #allocation0 [shape = 'u32[]', space=smem, size = 0x4, offset = 0x4, fixed_abs, tag = 'smem constant byte address 0x4 - core index']
  #allocation1 [shape = 'u32[144,128]{1,0:T(1,128)}', space=vmem, size = 0x12000, scoped, tag = 'internal scratch']
  #allocation2 [shape = 'f32[16,128]{1,0:T(8,128)}', space=vmem, size = 0x2000, scoped, tag = 'scratch operand']
  %s0 = inlined_call_operand.vmem [shape: bf16[16,128], index: 0, kind: input, shape index: {}]
  %s1 = inlined_call_operand.vmem [shape: bf16[128,128], index: 1, kind: input, shape index: {}]
  %s2 = inlined_call_operand.vmem [shape: f32[1,128], index: 2, kind: input, shape index: {}]
  %s3 = inlined_call_operand.vmem [shape: bf16[16,128], index: 3, kind: output, shape index: {}]
  %s4 = sld [smem:[#allocation0]]
  $region30: #{_lambda_.57} parent=0
    _
  %s6 = ssub.s32 1, %s4
  %s7 = scalar_select 0, %s6, %s4
  // Predicated region
  $region2: #{_lambda_.57} parent=0 // pred_check
    _
  $region3: #{_lambda_.57} parent=0 // pred_check_branch
    %9 = sbr.rel (0) target = $region5
  $region4: #{_lambda_.57} parent=0 // pred_region
    _
  $region5: #{_lambda_.57} parent=0 // pred_fallthru
    _
  // Predicated region
  $region6: #{_lambda_.57} parent=0 // pred_check
    _
  $region7: #{_lambda_.57} parent=0 // pred_check_branch
    %11 = sbr.rel (0) target = $region9
  $region8: #{_lambda_.57} parent=0 // pred_region
    _
  $region9: #{_lambda_.57} parent=0 // pred_fallthru
    _
  // Predicated region
  $region10: #{_lambda_.57} parent=0 // pred_check
    _
  $region11: #{_lambda_.57} parent=0 // pred_check_branch
    %13 = sbr.rel (0) target = $region13
  $region12: #{_lambda_.57} parent=0 // pred_region
    _
  $region13: #{_lambda_.57} parent=0 // pred_fallthru
    _
  %p15 = scmp.eq.s32.totalorder 0, 0
  // Predicated region
  $region14: #{_lambda_.57} parent=0 // pred_check
    %p16 = pneg %p15
  $region15: #{_lambda_.57} parent=0 // pred_check_branch
    %18 = sbr.rel (%p16) target = $region17
  $region16: #{_lambda_.57} parent=0 // pred_region
    %19 = vst [vmem:[#allocation2] sm:$0xff] 0.0
    %20 = vst [vmem:[#allocation2 + $0x8] sm:$0xff] 0.0
  $region17: #{_lambda_.57} parent=0 // pred_fallthru
    _
  %v21 = vld [vmem:[#allocation2] sm:$0xff]
  %v22 = vld [vmem:[#allocation2 + $0x8] sm:$0xff]
  %v23 = vld [vmem:[%s0] sm:$0xf]
  %v24 = vld [vmem:[%s0 + $0x4] sm:$0xf]
  %v25 = vld [vmem:[%s1] sm:$0xf]
  %v26 = vld [vmem:[%s1 + $0x4] sm:$0xf]
  %v27 = vld [vmem:[%s1 + $0x8] sm:$0xf]
  %v28 = vld [vmem:[%s1 + $0xc] sm:$0xf]
  %v29 = vld [vmem:[%s1 + $0x10] sm:$0xf]
  %v30 = vld [vmem:[%s1 + $0x14] sm:$0xf]
  %v31 = vld [vmem:[%s1 + $0x18] sm:$0xf]
  %v32 = vld [vmem:[%s1 + $0x1c] sm:$0xf]
  %v33 = vld [vmem:[%s1 + $0x20] sm:$0xf]
  %v34 = vld [vmem:[%s1 + $0x24] sm:$0xf]
  %v35 = vld [vmem:[%s1 + $0x28] sm:$0xf]
  %v36 = vld [vmem:[%s1 + $0x2c] sm:$0xf]
  %v37 = vld [vmem:[%s1 + $0x30] sm:$0xf]
  %v38 = vld [vmem:[%s1 + $0x34] sm:$0xf]
  %v39 = vld [vmem:[%s1 + $0x38] sm:$0xf]
  %v40 = vld [vmem:[%s1 + $0x3c] sm:$0xf]
  %v43 = vunpack.c.l.b16 %v23
  %v44 = vunpack.c.l.b16 %v24
  %v45 = vpack.c.b16 %v44, %v43
  %v63 = vunpack.c.l.b16 %v25
  %v64 = vunpack.c.l.b16 %v26
  %v65 = vunpack.c.l.b16 %v27
  %v66 = vunpack.c.l.b16 %v28
  %v67 = vunpack.c.l.b16 %v29
  %v68 = vunpack.c.l.b16 %v30
  %v69 = vunpack.c.l.b16 %v31
  %v70 = vunpack.c.l.b16 %v32
  %v71 = vunpack.c.l.b16 %v33
  %v72 = vunpack.c.l.b16 %v34
  %v73 = vunpack.c.l.b16 %v35
  %v74 = vunpack.c.l.b16 %v36
  %v75 = vunpack.c.l.b16 %v37
  %v76 = vunpack.c.l.b16 %v38
  %v77 = vunpack.c.l.b16 %v39
  %v78 = vunpack.c.l.b16 %v40
  %v79 = vpack.c.b16 %v64, %v63
  %v80 = vpack.c.b16 %v66, %v65
  %v81 = vpack.c.b16 %v68, %v67
  %v82 = vpack.c.b16 %v70, %v69
  %v83 = vpack.c.b16 %v72, %v71
  %v84 = vpack.c.b16 %v74, %v73
  %v85 = vpack.c.b16 %v76, %v75
  %v86 = vpack.c.b16 %v78, %v77
  %95 = vmatprep.subr.bf16.mxu0 0
  %96 = vmatpush1.bf16.msra.mxu0 %v79
  %97 = vmatprep.subr.bf16.mxu0 0
  %98 = vmatpush1.bf16.msra.mxu0 %v80
  %99 = vmatprep.subr.bf16.mxu0 0
  %100 = vmatpush1.bf16.msra.mxu0 %v81
  %101 = vmatprep.subr.bf16.mxu0 0
  %102 = vmatpush1.bf16.msra.mxu0 %v82
  %103 = vmatprep.subr.bf16.mxu0 0
  %104 = vmatpush1.bf16.msra.mxu0 %v83
  %105 = vmatprep.subr.bf16.mxu0 0
  %106 = vmatpush1.bf16.msra.mxu0 %v84
  %107 = vmatprep.subr.bf16.mxu0 0
  %108 = vmatpush1.bf16.msra.mxu0 %v85
  %109 = vmatprep.subr.bf16.mxu0 0
  %110 = vmatpush1.bf16.msra.mxu0 %v86
  %111 = vmatprep.subr.bf16.mxu0 0
  %112 = vmatpush1.bf16.msra.mxu0 0
  %113 = vmatprep.subr.bf16.mxu0 0
  %114 = vmatpush1.bf16.msra.mxu0 0
  %115 = vmatprep.subr.bf16.mxu0 0
  %116 = vmatpush1.bf16.msra.mxu0 0
  %117 = vmatprep.subr.bf16.mxu0 0
  %118 = vmatpush1.bf16.msra.mxu0 0
  %119 = vmatprep.subr.bf16.mxu0 0
  %120 = vmatpush1.bf16.msra.mxu0 0
  %121 = vmatprep.subr.bf16.mxu0 0
  %122 = vmatpush1.bf16.msra.mxu0 0
  %123 = vmatprep.subr.bf16.mxu0 0
  %124 = vmatpush1.bf16.msra.mxu0 0
  %125 = vmatprep.subr.bf16.mxu0 0
  %126 = vmatpush1.bf16.msra.mxu0 0
  %127 = vmatprep.mubr.bf16.mxu0 0
  %128 = vmatmul.mubr.bf16.gmra.mrb[0].mxu0 %v45
  %v129 = vpop.f32.mrb[0].mxu0
  %v130 = vadd.f32 0.0, %v129
  %v131 = vpop.f32.mrb[0].mxu0
  %v132 = vpop.f32.mrb[0].mxu0
  %v133 = vadd.f32 0.0, %v132
  %v134 = vpop.f32.mrb[0].mxu0
  %135 = vdwg.mxu0
  %v136 = vadd.f32 %v21, %v130
  %v137 = vadd.f32 %v22, %v133
  %138 = vst [vmem:[#allocation2] sm:$0xff] %v136
  %139 = vst [vmem:[#allocation2 + $0x8] sm:$0xff] %v137
  // Predicated region
  $region18: #{_lambda_.57} parent=0 // pred_check
    %p140 = pneg %p15
  $region19: #{_lambda_.57} parent=0 // pred_check_branch
    %142 = sbr.rel (%p140) target = $region21
  $region20: #{_lambda_.57} parent=0 // pred_region
    %v143 = vld [vmem:[#allocation2] sm:$0xff]
    %v144 = vld [vmem:[#allocation2 + $0x8] sm:$0xff]
    %v145 = vld [vmem:[%s2] sm:$0x1]
    %v147 = vlaneseq
    %v148 = vshrl.u32 %v147, 7
    %v149 = vsub.s32 0, %v148
    %v150 = vrot.slane %v145, %v149
    %v152 = vadd.f32 %v143, %v150
    %v153 = vadd.f32 %v144, %v150
    %v154 = vpack.c.bf16 %v153, %v152
    %v156 = vunpack.c.l.b16 %v154
    %v157 = vunpack.c.h.b16 %v154
    %v158 = vpack.c.b16 %v156, %v156
    %v159 = vpack.c.b16 %v157, %v157
    %162 = vst [vmem:[%s3] sm:$0xf] %v158
    %163 = vst [vmem:[%s3 + $0x4] sm:$0xf] %v159
  $region21: #{_lambda_.57} parent=0 // pred_fallthru
    _
  // Predicated region
  $region22: #{_lambda_.57} parent=0 // pred_check
    _
  $region23: #{_lambda_.57} parent=0 // pred_check_branch
    %165 = sbr.rel (0) target = $region25
  $region24: #{_lambda_.57} parent=0 // pred_region
    _
  $region25: #{_lambda_.57} parent=0 // pred_fallthru
    _
  // Predicated region
  $region26: #{_lambda_.57} parent=0 // pred_check
    _
  $region27: #{_lambda_.57} parent=0 // pred_check_branch
    %167 = sbr.rel (0) target = $region29
  $region28: #{_lambda_.57} parent=0 // pred_region
    _
  $region29: #{_lambda_.57} parent=0 // pred_fallthru
    _

// kernel: _lambda_.60
$region0: #{_lambda_.60}
  #allocation0 [shape = 'u32[]', space=smem, size = 0x4, offset = 0x4, fixed_abs, tag = 'smem constant byte address 0x4 - core index']
  #allocation1 [shape = 'u32[144,128]{1,0:T(1,128)}', space=vmem, size = 0x12000, scoped, tag = 'internal scratch']
  %s0 = inlined_call_operand.vmem [shape: bf16[16,32], index: 0, kind: input, shape index: {}]
  %s1 = inlined_call_operand.vmem [shape: f32[16,32], index: 1, kind: input, shape index: {}]
  %s2 = inlined_call_operand.vmem [shape: f32[16,1], index: 2, kind: input, shape index: {}]
  %s3 = inlined_call_operand.vmem [shape: f32[1,32], index: 3, kind: input, shape index: {}]
  %s4 = inlined_call_operand.vmem [shape: f32[1,32], index: 4, kind: input, shape index: {}]
  %s5 = inlined_call_operand.vmem [shape: bf16[16,32], index: 5, kind: output, shape index: {}]
  %s6 = sld [smem:[#allocation0]]
  $region30: #{_lambda_.60} parent=0
    _
  %s8 = ssub.s32 1, %s6
  %s9 = scalar_select 0, %s8, %s6
  // Predicated region
  $region2: #{_lambda_.60} parent=0 // pred_check
    _
  $region3: #{_lambda_.60} parent=0 // pred_check_branch
    %11 = sbr.rel (0) target = $region5
  $region4: #{_lambda_.60} parent=0 // pred_region
    _
  $region5: #{_lambda_.60} parent=0 // pred_fallthru
    _
  // Predicated region
  $region6: #{_lambda_.60} parent=0 // pred_check
    _
  $region7: #{_lambda_.60} parent=0 // pred_check_branch
    %13 = sbr.rel (0) target = $region9
  $region8: #{_lambda_.60} parent=0 // pred_region
    _
  $region9: #{_lambda_.60} parent=0 // pred_fallthru
    _
  // Predicated region
  $region10: #{_lambda_.60} parent=0 // pred_check
    _
  $region11: #{_lambda_.60} parent=0 // pred_check_branch
    %15 = sbr.rel (0) target = $region13
  $region12: #{_lambda_.60} parent=0 // pred_region
    _
  $region13: #{_lambda_.60} parent=0 // pred_fallthru
    _
  // Predicated region
  $region14: #{_lambda_.60} parent=0 // pred_check
    _
  $region15: #{_lambda_.60} parent=0 // pred_check_branch
    %17 = sbr.rel (0) target = $region17
  $region16: #{_lambda_.60} parent=0 // pred_region
    _
  $region17: #{_lambda_.60} parent=0 // pred_fallthru
    _
  // Predicated region
  $region18: #{_lambda_.60} parent=0 // pred_check
    _
  $region19: #{_lambda_.60} parent=0 // pred_check_branch
    %19 = sbr.rel (0) target = $region21
  $region20: #{_lambda_.60} parent=0 // pred_region
    _
  $region21: #{_lambda_.60} parent=0 // pred_fallthru
    _
  %v20 = vld [vmem:[%s0] sm:$0xf]
  %v21 = vld [vmem:[%s0 + $0x4] sm:$0xf]
  %v22 = vunpack.c.l.bf16 %v20
  %v23 = vunpack.c.l.bf16 %v21
  %v24 = vld [vmem:[%s1] sm:$0xff]
  %v25 = vld [vmem:[%s1 + $0x8] sm:$0xff]
  %v26 = vadd.f32 %v22, %v24
  %v27 = vadd.f32 %v23, %v25
  %v28 = vld [vmem:[%s2] sm:$0xff]
  %v29 = vld [vmem:[%s2 + $0x8] sm:$0xff]
  %vm30 = vcmask 261120
  %v31 = vsel %vm30, %v26, 0.0
  %32 = vadd.xlane.f32.xlu0 %v31
  %v33 = vpop.xlane.xlu0 %32
  %v34 = vsel %vm30, %v27, 0.0
  %35 = vadd.xlane.f32.xlu0 %v34
  %v36 = vpop.xlane.xlu0 %35
  %v37 = vrcp.pop 32.0
  %v38 = vmul.f32 %v33, %v37
  %v39 = vmul.f32 %v36, %v37
  %v40 = vsub.f32 %v26, %v38
  %v41 = vsub.f32 %v27, %v39
  %v42 = vmul.f32 %v40, %v40
  %v43 = vmul.f32 %v41, %v41
  %v44 = vsel %vm30, %v42, 0.0
  %45 = vadd.xlane.f32.xlu0 %v44
  %v46 = vpop.xlane.xlu0 %45
  %v47 = vsel %vm30, %v43, 0.0
  %48 = vadd.xlane.f32.xlu0 %v47
  %v49 = vpop.xlane.xlu0 %48
  %v50 = vmul.f32 %v46, %v37
  %v51 = vmul.f32 %v49, %v37
  %v52 = vadd.f32 %v50, 1e-05
  %v53 = vadd.f32 %v51, 1e-05
  %v54 = vrsqrt.pop %v52
  %v55 = vrsqrt.pop %v53
  %v56 = vmul.f32 %v40, %v54
  %v57 = vmul.f32 %v41, %v55
  %v58 = vld [vmem:[%s3] sm:$0x1]
  %v60 = vlaneseq
  %v61 = vshrl.u32 %v60, 7
  %v62 = vsub.s32 0, %v61
  %v63 = vrot.slane %v58, %v62
  %v65 = vmul.f32 %v56, %v63
  %v66 = vmul.f32 %v57, %v63
  %v67 = vld [vmem:[%s4] sm:$0x1]
  %v69 = vlaneseq
  %v70 = vshrl.u32 %v69, 7
  %v71 = vsub.s32 0, %v70
  %v72 = vrot.slane %v67, %v71
  %v74 = vadd.f32 %v65, %v72
  %v75 = vadd.f32 %v66, %v72
  %77 = vset.pattern.permute.xlu0 0
  %78 = vperm.xlu0 %77, %v28
  %v79 = vpop.permute.xlu0 %78
  %82 = vset.pattern.permute.xlu0 0
  %83 = vperm.xlu0 %82, %v29
  %v84 = vpop.permute.xlu0 %83
  %v86 = vmul.f32 %v74, %v79
  %v87 = vmul.f32 %v75, %v84
  %v88 = vpack.c.bf16 %v87, %v86
  %v90 = vunpack.c.l.b16 %v88
  %v91 = vunpack.c.h.b16 %v88
  %v92 = vpack.c.b16 %v90, %v90
  %v93 = vpack.c.b16 %v91, %v91
  %vm96 = vcmask 257024
  %97 = vst.msk [vmem:[%s5] sm:$0xf] %vm96, %v92
  %98 = vst.msk [vmem:[%s5 + $0x4] sm:$0xf] %vm96, %v93
  // Predicated region
  $region22: #{_lambda_.60} parent=0 // pred_check
    _
  $region23: #{_lambda_.60} parent=0 // pred_check_branch
    %100 = sbr.rel (0) target = $region25
  $region24: #{_lambda_.60} parent=0 // pred_region
    _
  $region25: #{_lambda_.60} parent=0 // pred_fallthru
    _
  // Predicated region
  $region26: #{_lambda_.60} parent=0 // pred_check
    _
  $region27: #{_lambda_.60} parent=0 // pred_check_branch
    %102 = sbr.rel (0) target = $region29
  $region28: #{_lambda_.60} parent=0 // pred_region
    _
  $region29: #{_lambda_.60} parent=0 // pred_fallthru
    _

// kernel: _lambda_.58
$region0: #{_lambda_.58}
  #allocation0 [shape = 'u32[]', space=smem, size = 0x4, offset = 0x4, fixed_abs, tag = 'smem constant byte address 0x4 - core index']
  #allocation1 [shape = 'u32[144,128]{1,0:T(1,128)}', space=vmem, size = 0x12000, scoped, tag = 'internal scratch']
  #allocation2 [shape = 'f32[4,16,1]{2,1,0:T(8,128)}', space=vmem, size = 0x8000, scoped, tag = 'scratch operand']
  #allocation3 [shape = 'f32[4,16,1]{2,1,0:T(8,128)}', space=vmem, size = 0x8000, scoped, tag = 'scratch operand']
  #allocation4 [shape = 'f32[4,16,8]{2,1,0:T(8,128)}', space=vmem, size = 0x8000, scoped, tag = 'scratch operand']
  %s0 = inlined_call_operand.vmem [shape: bf16[2,4,16,8], index: 0, kind: input, shape index: {}]
  %s1 = inlined_call_operand.vmem [shape: bf16[2,4,16,8], index: 1, kind: input, shape index: {}]
  %s2 = inlined_call_operand.vmem [shape: bf16[2,4,16,8], index: 2, kind: input, shape index: {}]
  %s3 = inlined_call_operand.vmem [shape: f32[2,1,16], index: 3, kind: input, shape index: {}]
  %s4 = inlined_call_operand.vmem [shape: bf16[2,4,16,8], index: 4, kind: output, shape index: {}]
  %s5 = sld [smem:[#allocation0]]
  $region57: #{_lambda_.58} parent=0
    _
  %s7 = ssub.s32 1, %s5
  %s8 = scalar_select 0, %s7, %s5
  loop: start=0, step=1, limit=4
  $region2: #{_lambda_.58} parent=0 // loop_pre_header
    _
  $region3: #{_lambda_.58} parent=0 // loop_header
    %s10 = sphi 0, %s14
    %p11 = scmp.ge.s32.totalorder %s10, 4
    %s17 = sphi 0, %s36
    %s18 = sphi 0, %s32
    %s19 = sphi 0, %s28
    %s20 = sphi 0, %s17
    %s21 = sphi 0, %s18
    %s22 = sphi 0, %s19
    %s23 = sphi 0, %s20
    %s24 = sphi 0, %s21
    %s25 = sphi 0, %s22
    %s41 = sphi 0, %s43
    %s44 = sphi 0, %s41
    %s45 = sphi 0, %s44
    %s61 = sphi 0, %s45
    %s69 = sphi 0, %s71
    %s72 = sphi 0, %s69
    %s73 = sphi 0, %s72
    %s89 = sphi 0, %s73
    %s97 = sphi 0, %s99
    %s100 = sphi 0, %s97
    %s101 = sphi 0, %s100
    %s117 = sphi 0, %s101
    %s125 = sphi 0, %s127
    %s128 = sphi 0, %s125
    %s129 = sphi 0, %s128
    %s145 = sphi 0, %s129
    %s153 = sphi 0, %s155
    %s156 = sphi 0, %s153
    %s157 = sphi 0, %s156
    %s173 = sphi 0, %s157
  $region4: #{_lambda_.58} parent=0 // loop_header_branch
    %13 = sbr.rel (%p11) target = $region8
  $region5: #{_lambda_.58} parent=0 // loop_body
    %s15 = ssub.s32 %s10, 1
    %s16 = ssub.s32 %s10, 2
    %s26 = sadd.s32 1, %s19
    %p27 = scmp.ge.s32.totalorder %s26, 1
    %s28 = scalar_select %p27, 0, %s26
    %s29 = sadd.s32 1, %s18
    %s30 = scalar_select %p27, %s29, %s18
    %p31 = scmp.ge.s32.totalorder %s30, 1
    %s32 = scalar_select %p31, 0, %s30
    %s33 = sadd.s32 1, %s17
    %s34 = scalar_select %p31, %s33, %s17
    %p35 = scmp.ge.s32.totalorder %s34, 2
    %s36 = scalar_select %p35, 0, %s34
    %s37 = ssub.s32 %s17, %s36
    %s38 = ssub.s32 %s18, %s32
    %s39 = sor.u32 %s37, %s38
    %p40 = scmp.eq.s32.totalorder %s39, 0
    %s42 = sadd.s32 %s41, 1
    %s43 = scalar_select %p40, %s41, %s42
    %p46 = pneg %p40
    %p47 = scmp.eq.s32.totalorder %s10, 1
    %p48 = por %p46, %p47
    %p49 = scmp.ne.s32.totalorder %s41, %s44
    %p50 = scmp.eq.s32.totalorder %s10, 0
    %p51 = por %p49, %p50
    %p52 = scmp.ne.s32.totalorder %s41, %s44
    %p53 = scmp.eq.s32.totalorder %s15, 1
    %p54 = por %p52, %p53
    %p55 = scmp.ne.s32.totalorder %s44, %s45
    %p56 = scmp.eq.s32.totalorder %s15, 0
    %p57 = por %p55, %p56
    %p58 = scmp.ne.s32.totalorder %s44, %s45
    %p59 = scmp.eq.s32.totalorder %s16, 1
    %p60 = por %p58, %p59
    %p62 = scmp.ne.s32.totalorder %s45, %s61
    %p63 = scmp.eq.s32.totalorder %s16, 0
    %p64 = por %p62, %p63
    %s65 = ssub.s32 %s17, %s36
    %s66 = ssub.s32 %s19, %s28
    %s67 = sor.u32 %s65, %s66
    %p68 = scmp.eq.s32.totalorder %s67, 0
    %s70 = sadd.s32 %s69, 1
    %s71 = scalar_select %p68, %s69, %s70
    %p74 = pneg %p68
    %p75 = scmp.eq.s32.totalorder %s10, 1
    %p76 = por %p74, %p75
    %p77 = scmp.ne.s32.totalorder %s69, %s72
    %p78 = scmp.eq.s32.totalorder %s10, 0
    %p79 = por %p77, %p78
    %p80 = scmp.ne.s32.totalorder %s69, %s72
    %p81 = scmp.eq.s32.totalorder %s15, 1
    %p82 = por %p80, %p81
    %p83 = scmp.ne.s32.totalorder %s72, %s73
    %p84 = scmp.eq.s32.totalorder %s15, 0
    %p85 = por %p83, %p84
    %p86 = scmp.ne.s32.totalorder %s72, %s73
    %p87 = scmp.eq.s32.totalorder %s16, 1
    %p88 = por %p86, %p87
    %p90 = scmp.ne.s32.totalorder %s73, %s89
    %p91 = scmp.eq.s32.totalorder %s16, 0
    %p92 = por %p90, %p91
    %s93 = ssub.s32 %s17, %s36
    %s94 = ssub.s32 %s19, %s28
    %s95 = sor.u32 %s93, %s94
    %p96 = scmp.eq.s32.totalorder %s95, 0
    %s98 = sadd.s32 %s97, 1
    %s99 = scalar_select %p96, %s97, %s98
    %p102 = pneg %p96
    %p103 = scmp.eq.s32.totalorder %s10, 1
    %p104 = por %p102, %p103
    %p105 = scmp.ne.s32.totalorder %s97, %s100
    %p106 = scmp.eq.s32.totalorder %s10, 0
    %p107 = por %p105, %p106
    %p108 = scmp.ne.s32.totalorder %s97, %s100
    %p109 = scmp.eq.s32.totalorder %s15, 1
    %p110 = por %p108, %p109
    %p111 = scmp.ne.s32.totalorder %s100, %s101
    %p112 = scmp.eq.s32.totalorder %s15, 0
    %p113 = por %p111, %p112
    %p114 = scmp.ne.s32.totalorder %s100, %s101
    %p115 = scmp.eq.s32.totalorder %s16, 1
    %p116 = por %p114, %p115
    %p118 = scmp.ne.s32.totalorder %s101, %s117
    %p119 = scmp.eq.s32.totalorder %s16, 0
    %p120 = por %p118, %p119
    %s121 = ssub.s32 %s17, %s36
    %s122 = ssub.s32 %s19, %s28
    %s123 = sor.u32 %s121, %s122
    %p124 = scmp.eq.s32.totalorder %s123, 0
    %s126 = sadd.s32 %s125, 1
    %s127 = scalar_select %p124, %s125, %s126
    %p130 = pneg %p124
    %p131 = scmp.eq.s32.totalorder %s10, 1
    %p132 = por %p130, %p131
    %p133 = scmp.ne.s32.totalorder %s125, %s128
    %p134 = scmp.eq.s32.totalorder %s10, 0
    %p135 = por %p133, %p134
    %p136 = scmp.ne.s32.totalorder %s125, %s128
    %p137 = scmp.eq.s32.totalorder %s15, 1
    %p138 = por %p136, %p137
    %p139 = scmp.ne.s32.totalorder %s128, %s129
    %p140 = scmp.eq.s32.totalorder %s15, 0
    %p141 = por %p139, %p140
    %p142 = scmp.ne.s32.totalorder %s128, %s129
    %p143 = scmp.eq.s32.totalorder %s16, 1
    %p144 = por %p142, %p143
    %p146 = scmp.ne.s32.totalorder %s129, %s145
    %p147 = scmp.eq.s32.totalorder %s16, 0
    %p148 = por %p146, %p147
    %s149 = ssub.s32 %s17, %s36
    %s150 = ssub.s32 %s18, %s32
    %s151 = sor.u32 %s149, %s150
    %p152 = scmp.eq.s32.totalorder %s151, 0
    %s154 = sadd.s32 %s153, 1
    %s155 = scalar_select %p152, %s153, %s154
    %p158 = pneg %p152
    %p159 = scmp.eq.s32.totalorder %s10, 1
    %p160 = por %p158, %p159
    %p161 = scmp.ne.s32.totalorder %s153, %s156
    %p162 = scmp.eq.s32.totalorder %s10, 0
    %p163 = por %p161, %p162
    %p164 = scmp.ne.s32.totalorder %s153, %s156
    %p165 = scmp.eq.s32.totalorder %s15, 1
    %p166 = por %p164, %p165
    %p167 = scmp.ne.s32.totalorder %s156, %s157
    %p168 = scmp.eq.s32.totalorder %s15, 0
    %p169 = por %p167, %p168
    %p170 = scmp.ne.s32.totalorder %s156, %s157
    %p171 = scmp.eq.s32.totalorder %s16, 1
    %p172 = por %p170, %p171
    %p174 = scmp.ne.s32.totalorder %s157, %s173
    %p175 = scmp.eq.s32.totalorder %s16, 0
    %p176 = por %p174, %p175
    %p177 = scmp.le.s32.totalorder 1, %s10
    %p178 = scmp.lt.s32.totalorder %s10, 3
    %p179 = pnand %p177, %p178
    %p180 = pneg %p179
    // Predicated region
    $region9: #{_lambda_.58} parent=5 // pred_check
      _
    $region10: #{_lambda_.58} parent=5 // pred_check_branch
      %182 = sbr.rel (%p179) target = $region12
    $region11: #{_lambda_.58} parent=5 // pred_region
      %s183 = ssub.s32 %s10, 1
    $region12: #{_lambda_.58} parent=5 // pred_fallthru
      _
    %p184 = scmp.lt.s32.totalorder %s10, 2
    // Predicated region
    $region13: #{_lambda_.58} parent=5 // pred_check
      %p185 = pneg %p184
    $region14: #{_lambda_.58} parent=5 // pred_check_branch
      %187 = sbr.rel (%p185) target = $region16
    $region15: #{_lambda_.58} parent=5 // pred_region
      // Predicated region
      $region17: #{_lambda_.58} parent=15 // pred_check
        %p188 = pneg %p51
      $region18: #{_lambda_.58} parent=15 // pred_check_branch
        %190 = sbr.rel (%p188) target = $region20
      $region19: #{_lambda_.58} parent=15 // pred_region
        %s191 = smul.u32 2, %s18
        %p192 = scmp.lt.s32.totalorder %s17, 1
        %s193 = scalar_select %p192, %s17, 1
        %p194 = scmp.lt.s32.totalorder %s191, 1
        %s195 = scalar_select %p194, %s191, 1
        %s196 = smul.addr %s193, 8
        %s197 = sadd.s32 %s195, %s196
        %s198 = smul.addr %s197, 4
        %s199 = scalar_lea.vmem %s0, %s198
        %s200 = smul.u32 2, %s18
      $region20: #{_lambda_.58} parent=15 // pred_fallthru
        _
      // Predicated region
      $region21: #{_lambda_.58} parent=15 // pred_check
        %p201 = pneg %p79
      $region22: #{_lambda_.58} parent=15 // pred_check_branch
        %203 = sbr.rel (%p201) target = $region24
      $region23: #{_lambda_.58} parent=15 // pred_region
        %s204 = smul.u32 2, %s19
        %p205 = scmp.lt.s32.totalorder %s17, 1
        %s206 = scalar_select %p205, %s17, 1
        %p207 = scmp.lt.s32.totalorder %s204, 1
        %s208 = scalar_select %p207, %s204, 1
        %s209 = smul.addr %s206, 8
        %s210 = sadd.s32 %s208, %s209
        %s211 = smul.addr %s210, 4
        %s212 = scalar_lea.vmem %s1, %s211
        %s213 = smul.u32 2, %s19
      $region24: #{_lambda_.58} parent=15 // pred_fallthru
        _
      // Predicated region
      $region25: #{_lambda_.58} parent=15 // pred_check
        %p214 = pneg %p107
      $region26: #{_lambda_.58} parent=15 // pred_check_branch
        %216 = sbr.rel (%p214) target = $region28
      $region27: #{_lambda_.58} parent=15 // pred_region
        %s217 = smul.u32 2, %s19
        %p218 = scmp.lt.s32.totalorder %s17, 1
        %s219 = scalar_select %p218, %s17, 1
        %p220 = scmp.lt.s32.totalorder %s217, 1
        %s221 = scalar_select %p220, %s217, 1
        %s222 = smul.addr %s219, 8
        %s223 = sadd.s32 %s221, %s222
        %s224 = smul.addr %s223, 4
        %s225 = scalar_lea.vmem %s2, %s224
        %s226 = smul.u32 2, %s19
      $region28: #{_lambda_.58} parent=15 // pred_fallthru
        _
      // Predicated region
      $region29: #{_lambda_.58} parent=15 // pred_check
        %p227 = pneg %p135
      $region30: #{_lambda_.58} parent=15 // pred_check_branch
        %229 = sbr.rel (%p227) target = $region32
      $region31: #{_lambda_.58} parent=15 // pred_region
        %p230 = scmp.lt.s32.totalorder %s17, 1
        %s231 = scalar_select %p230, %s17, 1
        %p232 = scmp.lt.s32.totalorder %s19, 0
        %s233 = scalar_select %p232, %s19, 0
        %s234 = sadd.s32 %s233, %s231
        %s235 = scalar_lea.vmem %s3, %s234
      $region32: #{_lambda_.58} parent=15 // pred_fallthru
        _
    $region16: #{_lambda_.58} parent=5 // pred_fallthru
      _
    %p236 = scmp.le.s32.totalorder 1, %s10
    %p237 = scmp.lt.s32.totalorder %s10, 3
    %p238 = pnand %p236, %p237
    %p239 = pneg %p238
    // Predicated region
    $region33: #{_lambda_.58} parent=5 // pred_check
      _
    $region34: #{_lambda_.58} parent=5 // pred_check_branch
      %241 = sbr.rel (%p238) target = $region36
    $region35: #{_lambda_.58} parent=5 // pred_region
      %s242 = ssub.s32 %s10, 1
      %s243 = smul.u32 2, %s21
      %p244 = scmp.lt.s32.totalorder %s20, 1
      %s245 = scalar_select %p244, %s20, 1
      %p246 = scmp.lt.s32.totalorder %s243, 1
      %s247 = scalar_select %p246, %s243, 1
      %s248 = smul.addr %s245, 8
      %s249 = sadd.s32 %s247, %s248
      %s250 = smul.addr %s249, 4
      %s251 = scalar_lea.vmem %s0, %s250
      %p252 = pneg %p57
      %p253 = pneg %p54
      %s254 = smul.u32 2, %s22
      %p255 = scmp.lt.s32.totalorder %s20, 1
      %s256 = scalar_select %p255, %s20, 1
      %p257 = scmp.lt.s32.totalorder %s254, 1
      %s258 = scalar_select %p257, %s254, 1
      %s259 = smul.addr %s256, 8
      %s260 = sadd.s32 %s258, %s259
      %s261 = smul.addr %s260, 4
      %s262 = scalar_lea.vmem %s1, %s261
      %p263 = pneg %p85
      %p264 = pneg %p82
      %s265 = smul.u32 2, %s22
      %p266 = scmp.lt.s32.totalorder %s20, 1
      %s267 = scalar_select %p266, %s20, 1
      %p268 = scmp.lt.s32.totalorder %s265, 1
      %s269 = scalar_select %p268, %s265, 1
      %s270 = smul.addr %s267, 8
      %s271 = sadd.s32 %s269, %s270
      %s272 = smul.addr %s271, 4
      %s273 = scalar_lea.vmem %s2, %s272
      %p274 = pneg %p113
      %p275 = pneg %p110
      %p276 = scmp.lt.s32.totalorder %s20, 1
      %s277 = scalar_select %p276, %s20, 1
      %p278 = scmp.lt.s32.totalorder %s22, 0
      %s279 = scalar_select %p278, %s22, 0
      %s280 = sadd.s32 %s279, %s277
      %s281 = scalar_lea.vmem %s3, %s280
      %p282 = pneg %p141
      %p283 = pneg %p138
      %p284 = pneg %p169
      %p285 = pneg %p166
      %s286 = smul.u32 2, %s21
      %p287 = scmp.lt.s32.totalorder %s20, 1
      %s288 = scalar_select %p287, %s20, 1
      %p289 = scmp.lt.s32.totalorder %s286, 1
      %s290 = scalar_select %p289, %s286, 1
      %s291 = smul.addr %s288, 8
      %s292 = sadd.s32 %s290, %s291
      %s293 = smul.addr %s292, 4
      %s294 = scalar_lea.vmem %s4, %s293
      %s295 = smul.u32 2, %s21
      %p296 = scmp.lt.s32.totalorder %s20, 1
      %s297 = scalar_select %p296, %s20, 1
      %p298 = scmp.lt.s32.totalorder %s295, 1
      %s299 = scalar_select %p298, %s295, 1
      %s300 = smul.addr %s297, 8
      %s301 = sadd.s32 %s299, %s300
      %s302 = smul.addr %s301, 4
      %s303 = scalar_lea.vmem %s0, %s302
      %s304 = smul.u32 2, %s21
      %s305 = smul.u32 2, %s22
      %p306 = scmp.lt.s32.totalorder %s20, 1
      %s307 = scalar_select %p306, %s20, 1
      %p308 = scmp.lt.s32.totalorder %s305, 1
      %s309 = scalar_select %p308, %s305, 1
      %s310 = smul.addr %s307, 8
      %s311 = sadd.s32 %s309, %s310
      %s312 = smul.addr %s311, 4
      %s313 = scalar_lea.vmem %s1, %s312
      %s314 = smul.u32 2, %s22
      %s315 = smul.u32 2, %s22
      %p316 = scmp.lt.s32.totalorder %s20, 1
      %s317 = scalar_select %p316, %s20, 1
      %p318 = scmp.lt.s32.totalorder %s315, 1
      %s319 = scalar_select %p318, %s315, 1
      %s320 = smul.addr %s317, 8
      %s321 = sadd.s32 %s319, %s320
      %s322 = smul.addr %s321, 4
      %s323 = scalar_lea.vmem %s2, %s322
      %s324 = smul.u32 2, %s22
      %p325 = scmp.lt.s32.totalorder %s20, 1
      %s326 = scalar_select %p325, %s20, 1
      %p327 = scmp.lt.s32.totalorder %s22, 0
      %s328 = scalar_select %p327, %s22, 0
      %s329 = sadd.s32 %s328, %s326
      %s330 = scalar_lea.vmem %s3, %s329
      %s331 = smul.u32 2, %s21
      %p332 = scmp.lt.s32.totalorder %s20, 1
      %s333 = scalar_select %p332, %s20, 1
      %p334 = scmp.lt.s32.totalorder %s331, 1
      %s335 = scalar_select %p334, %s331, 1
      %s336 = smul.addr %s333, 8
      %s337 = sadd.s32 %s335, %s336
      %s338 = smul.addr %s337, 4
      %s339 = scalar_lea.vmem %s4, %s338
      %s340 = smul.u32 2, %s21
      %p342 = scmp.eq.s32.totalorder %s22, 0
      // Predicated region
      $region37: #{_lambda_.58} parent=35 // pred_check
        %p343 = pneg %p342
      $region38: #{_lambda_.58} parent=35 // pred_check_branch
        %345 = sbr.rel (%p343) target = $region40
      $region39: #{_lambda_.58} parent=35 // pred_region
        %vm346 = vcmask 7168
        %347 = vst.msk [vmem:[#allocation2] sm:$0xff] %vm346, -1e+09
        %348 = vst.msk [vmem:[#allocation2 + $0x8] sm:$0xff] %vm346, -1e+09
        %349 = vst.msk [vmem:[#allocation2 + $0x10] sm:$0xff] %vm346, -1e+09
        %350 = vst.msk [vmem:[#allocation2 + $0x18] sm:$0xff] %vm346, -1e+09
        %351 = vst.msk [vmem:[#allocation2 + $0x20] sm:$0xff] %vm346, -1e+09
        %352 = vst.msk [vmem:[#allocation2 + $0x28] sm:$0xff] %vm346, -1e+09
        %353 = vst.msk [vmem:[#allocation2 + $0x30] sm:$0xff] %vm346, -1e+09
        %354 = vst.msk [vmem:[#allocation2 + $0x38] sm:$0xff] %vm346, -1e+09
        %355 = vst.msk [vmem:[#allocation3] sm:$0xff] %vm346, 0.0
        %356 = vst.msk [vmem:[#allocation3 + $0x8] sm:$0xff] %vm346, 0.0
        %357 = vst.msk [vmem:[#allocation3 + $0x10] sm:$0xff] %vm346, 0.0
        %358 = vst.msk [vmem:[#allocation3 + $0x18] sm:$0xff] %vm346, 0.0
        %359 = vst.msk [vmem:[#allocation3 + $0x20] sm:$0xff] %vm346, 0.0
        %360 = vst.msk [vmem:[#allocation3 + $0x28] sm:$0xff] %vm346, 0.0
        %361 = vst.msk [vmem:[#allocation3 + $0x30] sm:$0xff] %vm346, 0.0
        %362 = vst.msk [vmem:[#allocation3 + $0x38] sm:$0xff] %vm346, 0.0
        %vm363 = vcmask 64512
        %364 = vst.msk [vmem:[#allocation4] sm:$0xff] %vm363, 0.0
        %365 = vst.msk [vmem:[#allocation4 + $0x8] sm:$0xff] %vm363, 0.0
        %366 = vst.msk [vmem:[#allocation4 + $0x10] sm:$0xff] %vm363, 0.0
        %367 = vst.msk [vmem:[#allocation4 + $0x18] sm:$0xff] %vm363, 0.0
        %368 = vst.msk [vmem:[#allocation4 + $0x20] sm:$0xff] %vm363, 0.0
        %369 = vst.msk [vmem:[#allocation4 + $0x28] sm:$0xff] %vm363, 0.0
        %370 = vst.msk [vmem:[#allocation4 + $0x30] sm:$0xff] %vm363, 0.0
        %371 = vst.msk [vmem:[#allocation4 + $0x38] sm:$0xff] %vm363, 0.0
      $region40: #{_lambda_.58} parent=35 // pred_fallthru
        _
      %v372 = vld [vmem:[%s303] sm:$0xf]
      %v373 = vld [vmem:[%s303 + $0x4] sm:$0xf]
      %v374 = vld [vmem:[%s303 + $0x8] sm:$0xf]
      %v375 = vld [vmem:[%s303 + $0xc] sm:$0xf]
      %v376 = vld [vmem:[%s303 + $0x10] sm:$0xf]
      %v377 = vld [vmem:[%s303 + $0x14] sm:$0xf]
      %v378 = vld [vmem:[%s303 + $0x18] sm:$0xf]
      %v379 = vld [vmem:[%s303 + $0x1c] sm:$0xf]
      %v380 = vld [vmem:[%s313] sm:$0xf]
      %v381 = vld [vmem:[%s313 + $0x4] sm:$0xf]
      %v382 = vld [vmem:[%s313 + $0x8] sm:$0xf]
      %v383 = vld [vmem:[%s313 + $0xc] sm:$0xf]
      %v384 = vld [vmem:[%s313 + $0x10] sm:$0xf]
      %v385 = vld [vmem:[%s313 + $0x14] sm:$0xf]
      %v386 = vld [vmem:[%s313 + $0x18] sm:$0xf]
      %v387 = vld [vmem:[%s313 + $0x1c] sm:$0xf]
      %v390 = vunpack.c.l.b16 %v372
      %v391 = vunpack.c.l.b16 %v373
      %v392 = vpack.c.b16 %v391, %v390
      %v395 = vunpack.c.l.b16 %v380
      %v396 = vunpack.c.l.b16 %v381
      %v397 = vpack.c.b16 %v396, %v395
      %vm398 = vcmask 64512
      %v400 = vsel %vm398, %v392, 0
      %v403 = vsel %vm398, %v397, 0
      %405 = vmatprep.subr.bf16.mxu0 0
      %406 = vmatpush1.bf16.xpose.msra.mxu0 %v403
      %407 = vmatprep.subr.bf16.mxu0 0
      %408 = vmatpush1.bf16.xpose.msra.mxu0 0
      %409 = vmatprep.subr.bf16.mxu0 0
      %410 = vmatpush1.bf16.xpose.msra.mxu0 0
      %411 = vmatprep.subr.bf16.mxu0 0
      %412 = vmatpush1.bf16.xpose.msra.mxu0 0
      %413 = vmatprep.subr.bf16.mxu0 0
      %414 = vmatpush1.bf16.xpose.msra.mxu0 0
      %415 = vmatprep.subr.bf16.mxu0 0
      %416 = vmatpush1.bf16.xpose.msra.mxu0 0
      %417 = vmatprep.subr.bf16.mxu0 0
      %418 = vmatpush1.bf16.xpose.msra.mxu0 0
      %419 = vmatprep.subr.bf16.mxu0 0
      %420 = vmatpush1.bf16.xpose.msra.mxu0 0
      %421 = vmatprep.subr.bf16.mxu0 0
      %422 = vmatpush1.bf16.xpose.msra.mxu0 0
      %423 = vmatprep.subr.bf16.mxu0 0
      %424 = vmatpush1.bf16.xpose.msra.mxu0 0
      %425 = vmatprep.subr.bf16.mxu0 0
      %426 = vmatpush1.bf16.xpose.msra.mxu0 0
      %427 = vmatprep.subr.bf16.mxu0 0
      %428 = vmatpush1.bf16.xpose.msra.mxu0 0
      %429 = vmatprep.subr.bf16.mxu0 0
      %430 = vmatpush1.bf16.xpose.msra.mxu0 0
      %431 = vmatprep.subr.bf16.mxu0 0
      %432 = vmatpush1.bf16.xpose.msra.mxu0 0
      %433 = vmatprep.subr.bf16.mxu0 0
      %434 = vmatpush1.bf16.xpose.msra.mxu0 0
      %435 = vmatprep.subr.bf16.mxu0 0
      %436 = vmatpush1.bf16.xpose.msra.mxu0 0
      %437 = vmatprep.mubr.bf16.mxu0 0
      %438 = vmatmul.mubr.bf16.gmra.mrb[0].mxu0 %v400
      %v439 = vpop.f32.mrb[0].mxu0
      %v440 = vadd.f32 0.0, %v439
      %v441 = vpop.f32.mrb[0].mxu0
      %v442 = vpop.f32.mrb[0].mxu0
      %v443 = vadd.f32 0.0, %v442
      %v444 = vpop.f32.mrb[0].mxu0
      %445 = vdwg.mxu0
      %v448 = vunpack.c.l.b16 %v374
      %v449 = vunpack.c.l.b16 %v375
      %v450 = vpack.c.b16 %v449, %v448
      %v453 = vunpack.c.l.b16 %v382
      %v454 = vunpack.c.l.b16 %v383
      %v455 = vpack.c.b16 %v454, %v453
      %v457 = vsel %vm398, %v450, 0
      %v460 = vsel %vm398, %v455, 0
      %462 = vmatprep.subr.bf16.mxu0 0
      %463 = vmatpush1.bf16.xpose.msra.mxu0 %v460
      %464 = vmatprep.subr.bf16.mxu0 0
      %465 = vmatpush1.bf16.xpose.msra.mxu0 0
      %466 = vmatprep.subr.bf16.mxu0 0
      %467 = vmatpush1.bf16.xpose.msra.mxu0 0
      %468 = vmatprep.subr.bf16.mxu0 0
      %469 = vmatpush1.bf16.xpose.msra.mxu0 0
      %470 = vmatprep.subr.bf16.mxu0 0
      %471 = vmatpush1.bf16.xpose.msra.mxu0 0
      %472 = vmatprep.subr.bf16.mxu0 0
      %473 = vmatpush1.bf16.xpose.msra.mxu0 0
      %474 = vmatprep.subr.bf16.mxu0 0
      %475 = vmatpush1.bf16.xpose.msra.mxu0 0
      %476 = vmatprep.subr.bf16.mxu0 0
      %477 = vmatpush1.bf16.xpose.msra.mxu0 0
      %478 = vmatprep.subr.bf16.mxu0 0
      %479 = vmatpush1.bf16.xpose.msra.mxu0 0
      %480 = vmatprep.subr.bf16.mxu0 0
      %481 = vmatpush1.bf16.xpose.msra.mxu0 0
      %482 = vmatprep.subr.bf16.mxu0 0
      %483 = vmatpush1.bf16.xpose.msra.mxu0 0
      %484 = vmatprep.subr.bf16.mxu0 0
      %485 = vmatpush1.bf16.xpose.msra.mxu0 0
      %486 = vmatprep.subr.bf16.mxu0 0
      %487 = vmatpush1.bf16.xpose.msra.mxu0 0
      %488 = vmatprep.subr.bf16.mxu0 0
      %489 = vmatpush1.bf16.xpose.msra.mxu0 0
      %490 = vmatprep.subr.bf16.mxu0 0
      %491 = vmatpush1.bf16.xpose.msra.mxu0 0
      %492 = vmatprep.subr.bf16.mxu0 0
      %493 = vmatpush1.bf16.xpose.msra.mxu0 0
      %494 = vmatprep.mubr.bf16.mxu0 0
      %495 = vmatmul.mubr.bf16.gmra.mrb[0].mxu0 %v457
      %v496 = vpop.f32.mrb[0].mxu0
      %v497 = vadd.f32 0.0, %v496
      %v498 = vpop.f32.mrb[0].mxu0
      %v499 = vpop.f32.mrb[0].mxu0
      %v500 = vadd.f32 0.0, %v499
      %v501 = vpop.f32.mrb[0].mxu0
      %502 = vdwg.mxu0
      %v505 = vunpack.c.l.b16 %v376
      %v506 = vunpack.c.l.b16 %v377
      %v507 = vpack.c.b16 %v506, %v505
      %v510 = vunpack.c.l.b16 %v384
      %v511 = vunpack.c.l.b16 %v385
      %v512 = vpack.c.b16 %v511, %v510
      %v514 = vsel %vm398, %v507, 0
      %v517 = vsel %vm398, %v512, 0
      %519 = vmatprep.subr.bf16.mxu0 0
      %520 = vmatpush1.bf16.xpose.msra.mxu0 %v517
      %521 = vmatprep.subr.bf16.mxu0 0
      %522 = vmatpush1.bf16.xpose.msra.mxu0 0
      %523 = vmatprep.subr.bf16.mxu0 0
      %524 = vmatpush1.bf16.xpose.msra.mxu0 0
      %525 = vmatprep.subr.bf16.mxu0 0
      %526 = vmatpush1.bf16.xpose.msra.mxu0 0
      %527 = vmatprep.subr.bf16.mxu0 0
      %528 = vmatpush1.bf16.xpose.msra.mxu0 0
      %529 = vmatprep.subr.bf16.mxu0 0
      %530 = vmatpush1.bf16.xpose.msra.mxu0 0
      %531 = vmatprep.subr.bf16.mxu0 0
      %532 = vmatpush1.bf16.xpose.msra.mxu0 0
      %533 = vmatprep.subr.bf16.mxu0 0
      %534 = vmatpush1.bf16.xpose.msra.mxu0 0
      %535 = vmatprep.subr.bf16.mxu0 0
      %536 = vmatpush1.bf16.xpose.msra.mxu0 0
      %537 = vmatprep.subr.bf16.mxu0 0
      %538 = vmatpush1.bf16.xpose.msra.mxu0 0
      %539 = vmatprep.subr.bf16.mxu0 0
      %540 = vmatpush1.bf16.xpose.msra.mxu0 0
      %541 = vmatprep.subr.bf16.mxu0 0
      %542 = vmatpush1.bf16.xpose.msra.mxu0 0
      %543 = vmatprep.subr.bf16.mxu0 0
      %544 = vmatpush1.bf16.xpose.msra.mxu0 0
      %545 = vmatprep.subr.bf16.mxu0 0
      %546 = vmatpush1.bf16.xpose.msra.mxu0 0
      %547 = vmatprep.subr.bf16.mxu0 0
      %548 = vmatpush1.bf16.xpose.msra.mxu0 0
      %549 = vmatprep.subr.bf16.mxu0 0
      %550 = vmatpush1.bf16.xpose.msra.mxu0 0
      %551 = vmatprep.mubr.bf16.mxu0 0
      %552 = vmatmul.mubr.bf16.gmra.mrb[0].mxu0 %v514
      %v553 = vpop.f32.mrb[0].mxu0
      %v554 = vadd.f32 0.0, %v553
      %v555 = vpop.f32.mrb[0].mxu0
      %v556 = vpop.f32.mrb[0].mxu0
      %v557 = vadd.f32 0.0, %v556
      %v558 = vpop.f32.mrb[0].mxu0
      %559 = vdwg.mxu0
      %v562 = vunpack.c.l.b16 %v378
      %v563 = vunpack.c.l.b16 %v379
      %v564 = vpack.c.b16 %v563, %v562
      %v567 = vunpack.c.l.b16 %v386
      %v568 = vunpack.c.l.b16 %v387
      %v569 = vpack.c.b16 %v568, %v567
      %v571 = vsel %vm398, %v564, 0
      %v574 = vsel %vm398, %v569, 0
      %576 = vmatprep.subr.bf16.mxu0 0
      %577 = vmatpush1.bf16.xpose.msra.mxu0 %v574
      %578 = vmatprep.subr.bf16.mxu0 0
      %579 = vmatpush1.bf16.xpose.msra.mxu0 0
      %580 = vmatprep.subr.bf16.mxu0 0
      %581 = vmatpush1.bf16.xpose.msra.mxu0 0
      %582 = vmatprep.subr.bf16.mxu0 0
      %583 = vmatpush1.bf16.xpose.msra.mxu0 0
      %584 = vmatprep.subr.bf16.mxu0 0
      %585 = vmatpush1.bf16.xpose.msra.mxu0 0
      %586 = vmatprep.subr.bf16.mxu0 0
      %587 = vmatpush1.bf16.xpose.msra.mxu0 0
      %588 = vmatprep.subr.bf16.mxu0 0
      %589 = vmatpush1.bf16.xpose.msra.mxu0 0
      %590 = vmatprep.subr.bf16.mxu0 0
      %591 = vmatpush1.bf16.xpose.msra.mxu0 0
      %592 = vmatprep.subr.bf16.mxu0 0
      %593 = vmatpush1.bf16.xpose.msra.mxu0 0
      %594 = vmatprep.subr.bf16.mxu0 0
      %595 = vmatpush1.bf16.xpose.msra.mxu0 0
      %596 = vmatprep.subr.bf16.mxu0 0
      %597 = vmatpush1.bf16.xpose.msra.mxu0 0
      %598 = vmatprep.subr.bf16.mxu0 0
      %599 = vmatpush1.bf16.xpose.msra.mxu0 0
      %600 = vmatprep.subr.bf16.mxu0 0
      %601 = vmatpush1.bf16.xpose.msra.mxu0 0
      %602 = vmatprep.subr.bf16.mxu0 0
      %603 = vmatpush1.bf16.xpose.msra.mxu0 0
      %604 = vmatprep.subr.bf16.mxu0 0
      %605 = vmatpush1.bf16.xpose.msra.mxu0 0
      %606 = vmatprep.subr.bf16.mxu0 0
      %607 = vmatpush1.bf16.xpose.msra.mxu0 0
      %608 = vmatprep.mubr.bf16.mxu0 0
      %609 = vmatmul.mubr.bf16.gmra.mrb[0].mxu0 %v571
      %v610 = vpop.f32.mrb[0].mxu0
      %v611 = vadd.f32 0.0, %v610
      %v612 = vpop.f32.mrb[0].mxu0
      %v613 = vpop.f32.mrb[0].mxu0
      %v614 = vadd.f32 0.0, %v613
      %v615 = vpop.f32.mrb[0].mxu0
      %616 = vdwg.mxu0
      %v617 = vld [vmem:[%s330] sm:$0x1]
      %vm618 = vcmp.gt.f32.partialorder %v617, 0.5
      %v619 = vsel %vm618, 1, 0
      %v620 = vlaneseq
      %v621 = vshrl.u32 %v620, 7
      %v622 = vsub.s32 0, %v621
      %v623 = vrot.slane %v619, %v622
      %vm624 = vcmp.eq.s32.totalorder %v623, 1
      %v625 = vlaneseq
      %v626 = vshrl.u32 %v625, 7
      %v627 = vadd.s32 %v626, 8
      %s628 = smul.u32 %s21, 16
      %v629 = vstv %s628
      %v630 = vadd.s32 %v626, %v629
      %v631 = vadd.s32 %v627, %v629
      %v632 = vlaneseq
      %v633 = vand.u32 %v632, 127
      %s634 = smul.u32 %s22, 16
      %v635 = vstv %s634
      %v636 = vadd.s32 %v633, %v635
      %vm637 = vcmp.ge.s32.totalorder %v630, %v636
      %vm638 = vcmp.ge.s32.totalorder %v631, %v636
      %vm639 = vmand %vm624, %vm637
      %vm640 = vmand %vm624, %vm638
      %v641 = vsel %vm639, 1, 0
      %v642 = vsel %vm640, 1, 0
      %vm643 = vcmp.eq.s32.totalorder %v641, 1
      %vm644 = vcmp.eq.s32.totalorder %v642, 1
      %v645 = vsel %vm643, %v440, -1e+09
      %v646 = vsel %vm644, %v443, -1e+09
      %v647 = vsel %vm643, %v497, -1e+09
      %v648 = vsel %vm644, %v500, -1e+09
      %v649 = vsel %vm643, %v554, -1e+09
      %v650 = vsel %vm644, %v557, -1e+09
      %v651 = vsel %vm643, %v611, -1e+09
      %v652 = vsel %vm644, %v614, -1e+09
      %v653 = vld [vmem:[#allocation2] sm:$0xff]
      %v654 = vld [vmem:[#allocation2 + $0x8] sm:$0xff]
      %v655 = vld [vmem:[#allocation2 + $0x10] sm:$0xff]
      %v656 = vld [vmem:[#allocation2 + $0x18] sm:$0xff]
      %v657 = vld [vmem:[#allocation2 + $0x20] sm:$0xff]
      %v658 = vld [vmem:[#allocation2 + $0x28] sm:$0xff]
      %v659 = vld [vmem:[#allocation2 + $0x30] sm:$0xff]
      %v660 = vld [vmem:[#allocation2 + $0x38] sm:$0xff]
      %vm661 = vcmask 130048
      %v662 = vsel %vm661, %v645, -inf
      %663 = vmax.xlane.f32.xlu0 %v662
      %v664 = vpop.xlane.xlu0 %663
      %v665 = vsel %vm661, %v646, -inf
      %666 = vmax.xlane.f32.xlu0 %v665
      %v667 = vpop.xlane.xlu0 %666
      %v668 = vsel %vm661, %v647, -inf
      %669 = vmax.xlane.f32.xlu0 %v668
      %v670 = vpop.xlane.xlu0 %669
      %v671 = vsel %vm661, %v648, -inf
      %672 = vmax.xlane.f32.xlu0 %v671
      %v673 = vpop.xlane.xlu0 %672
      %v674 = vsel %vm661, %v649, -inf
      %675 = vmax.xlane.f32.xlu0 %v674
      %v676 = vpop.xlane.xlu0 %675
      %v677 = vsel %vm661, %v650, -inf
      %678 = vmax.xlane.f32.xlu0 %v677
      %v679 = vpop.xlane.xlu0 %678
      %v680 = vsel %vm661, %v651, -inf
      %681 = vmax.xlane.f32.xlu0 %v680
      %v682 = vpop.xlane.xlu0 %681
      %v683 = vsel %vm661, %v652, -inf
      %684 = vmax.xlane.f32.xlu0 %v683
      %v685 = vpop.xlane.xlu0 %684
      %v686 = vmax.f32 %v653, %v664
      %v687 = vmax.f32 %v654, %v667
      %v688 = vmax.f32 %v655, %v670
      %v689 = vmax.f32 %v656, %v673
      %v690 = vmax.f32 %v657, %v676
      %v691 = vmax.f32 %v658, %v679
      %v692 = vmax.f32 %v659, %v682
      %v693 = vmax.f32 %v660, %v685
      %v694 = vsub.f32 %v653, %v686
      %v695 = vsub.f32 %v654, %v687
      %v696 = vsub.f32 %v655, %v688
      %v697 = vsub.f32 %v656, %v689
      %v698 = vsub.f32 %v657, %v690
      %v699 = vsub.f32 %v658, %v691
      %v700 = vsub.f32 %v659, %v692
      %v701 = vsub.f32 %v660, %v693
      %v702 = vmul.f32 %v694, 1.442695
      %v703 = vpow.pop %v702
      %v704 = vmul.f32 %v695, 1.442695
      %v705 = vpow.pop %v704
      %v706 = vmul.f32 %v696, 1.442695
      %v707 = vpow.pop %v706
      %v708 = vmul.f32 %v697, 1.442695
      %v709 = vpow.pop %v708
      %v710 = vmul.f32 %v698, 1.442695
      %v711 = vpow.pop %v710
      %v712 = vmul.f32 %v699, 1.442695
      %v713 = vpow.pop %v712
      %v714 = vmul.f32 %v700, 1.442695
      %v715 = vpow.pop %v714
      %v716 = vmul.f32 %v701, 1.442695
      %v717 = vpow.pop %v716
      %719 = vset.pattern.permute.xlu0 0
      %720 = vperm.xlu0 %719, %v686
      %v721 = vpop.permute.xlu0 %720
      %724 = vset.pattern.permute.xlu0 0
      %725 = vperm.xlu0 %724, %v687
      %v726 = vpop.permute.xlu0 %725
      %729 = vset.pattern.permute.xlu0 0
      %730 = vperm.xlu0 %729, %v688
      %v731 = vpop.permute.xlu0 %730
      %734 = vset.pattern.permute.xlu0 0
      %735 = vperm.xlu0 %734, %v689
      %v736 = vpop.permute.xlu0 %735
      %739 = vset.pattern.permute.xlu0 0
      %740 = vperm.xlu0 %739, %v690
      %v741 = vpop.permute.xlu0 %740
      %744 = vset.pattern.permute.xlu0 0
      %745 = vperm.xlu0 %744, %v691
      %v746 = vpop.permute.xlu0 %745
      %749 = vset.pattern.permute.xlu0 0
      %750 = vperm.xlu0 %749, %v692
      %v751 = vpop.permute.xlu0 %750
      %754 = vset.pattern.permute.xlu0 0
      %755 = vperm.xlu0 %754, %v693
      %v756 = vpop.permute.xlu0 %755
      %v758 = vsub.f32 %v645, %v721
      %v759 = vsub.f32 %v646, %v726
      %v760 = vsub.f32 %v647, %v731
      %v761 = vsub.f32 %v648, %v736
      %v762 = vsub.f32 %v649, %v741
      %v763 = vsub.f32 %v650, %v746
      %v764 = vsub.f32 %v651, %v751
      %v765 = vsub.f32 %v652, %v756
      %v766 = vmul.f32 %v758, 1.442695
      %v767 = vpow.pop %v766
      %v768 = vmul.f32 %v759, 1.442695
      %v769 = vpow.pop %v768
      %v770 = vmul.f32 %v760, 1.442695
      %v771 = vpow.pop %v770
      %v772 = vmul.f32 %v761, 1.442695
      %v773 = vpow.pop %v772
      %v774 = vmul.f32 %v762, 1.442695
      %v775 = vpow.pop %v774
      %v776 = vmul.f32 %v763, 1.442695
      %v777 = vpow.pop %v776
      %v778 = vmul.f32 %v764, 1.442695
      %v779 = vpow.pop %v778
      %v780 = vmul.f32 %v765, 1.442695
      %v781 = vpow.pop %v780
      %v782 = vld [vmem:[#allocation3] sm:$0xff]
      %v783 = vld [vmem:[#allocation3 + $0x8] sm:$0xff]
      %v784 = vld [vmem:[#allocation3 + $0x10] sm:$0xff]
      %v785 = vld [vmem:[#allocation3 + $0x18] sm:$0xff]
      %v786 = vld [vmem:[#allocation3 + $0x20] sm:$0xff]
      %v787 = vld [vmem:[#allocation3 + $0x28] sm:$0xff]
      %v788 = vld [vmem:[#allocation3 + $0x30] sm:$0xff]
      %v789 = vld [vmem:[#allocation3 + $0x38] sm:$0xff]
      %v790 = vmul.f32 %v703, %v782
      %v791 = vmul.f32 %v705, %v783
      %v792 = vmul.f32 %v707, %v784
      %v793 = vmul.f32 %v709, %v785
      %v794 = vmul.f32 %v711, %v786
      %v795 = vmul.f32 %v713, %v787
      %v796 = vmul.f32 %v715, %v788
      %v797 = vmul.f32 %v717, %v789
      %v798 = vsel %vm661, %v767, 0.0
      %799 = vadd.xlane.f32.xlu0 %v798
      %v800 = vpop.xlane.xlu0 %799
      %v801 = vsel %vm661, %v769, 0.0
      %802 = vadd.xlane.f32.xlu0 %v801
      %v803 = vpop.xlane.xlu0 %802
      %v804 = vsel %vm661, %v771, 0.0
      %805 = vadd.xlane.f32.xlu0 %v804
      %v806 = vpop.xlane.xlu0 %805
      %v807 = vsel %vm661, %v773, 0.0
      %808 = vadd.xlane.f32.xlu0 %v807
      %v809 = vpop.xlane.xlu0 %808
      %v810 = vsel %vm661, %v775, 0.0
      %811 = vadd.xlane.f32.xlu0 %v810
      %v812 = vpop.xlane.xlu0 %811
      %v813 = vsel %vm661, %v777, 0.0
      %814 = vadd.xlane.f32.xlu0 %v813
      %v815 = vpop.xlane.xlu0 %814
      %v816 = vsel %vm661, %v779, 0.0
      %817 = vadd.xlane.f32.xlu0 %v816
      %v818 = vpop.xlane.xlu0 %817
      %v819 = vsel %vm661, %v781, 0.0
      %820 = vadd.xlane.f32.xlu0 %v819
      %v821 = vpop.xlane.xlu0 %820
      %v822 = vadd.f32 %v790, %v800
      %v823 = vadd.f32 %v791, %v803
      %v824 = vadd.f32 %v792, %v806
      %v825 = vadd.f32 %v793, %v809
      %v826 = vadd.f32 %v794, %v812
      %v827 = vadd.f32 %v795, %v815
      %v828 = vadd.f32 %v796, %v818
      %v829 = vadd.f32 %v797, %v821
      %vm830 = vcmask 7168
      %831 = vst.msk [vmem:[#allocation3] sm:$0xff] %vm830, %v822
      %832 = vst.msk [vmem:[#allocation3 + $0x8] sm:$0xff] %vm830, %v823
      %833 = vst.msk [vmem:[#allocation3 + $0x10] sm:$0xff] %vm830, %v824
      %834 = vst.msk [vmem:[#allocation3 + $0x18] sm:$0xff] %vm830, %v825
      %835 = vst.msk [vmem:[#allocation3 + $0x20] sm:$0xff] %vm830, %v826
      %836 = vst.msk [vmem:[#allocation3 + $0x28] sm:$0xff] %vm830, %v827
      %837 = vst.msk [vmem:[#allocation3 + $0x30] sm:$0xff] %vm830, %v828
      %838 = vst.msk [vmem:[#allocation3 + $0x38] sm:$0xff] %vm830, %v829
      %v839 = vld [vmem:[#allocation4] sm:$0xff]
      %v840 = vld [vmem:[#allocation4 + $0x8] sm:$0xff]
      %v841 = vld [vmem:[#allocation4 + $0x10] sm:$0xff]
      %v842 = vld [vmem:[#allocation4 + $0x18] sm:$0xff]
      %v843 = vld [vmem:[#allocation4 + $0x20] sm:$0xff]
      %v844 = vld [vmem:[#allocation4 + $0x28] sm:$0xff]
      %v845 = vld [vmem:[#allocation4 + $0x30] sm:$0xff]
      %v846 = vld [vmem:[#allocation4 + $0x38] sm:$0xff]
      %848 = vset.pattern.permute.xlu0 0
      %849 = vperm.xlu0 %848, %v703
      %v850 = vpop.permute.xlu0 %849
      %853 = vset.pattern.permute.xlu0 0
      %854 = vperm.xlu0 %853, %v705
      %v855 = vpop.permute.xlu0 %854
      %858 = vset.pattern.permute.xlu0 0
      %859 = vperm.xlu0 %858, %v707
      %v860 = vpop.permute.xlu0 %859
      %863 = vset.pattern.permute.xlu0 0
      %864 = vperm.xlu0 %863, %v709
      %v865 = vpop.permute.xlu0 %864
      %868 = vset.pattern.permute.xlu0 0
      %869 = vperm.xlu0 %868, %v711
      %v870 = vpop.permute.xlu0 %869
      %873 = vset.pattern.permute.xlu0 0
      %874 = vperm.xlu0 %873, %v713
      %v875 = vpop.permute.xlu0 %874
      %878 = vset.pattern.permute.xlu0 0
      %879 = vperm.xlu0 %878, %v715
      %v880 = vpop.permute.xlu0 %879
      %883 = vset.pattern.permute.xlu0 0
      %884 = vperm.xlu0 %883, %v717
      %v885 = vpop.permute.xlu0 %884
      %v887 = vmul.f32 %v850, %v839
      %v888 = vmul.f32 %v855, %v840
      %v889 = vmul.f32 %v860, %v841
      %v890 = vmul.f32 %v865, %v842
      %v891 = vmul.f32 %v870, %v843
      %v892 = vmul.f32 %v875, %v844
      %v893 = vmul.f32 %v880, %v845
      %v894 = vmul.f32 %v885, %v846
      %v895 = vpack.c.bf16 %v769, %v767
      %v896 = vpack.c.bf16 %v773, %v771
      %v897 = vpack.c.bf16 %v777, %v775
      %v898 = vpack.c.bf16 %v781, %v779
      %v899 = vld [vmem:[%s323] sm:$0xf]
      %v900 = vld [vmem:[%s323 + $0x4] sm:$0xf]
      %v901 = vld [vmem:[%s323 + $0x8] sm:$0xf]
      %v902 = vld [vmem:[%s323 + $0xc] sm:$0xf]
      %v903 = vld [vmem:[%s323 + $0x10] sm:$0xf]
      %v904 = vld [vmem:[%s323 + $0x14] sm:$0xf]
      %v905 = vld [vmem:[%s323 + $0x18] sm:$0xf]
      %v906 = vld [vmem:[%s323 + $0x1c] sm:$0xf]
      %v909 = vunpack.c.l.b16 %v899
      %v910 = vunpack.c.l.b16 %v900
      %v911 = vpack.c.b16 %v910, %v909
      %v914 = vsel %vm661, %v895, 0
      %916 = vmatprep.subr.bf16.mxu0 0
      %917 = vmatpush1.bf16.msra.mxu0 %v911
      %918 = vmatprep.subr.bf16.mxu0 0
      %919 = vmatpush1.bf16.msra.mxu0 0
      %920 = vmatprep.subr.bf16.mxu0 0
      %921 = vmatpush1.bf16.msra.mxu0 0
      %922 = vmatprep.subr.bf16.mxu0 0
      %923 = vmatpush1.bf16.msra.mxu0 0
      %924 = vmatprep.subr.bf16.mxu0 0
      %925 = vmatpush1.bf16.msra.mxu0 0
      %926 = vmatprep.subr.bf16.mxu0 0
      %927 = vmatpush1.bf16.msra.mxu0 0
      %928 = vmatprep.subr.bf16.mxu0 0
      %929 = vmatpush1.bf16.msra.mxu0 0
      %930 = vmatprep.subr.bf16.mxu0 0
      %931 = vmatpush1.bf16.msra.mxu0 0
      %932 = vmatprep.subr.bf16.mxu0 0
      %933 = vmatpush1.bf16.msra.mxu0 0
      %934 = vmatprep.subr.bf16.mxu0 0
      %935 = vmatpush1.bf16.msra.mxu0 0
      %936 = vmatprep.subr.bf16.mxu0 0
      %937 = vmatpush1.bf16.msra.mxu0 0
      %938 = vmatprep.subr.bf16.mxu0 0
      %939 = vmatpush1.bf16.msra.mxu0 0
      %940 = vmatprep.subr.bf16.mxu0 0
      %941 = vmatpush1.bf16.msra.mxu0 0
      %942 = vmatprep.subr.bf16.mxu0 0
      %943 = vmatpush1.bf16.msra.mxu0 0
      %944 = vmatprep.subr.bf16.mxu0 0
      %945 = vmatpush1.bf16.msra.mxu0 0
      %946 = vmatprep.subr.bf16.mxu0 0
      %947 = vmatpush1.bf16.msra.mxu0 0
      %948 = vmatprep.mubr.bf16.mxu0 0
      %949 = vmatmul.mubr.bf16.gmra.mrb[0].mxu0 %v914
      %v950 = vpop.f32.mrb[0].mxu0
      %v951 = vadd.f32 0.0, %v950
      %v952 = vpop.f32.mrb[0].mxu0
      %v953 = vpop.f32.mrb[0].mxu0
      %v954 = vadd.f32 0.0, %v953
      %v955 = vpop.f32.mrb[0].mxu0
      %956 = vdwg.mxu0
      %v959 = vunpack.c.l.b16 %v901
      %v960 = vunpack.c.l.b16 %v902
      %v961 = vpack.c.b16 %v960, %v959
      %v964 = vsel %vm661, %v896, 0
      %966 = vmatprep.subr.bf16.mxu0 0
      %967 = vmatpush1.bf16.msra.mxu0 %v961
      %968 = vmatprep.subr.bf16.mxu0 0
      %969 = vmatpush1.bf16.msra.mxu0 0
      %970 = vmatprep.subr.bf16.mxu0 0
      %971 = vmatpush1.bf16.msra.mxu0 0
      %972 = vmatprep.subr.bf16.mxu0 0
      %973 = vmatpush1.bf16.msra.mxu0 0
      %974 = vmatprep.subr.bf16.mxu0 0
      %975 = vmatpush1.bf16.msra.mxu0 0
      %976 = vmatprep.subr.bf16.mxu0 0
      %977 = vmatpush1.bf16.msra.mxu0 0
      %978 = vmatprep.subr.bf16.mxu0 0
      %979 = vmatpush1.bf16.msra.mxu0 0
      %980 = vmatprep.subr.bf16.mxu0 0
      %981 = vmatpush1.bf16.msra.mxu0 0
      %982 = vmatprep.subr.bf16.mxu0 0
      %983 = vmatpush1.bf16.msra.mxu0 0
      %984 = vmatprep.subr.bf16.mxu0 0
      %985 = vmatpush1.bf16.msra.mxu0 0
      %986 = vmatprep.subr.bf16.mxu0 0
      %987 = vmatpush1.bf16.msra.mxu0 0
      %988 = vmatprep.subr.bf16.mxu0 0
      %989 = vmatpush1.bf16.msra.mxu0 0
      %990 = vmatprep.subr.bf16.mxu0 0
      %991 = vmatpush1.bf16.msra.mxu0 0
      %992 = vmatprep.subr.bf16.mxu0 0
      %993 = vmatpush1.bf16.msra.mxu0 0
      %994 = vmatprep.subr.bf16.mxu0 0
      %995 = vmatpush1.bf16.msra.mxu0 0
      %996 = vmatprep.subr.bf16.mxu0 0
      %997 = vmatpush1.bf16.msra.mxu0 0
      %998 = vmatprep.mubr.bf16.mxu0 0
      %999 = vmatmul.mubr.bf16.gmra.mrb[0].mxu0 %v964
      %v1000 = vpop.f32.mrb[0].mxu0
      %v1001 = vadd.f32 0.0, %v1000
      %v1002 = vpop.f32.mrb[0].mxu0
      %v1003 = vpop.f32.mrb[0].mxu0
      %v1004 = vadd.f32 0.0, %v1003
      %v1005 = vpop.f32.mrb[0].mxu0
      %1006 = vdwg.mxu0
      %v1009 = vunpack.c.l.b16 %v903
      %v1010 = vunpack.c.l.b16 %v904
      %v1011 = vpack.c.b16 %v1010, %v1009
      %v1014 = vsel %vm661, %v897, 0
      %1016 = vmatprep.subr.bf16.mxu0 0
      %1017 = vmatpush1.bf16.msra.mxu0 %v1011
      %1018 = vmatprep.subr.bf16.mxu0 0
      %1019 = vmatpush1.bf16.msra.mxu0 0
      %1020 = vmatprep.subr.bf16.mxu0 0
      %1021 = vmatpush1.bf16.msra.mxu0 0
      %1022 = vmatprep.subr.bf16.mxu0 0
      %1023 = vmatpush1.bf16.msra.mxu0 0
      %1024 = vmatprep.subr.bf16.mxu0 0
      %1025 = vmatpush1.bf16.msra.mxu0 0
      %1026 = vmatprep.subr.bf16.mxu0 0
      %1027 = vmatpush1.bf16.msra.mxu0 0
      %1028 = vmatprep.subr.bf16.mxu0 0
      %1029 = vmatpush1.bf16.msra.mxu0 0
      %1030 = vmatprep.subr.bf16.mxu0 0
      %1031 = vmatpush1.bf16.msra.mxu0 0
      %1032 = vmatprep.subr.bf16.mxu0 0
      %1033 = vmatpush1.bf16.msra.mxu0 0
      %1034 = vmatprep.subr.bf16.mxu0 0
      %1035 = vmatpush1.bf16.msra.mxu0 0
      %1036 = vmatprep.subr.bf16.mxu0 0
      %1037 = vmatpush1.bf16.msra.mxu0 0
      %1038 = vmatprep.subr.bf16.mxu0 0
      %1039 = vmatpush1.bf16.msra.mxu0 0
      %1040 = vmatprep.subr.bf16.mxu0 0
      %1041 = vmatpush1.bf16.msra.mxu0 0
      %1042 = vmatprep.subr.bf16.mxu0 0
      %1043 = vmatpush1.bf16.msra.mxu0 0
      %1044 = vmatprep.subr.bf16.mxu0 0
      %1045 = vmatpush1.bf16.msra.mxu0 0
      %1046 = vmatprep.subr.bf16.mxu0 0
      %1047 = vmatpush1.bf16.msra.mxu0 0
      %1048 = vmatprep.mubr.bf16.mxu0 0
      %1049 = vmatmul.mubr.bf16.gmra.mrb[0].mxu0 %v1014
      %v1050 = vpop.f32.mrb[0].mxu0
      %v1051 = vadd.f32 0.0, %v1050
      %v1052 = vpop.f32.mrb[0].mxu0
      %v1053 = vpop.f32.mrb[0].mxu0
      %v1054 = vadd.f32 0.0, %v1053
      %v1055 = vpop.f32.mrb[0].mxu0
      %1056 = vdwg.mxu0
      %v1059 = vunpack.c.l.b16 %v905
      %v1060 = vunpack.c.l.b16 %v906
      %v1061 = vpack.c.b16 %v1060, %v1059
      %v1064 = vsel %vm661, %v898, 0
      %1066 = vmatprep.subr.bf16.mxu0 0
      %1067 = vmatpush1.bf16.msra.mxu0 %v1061
      %1068 = vmatprep.subr.bf16.mxu0 0
      %1069 = vmatpush1.bf16.msra.mxu0 0
      %1070 = vmatprep.subr.bf16.mxu0 0
      %1071 = vmatpush1.bf16.msra.mxu0 0
      %1072 = vmatprep.subr.bf16.mxu0 0
      %1073 = vmatpush1.bf16.msra.mxu0 0
      %1074 = vmatprep.subr.bf16.mxu0 0
      %1075 = vmatpush1.bf16.msra.mxu0 0
      %1076 = vmatprep.subr.bf16.mxu0 0
      %1077 = vmatpush1.bf16.msra.mxu0 0
      %1078 = vmatprep.subr.bf16.mxu0 0
      %1079 = vmatpush1.bf16.msra.mxu0 0
      %1080 = vmatprep.subr.bf16.mxu0 0
      %1081 = vmatpush1.bf16.msra.mxu0 0
      %1082 = vmatprep.subr.bf16.mxu0 0
      %1083 = vmatpush1.bf16.msra.mxu0 0
      %1084 = vmatprep.subr.bf16.mxu0 0
      %1085 = vmatpush1.bf16.msra.mxu0 0
      %1086 = vmatprep.subr.bf16.mxu0 0
      %1087 = vmatpush1.bf16.msra.mxu0 0
      %1088 = vmatprep.subr.bf16.mxu0 0
      %1089 = vmatpush1.bf16.msra.mxu0 0
      %1090 = vmatprep.subr.bf16.mxu0 0
      %1091 = vmatpush1.bf16.msra.mxu0 0
      %1092 = vmatprep.subr.bf16.mxu0 0
      %1093 = vmatpush1.bf16.msra.mxu0 0
      %1094 = vmatprep.subr.bf16.mxu0 0
      %1095 = vmatpush1.bf16.msra.mxu0 0
      %1096 = vmatprep.subr.bf16.mxu0 0
      %1097 = vmatpush1.bf16.msra.mxu0 0
      %1098 = vmatprep.mubr.bf16.mxu0 0
      %1099 = vmatmul.mubr.bf16.gmra.mrb[0].mxu0 %v1064
      %v1100 = vpop.f32.mrb[0].mxu0
      %v1101 = vadd.f32 0.0, %v1100
      %v1102 = vpop.f32.mrb[0].mxu0
      %v1103 = vpop.f32.mrb[0].mxu0
      %v1104 = vadd.f32 0.0, %v1103
      %v1105 = vpop.f32.mrb[0].mxu0
      %1106 = vdwg.mxu0
      %v1107 = vadd.f32 %v887, %v951
      %v1108 = vadd.f32 %v888, %v954
      %v1109 = vadd.f32 %v889, %v1001
      %v1110 = vadd.f32 %v890, %v1004
      %v1111 = vadd.f32 %v891, %v1051
      %v1112 = vadd.f32 %v892, %v1054
      %v1113 = vadd.f32 %v893, %v1101
      %v1114 = vadd.f32 %v894, %v1104
      %1115 = vst.msk [vmem:[#allocation4] sm:$0xff] %vm398, %v1107
      %1116 = vst.msk [vmem:[#allocation4 + $0x8] sm:$0xff] %vm398, %v1108
      %1117 = vst.msk [vmem:[#allocation4 + $0x10] sm:$0xff] %vm398, %v1109
      %1118 = vst.msk [vmem:[#allocation4 + $0x18] sm:$0xff] %vm398, %v1110
      %1119 = vst.msk [vmem:[#allocation4 + $0x20] sm:$0xff] %vm398, %v1111
      %1120 = vst.msk [vmem:[#allocation4 + $0x28] sm:$0xff] %vm398, %v1112
      %1121 = vst.msk [vmem:[#allocation4 + $0x30] sm:$0xff] %vm398, %v1113
      %1122 = vst.msk [vmem:[#allocation4 + $0x38] sm:$0xff] %vm398, %v1114
      %1123 = vst.msk [vmem:[#allocation2] sm:$0xff] %vm830, %v686
      %1124 = vst.msk [vmem:[#allocation2 + $0x8] sm:$0xff] %vm830, %v687
      %1125 = vst.msk [vmem:[#allocation2 + $0x10] sm:$0xff] %vm830, %v688
      %1126 = vst.msk [vmem:[#allocation2 + $0x18] sm:$0xff] %vm830, %v689
      %1127 = vst.msk [vmem:[#allocation2 + $0x20] sm:$0xff] %vm830, %v690
      %1128 = vst.msk [vmem:[#allocation2 + $0x28] sm:$0xff] %vm830, %v691
      %1129 = vst.msk [vmem:[#allocation2 + $0x30] sm:$0xff] %vm830, %v692
      %1130 = vst.msk [vmem:[#allocation2 + $0x38] sm:$0xff] %vm830, %v693
      // Predicated region
      $region41: #{_lambda_.58} parent=35 // pred_check
        %p1131 = pneg %p342
      $region42: #{_lambda_.58} parent=35 // pred_check_branch
        %1133 = sbr.rel (%p1131) target = $region44
      $region43: #{_lambda_.58} parent=35 // pred_region
        %v1134 = vld [vmem:[#allocation4] sm:$0xff]
        %v1135 = vld [vmem:[#allocation4 + $0x8] sm:$0xff]
        %v1136 = vld [vmem:[#allocation4 + $0x10] sm:$0xff]
        %v1137 = vld [vmem:[#allocation4 + $0x18] sm:$0xff]
        %v1138 = vld [vmem:[#allocation4 + $0x20] sm:$0xff]
        %v1139 = vld [vmem:[#allocation4 + $0x28] sm:$0xff]
        %v1140 = vld [vmem:[#allocation4 + $0x30] sm:$0xff]
        %v1141 = vld [vmem:[#allocation4 + $0x38] sm:$0xff]
        %v1142 = vld [vmem:[#allocation3] sm:$0xff]
        %v1143 = vld [vmem:[#allocation3 + $0x8] sm:$0xff]
        %v1144 = vld [vmem:[#allocation3 + $0x10] sm:$0xff]
        %v1145 = vld [vmem:[#allocation3 + $0x18] sm:$0xff]
        %v1146 = vld [vmem:[#allocation3 + $0x20] sm:$0xff]
        %v1147 = vld [vmem:[#allocation3 + $0x28] sm:$0xff]
        %v1148 = vld [vmem:[#allocation3 + $0x30] sm:$0xff]
        %v1149 = vld [vmem:[#allocation3 + $0x38] sm:$0xff]
        %v1150 = vrcp.pop %v1142
        %v1151 = vrcp.pop %v1143
        %v1152 = vrcp.pop %v1144
        %v1153 = vrcp.pop %v1145
        %v1154 = vrcp.pop %v1146
        %v1155 = vrcp.pop %v1147
        %v1156 = vrcp.pop %v1148
        %v1157 = vrcp.pop %v1149
        %1159 = vset.pattern.permute.xlu0 0
        %1160 = vperm.xlu0 %1159, %v1150
        %v1161 = vpop.permute.xlu0 %1160
        %1164 = vset.pattern.permute.xlu0 0
        %1165 = vperm.xlu0 %1164, %v1151
        %v1166 = vpop.permute.xlu0 %1165
        %1169 = vset.pattern.permute.xlu0 0
        %1170 = vperm.xlu0 %1169, %v1152
        %v1171 = vpop.permute.xlu0 %1170
        %1174 = vset.pattern.permute.xlu0 0
        %1175 = vperm.xlu0 %1174, %v1153
        %v1176 = vpop.permute.xlu0 %1175
        %1179 = vset.pattern.permute.xlu0 0
        %1180 = vperm.xlu0 %1179, %v1154
        %v1181 = vpop.permute.xlu0 %1180
        %1184 = vset.pattern.permute.xlu0 0
        %1185 = vperm.xlu0 %1184, %v1155
        %v1186 = vpop.permute.xlu0 %1185
        %1189 = vset.pattern.permute.xlu0 0
        %1190 = vperm.xlu0 %1189, %v1156
        %v1191 = vpop.permute.xlu0 %1190
        %1194 = vset.pattern.permute.xlu0 0
        %1195 = vperm.xlu0 %1194, %v1157
        %v1196 = vpop.permute.xlu0 %1195
        %v1198 = vmul.f32 %v1134, %v1161
        %v1199 = vmul.f32 %v1135, %v1166
        %v1200 = vmul.f32 %v1136, %v1171
        %v1201 = vmul.f32 %v1137, %v1176
        %v1202 = vmul.f32 %v1138, %v1181
        %v1203 = vmul.f32 %v1139, %v1186
        %v1204 = vmul.f32 %v1140, %v1191
        %v1205 = vmul.f32 %v1141, %v1196
        %v1206 = vpack.c.bf16 %v1199, %v1198
        %v1207 = vpack.c.bf16 %v1201, %v1200
        %v1208 = vpack.c.bf16 %v1203, %v1202
        %v1209 = vpack.c.bf16 %v1205, %v1204
        %v1214 = vunpack.c.l.b16 %v1206
        %v1215 = vunpack.c.h.b16 %v1206
        %v1216 = vunpack.c.l.b16 %v1207
        %v1217 = vunpack.c.h.b16 %v1207
        %v1218 = vunpack.c.l.b16 %v1208
        %v1219 = vunpack.c.h.b16 %v1208
        %v1220 = vunpack.c.l.b16 %v1209
        %v1221 = vunpack.c.h.b16 %v1209
        %v1222 = vpack.c.b16 %v1214, %v1214
        %v1223 = vpack.c.b16 %v1215, %v1215
        %v1224 = vpack.c.b16 %v1216, %v1216
        %v1225 = vpack.c.b16 %v1217, %v1217
        %v1226 = vpack.c.b16 %v1218, %v1218
        %v1227 = vpack.c.b16 %v1219, %v1219
        %v1228 = vpack.c.b16 %v1220, %v1220
        %v1229 = vpack.c.b16 %v1221, %v1221
        %vm1238 = vcmask 60416
        %1239 = vst.msk [vmem:[%s339] sm:$0xf] %vm1238, %v1222
        %1240 = vst.msk [vmem:[%s339 + $0x4] sm:$0xf] %vm1238, %v1223
        %1241 = vst.msk [vmem:[%s339 + $0x8] sm:$0xf] %vm1238, %v1224
        %1242 = vst.msk [vmem:[%s339 + $0xc] sm:$0xf] %vm1238, %v1225
        %1243 = vst.msk [vmem:[%s339 + $0x10] sm:$0xf] %vm1238, %v1226
        %1244 = vst.msk [vmem:[%s339 + $0x14] sm:$0xf] %vm1238, %v1227
        %1245 = vst.msk [vmem:[%s339 + $0x18] sm:$0xf] %vm1238, %v1228
        %1246 = vst.msk [vmem:[%s339 + $0x1c] sm:$0xf] %vm1238, %v1229
      $region44: #{_lambda_.58} parent=35 // pred_fallthru
        _
      %s1247 = smul.u32 2, %s21
      %p1248 = scmp.lt.s32.totalorder %s20, 1
      %s1249 = scalar_select %p1248, %s20, 1
      %p1250 = scmp.lt.s32.totalorder %s1247, 1
      %s1251 = scalar_select %p1250, %s1247, 1
      %s1252 = smul.addr %s1249, 8
      %s1253 = sadd.s32 %s1251, %s1252
      %s1254 = smul.addr %s1253, 4
      %s1255 = scalar_lea.vmem %s4, %s1254
      // Predicated region
      $region45: #{_lambda_.58} parent=35 // pred_check
        %p1256 = pneg %p166
      $region46: #{_lambda_.58} parent=35 // pred_check_branch
        %1258 = sbr.rel (%p1256) target = $region48
      $region47: #{_lambda_.58} parent=35 // pred_region
        %s1259 = smul.u32 2, %s21
      $region48: #{_lambda_.58} parent=35 // pred_fallthru
        _
    $region36: #{_lambda_.58} parent=5 // pred_fallthru
      _
    %p1260 = scmp.le.s32.totalorder 2, %s10
    // Predicated region
    $region49: #{_lambda_.58} parent=5 // pred_check
      %p1261 = pneg %p1260
    $region50: #{_lambda_.58} parent=5 // pred_check_branch
      %1263 = sbr.rel (%p1261) target = $region52
    $region51: #{_lambda_.58} parent=5 // pred_region
      %s1264 = ssub.s32 %s10, 2
      // Predicated region
      $region53: #{_lambda_.58} parent=51 // pred_check
        %p1265 = pneg %p172
      $region54: #{_lambda_.58} parent=51 // pred_check_branch
        %1267 = sbr.rel (%p1265) target = $region56
      $region55: #{_lambda_.58} parent=51 // pred_region
        %s1268 = smul.u32 2, %s24
        %p1269 = scmp.lt.s32.totalorder %s23, 1
        %s1270 = scalar_select %p1269, %s23, 1
        %p1271 = scmp.lt.s32.totalorder %s1268, 1
        %s1272 = scalar_select %p1271, %s1268, 1
        %s1273 = smul.addr %s1270, 8
        %s1274 = sadd.s32 %s1272, %s1273
        %s1275 = smul.addr %s1274, 4
        %s1276 = scalar_lea.vmem %s4, %s1275
      $region56: #{_lambda_.58} parent=51 // pred_fallthru
        _
    $region52: #{_lambda_.58} parent=5 // pred_fallthru
      _
  $region6: #{_lambda_.58} parent=0 // loop_footer
    %s14 = sadd.s32 1, %s10
  $region7: #{_lambda_.58} parent=0 // loop_footer_branch
    %9 = sbr.rel target = $region3
  $region8: #{_lambda_.58} parent=0 // loop_exit
    _

// kernel: _lambda_.41
$region0: #{_lambda_.41}
  #allocation0 [shape = 'u32[]', space=smem, size = 0x4, offset = 0x4, fixed_abs, tag = 'smem constant byte address 0x4 - core index']
  #allocation1 [shape = 'u32[144,128]{1,0:T(1,128)}', space=vmem, size = 0x12000, scoped, tag = 'internal scratch']
  #allocation2 [shape = 'f32[32,128]{1,0:T(8,128)}', space=vmem, size = 0x4000, scoped, tag = 'scratch operand']
  %s0 = inlined_call_operand.vmem [shape: bf16[32,128], index: 0, kind: input, shape index: {}]
  %s1 = inlined_call_operand.vmem [shape: bf16[128,128], index: 1, kind: input, shape index: {}]
  %s2 = inlined_call_operand.vmem [shape: f32[1,128], index: 2, kind: input, shape index: {}]
  %s3 = inlined_call_operand.vmem [shape: bf16[32,128], index: 3, kind: output, shape index: {}]
  %s4 = sld [smem:[#allocation0]]
  $region30: #{_lambda_.41} parent=0
    _
  %s6 = ssub.s32 1, %s4
  %s7 = scalar_select 0, %s6, %s4
  // Predicated region
  $region2: #{_lambda_.41} parent=0 // pred_check
    _
  $region3: #{_lambda_.41} parent=0 // pred_check_branch
    %9 = sbr.rel (0) target = $region5
  $region4: #{_lambda_.41} parent=0 // pred_region
    _
  $region5: #{_lambda_.41} parent=0 // pred_fallthru
    _
  // Predicated region
  $region6: #{_lambda_.41} parent=0 // pred_check
    _
  $region7: #{_lambda_.41} parent=0 // pred_check_branch
    %11 = sbr.rel (0) target = $region9
  $region8: #{_lambda_.41} parent=0 // pred_region
    _
  $region9: #{_lambda_.41} parent=0 // pred_fallthru
    _
  // Predicated region
  $region10: #{_lambda_.41} parent=0 // pred_check
    _
  $region11: #{_lambda_.41} parent=0 // pred_check_branch
    %13 = sbr.rel (0) target = $region13
  $region12: #{_lambda_.41} parent=0 // pred_region
    _
  $region13: #{_lambda_.41} parent=0 // pred_fallthru
    _
  %p15 = scmp.eq.s32.totalorder 0, 0
  // Predicated region
  $region14: #{_lambda_.41} parent=0 // pred_check
    %p16 = pneg %p15
  $region15: #{_lambda_.41} parent=0 // pred_check_branch
    %18 = sbr.rel (%p16) target = $region17
  $region16: #{_lambda_.41} parent=0 // pred_region
    %19 = vst [vmem:[#allocation2] sm:$0xff] 0.0
    %20 = vst [vmem:[#allocation2 + $0x8] sm:$0xff] 0.0
    %21 = vst [vmem:[#allocation2 + $0x10] sm:$0xff] 0.0
    %22 = vst [vmem:[#allocation2 + $0x18] sm:$0xff] 0.0
  $region17: #{_lambda_.41} parent=0 // pred_fallthru
    _
  %v23 = vld [vmem:[#allocation2] sm:$0xff]
  %v24 = vld [vmem:[#allocation2 + $0x8] sm:$0xff]
  %v25 = vld [vmem:[#allocation2 + $0x10] sm:$0xff]
  %v26 = vld [vmem:[#allocation2 + $0x18] sm:$0xff]
  %v27 = vld [vmem:[%s0] sm:$0xf]
  %v28 = vld [vmem:[%s0 + $0x4] sm:$0xf]
  %v29 = vld [vmem:[%s0 + $0x8] sm:$0xf]
  %v30 = vld [vmem:[%s0 + $0xc] sm:$0xf]
  %v31 = vld [vmem:[%s1] sm:$0xf]
  %v32 = vld [vmem:[%s1 + $0x4] sm:$0xf]
  %v33 = vld [vmem:[%s1 + $0x8] sm:$0xf]
  %v34 = vld [vmem:[%s1 + $0xc] sm:$0xf]
  %v35 = vld [vmem:[%s1 + $0x10] sm:$0xf]
  %v36 = vld [vmem:[%s1 + $0x14] sm:$0xf]
  %v37 = vld [vmem:[%s1 + $0x18] sm:$0xf]
  %v38 = vld [vmem:[%s1 + $0x1c] sm:$0xf]
  %v39 = vld [vmem:[%s1 + $0x20] sm:$0xf]
  %v40 = vld [vmem:[%s1 + $0x24] sm:$0xf]
  %v41 = vld [vmem:[%s1 + $0x28] sm:$0xf]
  %v42 = vld [vmem:[%s1 + $0x2c] sm:$0xf]
  %v43 = vld [vmem:[%s1 + $0x30] sm:$0xf]
  %v44 = vld [vmem:[%s1 + $0x34] sm:$0xf]
  %v45 = vld [vmem:[%s1 + $0x38] sm:$0xf]
  %v46 = vld [vmem:[%s1 + $0x3c] sm:$0xf]
  %v51 = vunpack.c.l.b16 %v27
  %v52 = vunpack.c.l.b16 %v28
  %v53 = vunpack.c.l.b16 %v29
  %v54 = vunpack.c.l.b16 %v30
  %v55 = vpack.c.b16 %v52, %v51
  %v56 = vpack.c.b16 %v54, %v53
  %v75 = vunpack.c.l.b16 %v31
  %v76 = vunpack.c.l.b16 %v32
  %v77 = vunpack.c.l.b16 %v33
  %v78 = vunpack.c.l.b16 %v34
  %v79 = vunpack.c.l.b16 %v35
  %v80 = vunpack.c.l.b16 %v36
  %v81 = vunpack.c.l.b16 %v37
  %v82 = vunpack.c.l.b16 %v38
  %v83 = vunpack.c.l.b16 %v39
  %v84 = vunpack.c.l.b16 %v40
  %v85 = vunpack.c.l.b16 %v41
  %v86 = vunpack.c.l.b16 %v42
  %v87 = vunpack.c.l.b16 %v43
  %v88 = vunpack.c.l.b16 %v44
  %v89 = vunpack.c.l.b16 %v45
  %v90 = vunpack.c.l.b16 %v46
  %v91 = vpack.c.b16 %v76, %v75
  %v92 = vpack.c.b16 %v78, %v77
  %v93 = vpack.c.b16 %v80, %v79
  %v94 = vpack.c.b16 %v82, %v81
  %v95 = vpack.c.b16 %v84, %v83
  %v96 = vpack.c.b16 %v86, %v85
  %v97 = vpack.c.b16 %v88, %v87
  %v98 = vpack.c.b16 %v90, %v89
  %107 = vmatprep.subr.bf16.mxu0 0
  %108 = vmatpush1.bf16.msra.mxu0 %v91
  %109 = vmatprep.subr.bf16.mxu0 0
  %110 = vmatpush1.bf16.msra.mxu0 %v92
  %111 = vmatprep.subr.bf16.mxu0 0
  %112 = vmatpush1.bf16.msra.mxu0 %v93
  %113 = vmatprep.subr.bf16.mxu0 0
  %114 = vmatpush1.bf16.msra.mxu0 %v94
  %115 = vmatprep.subr.bf16.mxu0 0
  %116 = vmatpush1.bf16.msra.mxu0 %v95
  %117 = vmatprep.subr.bf16.mxu0 0
  %118 = vmatpush1.bf16.msra.mxu0 %v96
  %119 = vmatprep.subr.bf16.mxu0 0
  %120 = vmatpush1.bf16.msra.mxu0 %v97
  %121 = vmatprep.subr.bf16.mxu0 0
  %122 = vmatpush1.bf16.msra.mxu0 %v98
  %123 = vmatprep.subr.bf16.mxu0 0
  %124 = vmatpush1.bf16.msra.mxu0 0
  %125 = vmatprep.subr.bf16.mxu0 0
  %126 = vmatpush1.bf16.msra.mxu0 0
  %127 = vmatprep.subr.bf16.mxu0 0
  %128 = vmatpush1.bf16.msra.mxu0 0
  %129 = vmatprep.subr.bf16.mxu0 0
  %130 = vmatpush1.bf16.msra.mxu0 0
  %131 = vmatprep.subr.bf16.mxu0 0
  %132 = vmatpush1.bf16.msra.mxu0 0
  %133 = vmatprep.subr.bf16.mxu0 0
  %134 = vmatpush1.bf16.msra.mxu0 0
  %135 = vmatprep.subr.bf16.mxu0 0
  %136 = vmatpush1.bf16.msra.mxu0 0
  %137 = vmatprep.subr.bf16.mxu0 0
  %138 = vmatpush1.bf16.msra.mxu0 0
  %139 = vmatprep.mubr.bf16.mxu0 0
  %140 = vmatmul.mubr.bf16.gmra.mrb[0].mxu0 %v55
  %v141 = vpop.f32.mrb[0].mxu0
  %v142 = vadd.f32 0.0, %v141
  %v143 = vpop.f32.mrb[0].mxu0
  %v144 = vpop.f32.mrb[0].mxu0
  %v145 = vadd.f32 0.0, %v144
  %v146 = vpop.f32.mrb[0].mxu0
  %147 = vmatprep.mubr.bf16.mxu0 0
  %148 = vmatmul.mubr.bf16.gmra.mrb[0].mxu0 %v56
  %v149 = vpop.f32.mrb[0].mxu0
  %v150 = vadd.f32 0.0, %v149
  %v151 = vpop.f32.mrb[0].mxu0
  %v152 = vpop.f32.mrb[0].mxu0
  %v153 = vadd.f32 0.0, %v152
  %v154 = vpop.f32.mrb[0].mxu0
  %155 = vdwg.mxu0
  %v156 = vadd.f32 %v23, %v142
  %v157 = vadd.f32 %v24, %v145
  %v158 = vadd.f32 %v25, %v150
  %v159 = vadd.f32 %v26, %v153
  %160 = vst [vmem:[#allocation2] sm:$0xff] %v156
  %161 = vst [vmem:[#allocation2 + $0x8] sm:$0xff] %v157
  %162 = vst [vmem:[#allocation2 + $0x10] sm:$0xff] %v158
  %163 = vst [vmem:[#allocation2 + $0x18] sm:$0xff] %v159
  // Predicated region
  $region18: #{_lambda_.41} parent=0 // pred_check
    %p164 = pneg %p15
  $region19: #{_lambda_.41} parent=0 // pred_check_branch
    %166 = sbr.rel (%p164) target = $region21
  $region20: #{_lambda_.41} parent=0 // pred_region
    %v167 = vld [vmem:[#allocation2] sm:$0xff]
    %v168 = vld [vmem:[#allocation2 + $0x8] sm:$0xff]
    %v169 = vld [vmem:[#allocation2 + $0x10] sm:$0xff]
    %v170 = vld [vmem:[#allocation2 + $0x18] sm:$0xff]
    %v171 = vld [vmem:[%s2] sm:$0x1]
    %v173 = vlaneseq
    %v174 = vshrl.u32 %v173, 7
    %v175 = vsub.s32 0, %v174
    %v176 = vrot.slane %v171, %v175
    %v178 = vadd.f32 %v167, %v176
    %v179 = vadd.f32 %v168, %v176
    %v180 = vadd.f32 %v169, %v176
    %v181 = vadd.f32 %v170, %v176
    %v182 = vpack.c.bf16 %v179, %v178
    %v183 = vpack.c.bf16 %v181, %v180
    %v186 = vunpack.c.l.b16 %v182
    %v187 = vunpack.c.h.b16 %v182
    %v188 = vunpack.c.l.b16 %v183
    %v189 = vunpack.c.h.b16 %v183
    %v190 = vpack.c.b16 %v186, %v186
    %v191 = vpack.c.b16 %v187, %v187
    %v192 = vpack.c.b16 %v188, %v188
    %v193 = vpack.c.b16 %v189, %v189
    %198 = vst [vmem:[%s3] sm:$0xf] %v190
    %199 = vst [vmem:[%s3 + $0x4] sm:$0xf] %v191
    %200 = vst [vmem:[%s3 + $0x8] sm:$0xf] %v192
    %201 = vst [vmem:[%s3 + $0xc] sm:$0xf] %v193
  $region21: #{_lambda_.41} parent=0 // pred_fallthru
    _
  // Predicated region
  $region22: #{_lambda_.41} parent=0 // pred_check
    _
  $region23: #{_lambda_.41} parent=0 // pred_check_branch
    %203 = sbr.rel (0) target = $region25
  $region24: #{_lambda_.41} parent=0 // pred_region
    _
  $region25: #{_lambda_.41} parent=0 // pred_fallthru
    _
  // Predicated region
  $region26: #{_lambda_.41} parent=0 // pred_check
    _
  $region27: #{_lambda_.41} parent=0 // pred_check_branch
    %205 = sbr.rel (0) target = $region29
  $region28: #{_lambda_.41} parent=0 // pred_region
    _
  $region29: #{_lambda_.41} parent=0 // pred_fallthru
    _

// kernel: _lambda_.42
$region0: #{_lambda_.42}
  #allocation0 [shape = 'u32[]', space=smem, size = 0x4, offset = 0x4, fixed_abs, tag = 'smem constant byte address 0x4 - core index']
  #allocation1 [shape = 'u32[144,128]{1,0:T(1,128)}', space=vmem, size = 0x12000, scoped, tag = 'internal scratch']
  %s0 = inlined_call_operand.vmem [shape: bf16[32,32], index: 0, kind: input, shape index: {}]
  %s1 = inlined_call_operand.vmem [shape: f32[1,32], index: 1, kind: input, shape index: {}]
  %s2 = inlined_call_operand.vmem [shape: f32[1,32], index: 2, kind: input, shape index: {}]
  %s3 = inlined_call_operand.vmem [shape: bf16[32,32], index: 3, kind: output, shape index: {}]
  %s4 = sld [smem:[#allocation0]]
  $region22: #{_lambda_.42} parent=0
    _
  %s6 = ssub.s32 1, %s4
  %s7 = scalar_select 0, %s6, %s4
  // Predicated region
  $region2: #{_lambda_.42} parent=0 // pred_check
    _
  $region3: #{_lambda_.42} parent=0 // pred_check_branch
    %9 = sbr.rel (0) target = $region5
  $region4: #{_lambda_.42} parent=0 // pred_region
    _
  $region5: #{_lambda_.42} parent=0 // pred_fallthru
    _
  // Predicated region
  $region6: #{_lambda_.42} parent=0 // pred_check
    _
  $region7: #{_lambda_.42} parent=0 // pred_check_branch
    %11 = sbr.rel (0) target = $region9
  $region8: #{_lambda_.42} parent=0 // pred_region
    _
  $region9: #{_lambda_.42} parent=0 // pred_fallthru
    _
  // Predicated region
  $region10: #{_lambda_.42} parent=0 // pred_check
    _
  $region11: #{_lambda_.42} parent=0 // pred_check_branch
    %13 = sbr.rel (0) target = $region13
  $region12: #{_lambda_.42} parent=0 // pred_region
    _
  $region13: #{_lambda_.42} parent=0 // pred_fallthru
    _
  %v14 = vld [vmem:[%s0] sm:$0xf]
  %v15 = vld [vmem:[%s0 + $0x4] sm:$0xf]
  %v16 = vld [vmem:[%s0 + $0x8] sm:$0xf]
  %v17 = vld [vmem:[%s0 + $0xc] sm:$0xf]
  %v18 = vunpack.c.l.bf16 %v14
  %v19 = vunpack.c.l.bf16 %v15
  %v20 = vunpack.c.l.bf16 %v16
  %v21 = vunpack.c.l.bf16 %v17
  %vm22 = vcmask 261120
  %v23 = vsel %vm22, %v18, 0.0
  %24 = vadd.xlane.f32.xlu0 %v23
  %v25 = vpop.xlane.xlu0 %24
  %v26 = vsel %vm22, %v19, 0.0
  %27 = vadd.xlane.f32.xlu0 %v26
  %v28 = vpop.xlane.xlu0 %27
  %v29 = vsel %vm22, %v20, 0.0
  %30 = vadd.xlane.f32.xlu0 %v29
  %v31 = vpop.xlane.xlu0 %30
  %v32 = vsel %vm22, %v21, 0.0
  %33 = vadd.xlane.f32.xlu0 %v32
  %v34 = vpop.xlane.xlu0 %33
  %v35 = vrcp.pop 32.0
  %v36 = vmul.f32 %v25, %v35
  %v37 = vmul.f32 %v28, %v35
  %v38 = vmul.f32 %v31, %v35
  %v39 = vmul.f32 %v34, %v35
  %v40 = vsub.f32 %v18, %v36
  %v41 = vsub.f32 %v19, %v37
  %v42 = vsub.f32 %v20, %v38
  %v43 = vsub.f32 %v21, %v39
  %v44 = vmul.f32 %v40, %v40
  %v45 = vmul.f32 %v41, %v41
  %v46 = vmul.f32 %v42, %v42
  %v47 = vmul.f32 %v43, %v43
  %v48 = vsel %vm22, %v44, 0.0
  %49 = vadd.xlane.f32.xlu0 %v48
  %v50 = vpop.xlane.xlu0 %49
  %v51 = vsel %vm22, %v45, 0.0
  %52 = vadd.xlane.f32.xlu0 %v51
  %v53 = vpop.xlane.xlu0 %52
  %v54 = vsel %vm22, %v46, 0.0
  %55 = vadd.xlane.f32.xlu0 %v54
  %v56 = vpop.xlane.xlu0 %55
  %v57 = vsel %vm22, %v47, 0.0
  %58 = vadd.xlane.f32.xlu0 %v57
  %v59 = vpop.xlane.xlu0 %58
  %v60 = vmul.f32 %v50, %v35
  %v61 = vmul.f32 %v53, %v35
  %v62 = vmul.f32 %v56, %v35
  %v63 = vmul.f32 %v59, %v35
  %v64 = vadd.f32 %v60, 1e-05
  %v65 = vadd.f32 %v61, 1e-05
  %v66 = vadd.f32 %v62, 1e-05
  %v67 = vadd.f32 %v63, 1e-05
  %v68 = vrsqrt.pop %v64
  %v69 = vrsqrt.pop %v65
  %v70 = vrsqrt.pop %v66
  %v71 = vrsqrt.pop %v67
  %v72 = vmul.f32 %v40, %v68
  %v73 = vmul.f32 %v41, %v69
  %v74 = vmul.f32 %v42, %v70
  %v75 = vmul.f32 %v43, %v71
  %v76 = vld [vmem:[%s1] sm:$0x1]
  %v78 = vlaneseq
  %v79 = vshrl.u32 %v78, 7
  %v80 = vsub.s32 0, %v79
  %v81 = vrot.slane %v76, %v80
  %v83 = vmul.f32 %v72, %v81
  %v84 = vmul.f32 %v73, %v81
  %v85 = vmul.f32 %v74, %v81
  %v86 = vmul.f32 %v75, %v81
  %v87 = vld [vmem:[%s2] sm:$0x1]
  %v89 = vlaneseq
  %v90 = vshrl.u32 %v89, 7
  %v91 = vsub.s32 0, %v90
  %v92 = vrot.slane %v87, %v91
  %v94 = vadd.f32 %v83, %v92
  %v95 = vadd.f32 %v84, %v92
  %v96 = vadd.f32 %v85, %v92
  %v97 = vadd.f32 %v86, %v92
  %v98 = vpack.c.bf16 %v95, %v94
  %v99 = vpack.c.bf16 %v97, %v96
  %v102 = vunpack.c.l.b16 %v98
  %v103 = vunpack.c.h.b16 %v98
  %v104 = vunpack.c.l.b16 %v99
  %v105 = vunpack.c.h.b16 %v99
  %v106 = vpack.c.b16 %v102, %v102
  %v107 = vpack.c.b16 %v103, %v103
  %v108 = vpack.c.b16 %v104, %v104
  %v109 = vpack.c.b16 %v105, %v105
  %vm114 = vcmask 257024
  %115 = vst.msk [vmem:[%s3] sm:$0xf] %vm114, %v106
  %116 = vst.msk [vmem:[%s3 + $0x4] sm:$0xf] %vm114, %v107
  %117 = vst.msk [vmem:[%s3 + $0x8] sm:$0xf] %vm114, %v108
  %118 = vst.msk [vmem:[%s3 + $0xc] sm:$0xf] %vm114, %v109
  // Predicated region
  $region14: #{_lambda_.42} parent=0 // pred_check
    _
  $region15: #{_lambda_.42} parent=0 // pred_check_branch
    %120 = sbr.rel (0) target = $region17
  $region16: #{_lambda_.42} parent=0 // pred_region
    _
  $region17: #{_lambda_.42} parent=0 // pred_fallthru
    _
  // Predicated region
  $region18: #{_lambda_.42} parent=0 // pred_check
    _
  $region19: #{_lambda_.42} parent=0 // pred_check_branch
    %122 = sbr.rel (0) target = $region21
  $region20: #{_lambda_.42} parent=0 // pred_region
    _
  $region21: #{_lambda_.42} parent=0 // pred_fallthru
    _

// kernel: _lambda_.46
$region0: #{_lambda_.46}
  #allocation0 [shape = 'u32[]', space=smem, size = 0x4, offset = 0x4, fixed_abs, tag = 'smem constant byte address 0x4 - core index']
  #allocation1 [shape = 'u32[144,128]{1,0:T(1,128)}', space=vmem, size = 0x12000, scoped, tag = 'internal scratch']
  %s0 = inlined_call_operand.vmem [shape: bf16[32,32], index: 0, kind: input, shape index: {}]
  %s1 = inlined_call_operand.vmem [shape: f32[32,32], index: 1, kind: input, shape index: {}]
  %s2 = inlined_call_operand.vmem [shape: f32[32,1], index: 2, kind: input, shape index: {}]
  %s3 = inlined_call_operand.vmem [shape: f32[1,32], index: 3, kind: input, shape index: {}]
  %s4 = inlined_call_operand.vmem [shape: f32[1,32], index: 4, kind: input, shape index: {}]
  %s5 = inlined_call_operand.vmem [shape: bf16[32,32], index: 5, kind: output, shape index: {}]
  %s6 = sld [smem:[#allocation0]]
  $region30: #{_lambda_.46} parent=0
    _
  %s8 = ssub.s32 1, %s6
  %s9 = scalar_select 0, %s8, %s6
  // Predicated region
  $region2: #{_lambda_.46} parent=0 // pred_check
    _
  $region3: #{_lambda_.46} parent=0 // pred_check_branch
    %11 = sbr.rel (0) target = $region5
  $region4: #{_lambda_.46} parent=0 // pred_region
    _
  $region5: #{_lambda_.46} parent=0 // pred_fallthru
    _
  // Predicated region
  $region6: #{_lambda_.46} parent=0 // pred_check
    _
  $region7: #{_lambda_.46} parent=0 // pred_check_branch
    %13 = sbr.rel (0) target = $region9
  $region8: #{_lambda_.46} parent=0 // pred_region
    _
  $region9: #{_lambda_.46} parent=0 // pred_fallthru
    _
  // Predicated region
  $region10: #{_lambda_.46} parent=0 // pred_check
    _
  $region11: #{_lambda_.46} parent=0 // pred_check_branch
    %15 = sbr.rel (0) target = $region13
  $region12: #{_lambda_.46} parent=0 // pred_region
    _
  $region13: #{_lambda_.46} parent=0 // pred_fallthru
    _
  // Predicated region
  $region14: #{_lambda_.46} parent=0 // pred_check
    _
  $region15: #{_lambda_.46} parent=0 // pred_check_branch
    %17 = sbr.rel (0) target = $region17
  $region16: #{_lambda_.46} parent=0 // pred_region
    _
  $region17: #{_lambda_.46} parent=0 // pred_fallthru
    _
  // Predicated region
  $region18: #{_lambda_.46} parent=0 // pred_check
    _
  $region19: #{_lambda_.46} parent=0 // pred_check_branch
    %19 = sbr.rel (0) target = $region21
  $region20: #{_lambda_.46} parent=0 // pred_region
    _
  $region21: #{_lambda_.46} parent=0 // pred_fallthru
    _
  %v20 = vld [vmem:[%s0] sm:$0xf]
  %v21 = vld [vmem:[%s0 + $0x4] sm:$0xf]
  %v22 = vld [vmem:[%s0 + $0x8] sm:$0xf]
  %v23 = vld [vmem:[%s0 + $0xc] sm:$0xf]
  %v24 = vunpack.c.l.bf16 %v20
  %v25 = vunpack.c.l.bf16 %v21
  %v26 = vunpack.c.l.bf16 %v22
  %v27 = vunpack.c.l.bf16 %v23
  %v28 = vld [vmem:[%s1] sm:$0xff]
  %v29 = vld [vmem:[%s1 + $0x8] sm:$0xff]
  %v30 = vld [vmem:[%s1 + $0x10] sm:$0xff]
  %v31 = vld [vmem:[%s1 + $0x18] sm:$0xff]
  %v32 = vadd.f32 %v24, %v28
  %v33 = vadd.f32 %v25, %v29
  %v34 = vadd.f32 %v26, %v30
  %v35 = vadd.f32 %v27, %v31
  %v36 = vld [vmem:[%s2] sm:$0xff]
  %v37 = vld [vmem:[%s2 + $0x8] sm:$0xff]
  %v38 = vld [vmem:[%s2 + $0x10] sm:$0xff]
  %v39 = vld [vmem:[%s2 + $0x18] sm:$0xff]
  %vm40 = vcmask 261120
  %v41 = vsel %vm40, %v32, 0.0
  %42 = vadd.xlane.f32.xlu0 %v41
  %v43 = vpop.xlane.xlu0 %42
  %v44 = vsel %vm40, %v33, 0.0
  %45 = vadd.xlane.f32.xlu0 %v44
  %v46 = vpop.xlane.xlu0 %45
  %v47 = vsel %vm40, %v34, 0.0
  %48 = vadd.xlane.f32.xlu0 %v47
  %v49 = vpop.xlane.xlu0 %48
  %v50 = vsel %vm40, %v35, 0.0
  %51 = vadd.xlane.f32.xlu0 %v50
  %v52 = vpop.xlane.xlu0 %51
  %v53 = vrcp.pop 32.0
  %v54 = vmul.f32 %v43, %v53
  %v55 = vmul.f32 %v46, %v53
  %v56 = vmul.f32 %v49, %v53
  %v57 = vmul.f32 %v52, %v53
  %v58 = vsub.f32 %v32, %v54
  %v59 = vsub.f32 %v33, %v55
  %v60 = vsub.f32 %v34, %v56
  %v61 = vsub.f32 %v35, %v57
  %v62 = vmul.f32 %v58, %v58
  %v63 = vmul.f32 %v59, %v59
  %v64 = vmul.f32 %v60, %v60
  %v65 = vmul.f32 %v61, %v61
  %v66 = vsel %vm40, %v62, 0.0
  %67 = vadd.xlane.f32.xlu0 %v66
  %v68 = vpop.xlane.xlu0 %67
  %v69 = vsel %vm40, %v63, 0.0
  %70 = vadd.xlane.f32.xlu0 %v69
  %v71 = vpop.xlane.xlu0 %70
  %v72 = vsel %vm40, %v64, 0.0
  %73 = vadd.xlane.f32.xlu0 %v72
  %v74 = vpop.xlane.xlu0 %73
  %v75 = vsel %vm40, %v65, 0.0
  %76 = vadd.xlane.f32.xlu0 %v75
  %v77 = vpop.xlane.xlu0 %76
  %v78 = vmul.f32 %v68, %v53
  %v79 = vmul.f32 %v71, %v53
  %v80 = vmul.f32 %v74, %v53
  %v81 = vmul.f32 %v77, %v53
  %v82 = vadd.f32 %v78, 1e-05
  %v83 = vadd.f32 %v79, 1e-05
  %v84 = vadd.f32 %v80, 1e-05
  %v85 = vadd.f32 %v81, 1e-05
  %v86 = vrsqrt.pop %v82
  %v87 = vrsqrt.pop %v83
  %v88 = vrsqrt.pop %v84
  %v89 = vrsqrt.pop %v85
  %v90 = vmul.f32 %v58, %v86
  %v91 = vmul.f32 %v59, %v87
  %v92 = vmul.f32 %v60, %v88
  %v93 = vmul.f32 %v61, %v89
  %v94 = vld [vmem:[%s3] sm:$0x1]
  %v96 = vlaneseq
  %v97 = vshrl.u32 %v96, 7
  %v98 = vsub.s32 0, %v97
  %v99 = vrot.slane %v94, %v98
  %v101 = vmul.f32 %v90, %v99
  %v102 = vmul.f32 %v91, %v99
  %v103 = vmul.f32 %v92, %v99
  %v104 = vmul.f32 %v93, %v99
  %v105 = vld [vmem:[%s4] sm:$0x1]
  %v107 = vlaneseq
  %v108 = vshrl.u32 %v107, 7
  %v109 = vsub.s32 0, %v108
  %v110 = vrot.slane %v105, %v109
  %v112 = vadd.f32 %v101, %v110
  %v113 = vadd.f32 %v102, %v110
  %v114 = vadd.f32 %v103, %v110
  %v115 = vadd.f32 %v104, %v110
  %117 = vset.pattern.permute.xlu0 0
  %118 = vperm.xlu0 %117, %v36
  %v119 = vpop.permute.xlu0 %118
  %122 = vset.pattern.permute.xlu0 0
  %123 = vperm.xlu0 %122, %v37
  %v124 = vpop.permute.xlu0 %123
  %127 = vset.pattern.permute.xlu0 0
  %128 = vperm.xlu0 %127, %v38
  %v129 = vpop.permute.xlu0 %128
  %132 = vset.pattern.permute.xlu0 0
  %133 = vperm.xlu0 %132, %v39
  %v134 = vpop.permute.xlu0 %133
  %v136 = vmul.f32 %v112, %v119
  %v137 = vmul.f32 %v113, %v124
  %v138 = vmul.f32 %v114, %v129
  %v139 = vmul.f32 %v115, %v134
  %v140 = vpack.c.bf16 %v137, %v136
  %v141 = vpack.c.bf16 %v139, %v138
  %v144 = vunpack.c.l.b16 %v140
  %v145 = vunpack.c.h.b16 %v140
  %v146 = vunpack.c.l.b16 %v141
  %v147 = vunpack.c.h.b16 %v141
  %v148 = vpack.c.b16 %v144, %v144
  %v149 = vpack.c.b16 %v145, %v145
  %v150 = vpack.c.b16 %v146, %v146
  %v151 = vpack.c.b16 %v147, %v147
  %vm156 = vcmask 257024
  %157 = vst.msk [vmem:[%s5] sm:$0xf] %vm156, %v148
  %158 = vst.msk [vmem:[%s5 + $0x4] sm:$0xf] %vm156, %v149
  %159 = vst.msk [vmem:[%s5 + $0x8] sm:$0xf] %vm156, %v150
  %160 = vst.msk [vmem:[%s5 + $0xc] sm:$0xf] %vm156, %v151
  // Predicated region
  $region22: #{_lambda_.46} parent=0 // pred_check
    _
  $region23: #{_lambda_.46} parent=0 // pred_check_branch
    %162 = sbr.rel (0) target = $region25
  $region24: #{_lambda_.46} parent=0 // pred_region
    _
  $region25: #{_lambda_.46} parent=0 // pred_fallthru
    _
  // Predicated region
  $region26: #{_lambda_.46} parent=0 // pred_check
    _
  $region27: #{_lambda_.46} parent=0 // pred_check_branch
    %164 = sbr.rel (0) target = $region29
  $region28: #{_lambda_.46} parent=0 // pred_region
    _
  $region29: #{_lambda_.46} parent=0 // pred_fallthru
    _

// kernel: _lambda_.47
$region0: #{_lambda_.47}
  #allocation0 [shape = 'u32[]', space=smem, size = 0x4, offset = 0x4, fixed_abs, tag = 'smem constant byte address 0x4 - core index']
  #allocation1 [shape = 'u32[144,128]{1,0:T(1,128)}', space=vmem, size = 0x12000, scoped, tag = 'internal scratch']
  #allocation2 [shape = 'f32[32,128]{1,0:T(8,128)}', space=vmem, size = 0x4000, scoped, tag = 'scratch operand']
  %s0 = inlined_call_operand.vmem [shape: bf16[32,128], index: 0, kind: input, shape index: {}]
  %s1 = inlined_call_operand.vmem [shape: bf16[128,128], index: 1, kind: input, shape index: {}]
  %s2 = inlined_call_operand.vmem [shape: f32[1,128], index: 2, kind: input, shape index: {}]
  %s3 = inlined_call_operand.vmem [shape: bf16[32,128], index: 3, kind: output, shape index: {}]
  %s4 = sld [smem:[#allocation0]]
  $region30: #{_lambda_.47} parent=0
    _
  %s6 = ssub.s32 1, %s4
  %s7 = scalar_select 0, %s6, %s4
  // Predicated region
  $region2: #{_lambda_.47} parent=0 // pred_check
    _
  $region3: #{_lambda_.47} parent=0 // pred_check_branch
    %9 = sbr.rel (0) target = $region5
  $region4: #{_lambda_.47} parent=0 // pred_region
    _
  $region5: #{_lambda_.47} parent=0 // pred_fallthru
    _
  // Predicated region
  $region6: #{_lambda_.47} parent=0 // pred_check
    _
  $region7: #{_lambda_.47} parent=0 // pred_check_branch
    %11 = sbr.rel (0) target = $region9
  $region8: #{_lambda_.47} parent=0 // pred_region
    _
  $region9: #{_lambda_.47} parent=0 // pred_fallthru
    _
  // Predicated region
  $region10: #{_lambda_.47} parent=0 // pred_check
    _
  $region11: #{_lambda_.47} parent=0 // pred_check_branch
    %13 = sbr.rel (0) target = $region13
  $region12: #{_lambda_.47} parent=0 // pred_region
    _
  $region13: #{_lambda_.47} parent=0 // pred_fallthru
    _
  %p15 = scmp.eq.s32.totalorder 0, 0
  // Predicated region
  $region14: #{_lambda_.47} parent=0 // pred_check
    %p16 = pneg %p15
  $region15: #{_lambda_.47} parent=0 // pred_check_branch
    %18 = sbr.rel (%p16) target = $region17
  $region16: #{_lambda_.47} parent=0 // pred_region
    %19 = vst [vmem:[#allocation2] sm:$0xff] 0.0
    %20 = vst [vmem:[#allocation2 + $0x8] sm:$0xff] 0.0
    %21 = vst [vmem:[#allocation2 + $0x10] sm:$0xff] 0.0
    %22 = vst [vmem:[#allocation2 + $0x18] sm:$0xff] 0.0
  $region17: #{_lambda_.47} parent=0 // pred_fallthru
    _
  %v23 = vld [vmem:[#allocation2] sm:$0xff]
  %v24 = vld [vmem:[#allocation2 + $0x8] sm:$0xff]
  %v25 = vld [vmem:[#allocation2 + $0x10] sm:$0xff]
  %v26 = vld [vmem:[#allocation2 + $0x18] sm:$0xff]
  %v27 = vld [vmem:[%s0] sm:$0xf]
  %v28 = vld [vmem:[%s0 + $0x4] sm:$0xf]
  %v29 = vld [vmem:[%s0 + $0x8] sm:$0xf]
  %v30 = vld [vmem:[%s0 + $0xc] sm:$0xf]
  %v31 = vld [vmem:[%s1] sm:$0xf]
  %v32 = vld [vmem:[%s1 + $0x4] sm:$0xf]
  %v33 = vld [vmem:[%s1 + $0x8] sm:$0xf]
  %v34 = vld [vmem:[%s1 + $0xc] sm:$0xf]
  %v35 = vld [vmem:[%s1 + $0x10] sm:$0xf]
  %v36 = vld [vmem:[%s1 + $0x14] sm:$0xf]
  %v37 = vld [vmem:[%s1 + $0x18] sm:$0xf]
  %v38 = vld [vmem:[%s1 + $0x1c] sm:$0xf]
  %v39 = vld [vmem:[%s1 + $0x20] sm:$0xf]
  %v40 = vld [vmem:[%s1 + $0x24] sm:$0xf]
  %v41 = vld [vmem:[%s1 + $0x28] sm:$0xf]
  %v42 = vld [vmem:[%s1 + $0x2c] sm:$0xf]
  %v43 = vld [vmem:[%s1 + $0x30] sm:$0xf]
  %v44 = vld [vmem:[%s1 + $0x34] sm:$0xf]
  %v45 = vld [vmem:[%s1 + $0x38] sm:$0xf]
  %v46 = vld [vmem:[%s1 + $0x3c] sm:$0xf]
  %v51 = vunpack.c.l.b16 %v27
  %v52 = vunpack.c.l.b16 %v28
  %v53 = vunpack.c.l.b16 %v29
  %v54 = vunpack.c.l.b16 %v30
  %v55 = vpack.c.b16 %v52, %v51
  %v56 = vpack.c.b16 %v54, %v53
  %v75 = vunpack.c.l.b16 %v31
  %v76 = vunpack.c.l.b16 %v32
  %v77 = vunpack.c.l.b16 %v33
  %v78 = vunpack.c.l.b16 %v34
  %v79 = vunpack.c.l.b16 %v35
  %v80 = vunpack.c.l.b16 %v36
  %v81 = vunpack.c.l.b16 %v37
  %v82 = vunpack.c.l.b16 %v38
  %v83 = vunpack.c.l.b16 %v39
  %v84 = vunpack.c.l.b16 %v40
  %v85 = vunpack.c.l.b16 %v41
  %v86 = vunpack.c.l.b16 %v42
  %v87 = vunpack.c.l.b16 %v43
  %v88 = vunpack.c.l.b16 %v44
  %v89 = vunpack.c.l.b16 %v45
  %v90 = vunpack.c.l.b16 %v46
  %v91 = vpack.c.b16 %v76, %v75
  %v92 = vpack.c.b16 %v78, %v77
  %v93 = vpack.c.b16 %v80, %v79
  %v94 = vpack.c.b16 %v82, %v81
  %v95 = vpack.c.b16 %v84, %v83
  %v96 = vpack.c.b16 %v86, %v85
  %v97 = vpack.c.b16 %v88, %v87
  %v98 = vpack.c.b16 %v90, %v89
  %107 = vmatprep.subr.bf16.mxu0 0
  %108 = vmatpush1.bf16.msra.mxu0 %v91
  %109 = vmatprep.subr.bf16.mxu0 0
  %110 = vmatpush1.bf16.msra.mxu0 %v92
  %111 = vmatprep.subr.bf16.mxu0 0
  %112 = vmatpush1.bf16.msra.mxu0 %v93
  %113 = vmatprep.subr.bf16.mxu0 0
  %114 = vmatpush1.bf16.msra.mxu0 %v94
  %115 = vmatprep.subr.bf16.mxu0 0
  %116 = vmatpush1.bf16.msra.mxu0 %v95
  %117 = vmatprep.subr.bf16.mxu0 0
  %118 = vmatpush1.bf16.msra.mxu0 %v96
  %119 = vmatprep.subr.bf16.mxu0 0
  %120 = vmatpush1.bf16.msra.mxu0 %v97
  %121 = vmatprep.subr.bf16.mxu0 0
  %122 = vmatpush1.bf16.msra.mxu0 %v98
  %123 = vmatprep.subr.bf16.mxu0 0
  %124 = vmatpush1.bf16.msra.mxu0 0
  %125 = vmatprep.subr.bf16.mxu0 0
  %126 = vmatpush1.bf16.msra.mxu0 0
  %127 = vmatprep.subr.bf16.mxu0 0
  %128 = vmatpush1.bf16.msra.mxu0 0
  %129 = vmatprep.subr.bf16.mxu0 0
  %130 = vmatpush1.bf16.msra.mxu0 0
  %131 = vmatprep.subr.bf16.mxu0 0
  %132 = vmatpush1.bf16.msra.mxu0 0
  %133 = vmatprep.subr.bf16.mxu0 0
  %134 = vmatpush1.bf16.msra.mxu0 0
  %135 = vmatprep.subr.bf16.mxu0 0
  %136 = vmatpush1.bf16.msra.mxu0 0
  %137 = vmatprep.subr.bf16.mxu0 0
  %138 = vmatpush1.bf16.msra.mxu0 0
  %139 = vmatprep.mubr.bf16.mxu0 0
  %140 = vmatmul.mubr.bf16.gmra.mrb[0].mxu0 %v55
  %v141 = vpop.f32.mrb[0].mxu0
  %v142 = vadd.f32 0.0, %v141
  %v143 = vpop.f32.mrb[0].mxu0
  %v144 = vpop.f32.mrb[0].mxu0
  %v145 = vadd.f32 0.0, %v144
  %v146 = vpop.f32.mrb[0].mxu0
  %147 = vmatprep.mubr.bf16.mxu0 0
  %148 = vmatmul.mubr.bf16.gmra.mrb[0].mxu0 %v56
  %v149 = vpop.f32.mrb[0].mxu0
  %v150 = vadd.f32 0.0, %v149
  %v151 = vpop.f32.mrb[0].mxu0
  %v152 = vpop.f32.mrb[0].mxu0
  %v153 = vadd.f32 0.0, %v152
  %v154 = vpop.f32.mrb[0].mxu0
  %155 = vdwg.mxu0
  %v156 = vadd.f32 %v23, %v142
  %v157 = vadd.f32 %v24, %v145
  %v158 = vadd.f32 %v25, %v150
  %v159 = vadd.f32 %v26, %v153
  %160 = vst [vmem:[#allocation2] sm:$0xff] %v156
  %161 = vst [vmem:[#allocation2 + $0x8] sm:$0xff] %v157
  %162 = vst [vmem:[#allocation2 + $0x10] sm:$0xff] %v158
  %163 = vst [vmem:[#allocation2 + $0x18] sm:$0xff] %v159
  // Predicated region
  $region18: #{_lambda_.47} parent=0 // pred_check
    %p164 = pneg %p15
  $region19: #{_lambda_.47} parent=0 // pred_check_branch
    %166 = sbr.rel (%p164) target = $region21
  $region20: #{_lambda_.47} parent=0 // pred_region
    %v167 = vld [vmem:[#allocation2] sm:$0xff]
    %v168 = vld [vmem:[#allocation2 + $0x8] sm:$0xff]
    %v169 = vld [vmem:[#allocation2 + $0x10] sm:$0xff]
    %v170 = vld [vmem:[#allocation2 + $0x18] sm:$0xff]
    %v171 = vld [vmem:[%s2] sm:$0x1]
    %v173 = vlaneseq
    %v174 = vshrl.u32 %v173, 7
    %v175 = vsub.s32 0, %v174
    %v176 = vrot.slane %v171, %v175
    %v178 = vadd.f32 %v167, %v176
    %v179 = vadd.f32 %v168, %v176
    %v180 = vadd.f32 %v169, %v176
    %v181 = vadd.f32 %v170, %v176
    %v182 = vmax.f32 %v178, 0.0
    %v183 = vmax.f32 %v179, 0.0
    %v184 = vmax.f32 %v180, 0.0
    %v185 = vmax.f32 %v181, 0.0
    %v186 = vpack.c.bf16 %v183, %v182
    %v187 = vpack.c.bf16 %v185, %v184
    %v190 = vunpack.c.l.b16 %v186
    %v191 = vunpack.c.h.b16 %v186
    %v192 = vunpack.c.l.b16 %v187
    %v193 = vunpack.c.h.b16 %v187
    %v194 = vpack.c.b16 %v190, %v190
    %v195 = vpack.c.b16 %v191, %v191
    %v196 = vpack.c.b16 %v192, %v192
    %v197 = vpack.c.b16 %v193, %v193
    %202 = vst [vmem:[%s3] sm:$0xf] %v194
    %203 = vst [vmem:[%s3 + $0x4] sm:$0xf] %v195
    %204 = vst [vmem:[%s3 + $0x8] sm:$0xf] %v196
    %205 = vst [vmem:[%s3 + $0xc] sm:$0xf] %v197
  $region21: #{_lambda_.47} parent=0 // pred_fallthru
    _
  // Predicated region
  $region22: #{_lambda_.47} parent=0 // pred_check
    _
  $region23: #{_lambda_.47} parent=0 // pred_check_branch
    %207 = sbr.rel (0) target = $region25
  $region24: #{_lambda_.47} parent=0 // pred_region
    _
  $region25: #{_lambda_.47} parent=0 // pred_fallthru
    _
  // Predicated region
  $region26: #{_lambda_.47} parent=0 // pred_check
    _
  $region27: #{_lambda_.47} parent=0 // pred_check_branch
    %209 = sbr.rel (0) target = $region29
  $region28: #{_lambda_.47} parent=0 // pred_region
    _
  $region29: #{_lambda_.47} parent=0 // pred_fallthru
    _

// kernel: _lambda_.44
$region0: #{_lambda_.44}
  #allocation0 [shape = 'u32[]', space=smem, size = 0x4, offset = 0x4, fixed_abs, tag = 'smem constant byte address 0x4 - core index']
  #allocation1 [shape = 'u32[144,128]{1,0:T(1,128)}', space=vmem, size = 0x12000, scoped, tag = 'internal scratch']
  #allocation2 [shape = 'f32[4,16,1]{2,1,0:T(8,128)}', space=vmem, size = 0x8000, scoped, tag = 'scratch operand']
  #allocation3 [shape = 'f32[4,16,1]{2,1,0:T(8,128)}', space=vmem, size = 0x8000, scoped, tag = 'scratch operand']
  #allocation4 [shape = 'f32[4,16,8]{2,1,0:T(8,128)}', space=vmem, size = 0x8000, scoped, tag = 'scratch operand']
  %s0 = inlined_call_operand.vmem [shape: bf16[2,4,16,8], index: 0, kind: input, shape index: {}]
  %s1 = inlined_call_operand.vmem [shape: bf16[2,4,16,8], index: 1, kind: input, shape index: {}]
  %s2 = inlined_call_operand.vmem [shape: bf16[2,4,16,8], index: 2, kind: input, shape index: {}]
  %s3 = inlined_call_operand.vmem [shape: f32[2,1,16], index: 3, kind: input, shape index: {}]
  %s4 = inlined_call_operand.vmem [shape: bf16[2,4,16,8], index: 4, kind: output, shape index: {}]
  %s5 = sld [smem:[#allocation0]]
  $region57: #{_lambda_.44} parent=0
    _
  %s7 = ssub.s32 1, %s5
  %s8 = scalar_select 0, %s7, %s5
  loop: start=0, step=1, limit=4
  $region2: #{_lambda_.44} parent=0 // loop_pre_header
    _
  $region3: #{_lambda_.44} parent=0 // loop_header
    %s10 = sphi 0, %s14
    %p11 = scmp.ge.s32.totalorder %s10, 4
    %s17 = sphi 0, %s36
    %s18 = sphi 0, %s32
    %s19 = sphi 0, %s28
    %s20 = sphi 0, %s17
    %s21 = sphi 0, %s18
    %s22 = sphi 0, %s19
    %s23 = sphi 0, %s20
    %s24 = sphi 0, %s21
    %s25 = sphi 0, %s22
    %s41 = sphi 0, %s43
    %s44 = sphi 0, %s41
    %s45 = sphi 0, %s44
    %s61 = sphi 0, %s45
    %s69 = sphi 0, %s71
    %s72 = sphi 0, %s69
    %s73 = sphi 0, %s72
    %s89 = sphi 0, %s73
    %s97 = sphi 0, %s99
    %s100 = sphi 0, %s97
    %s101 = sphi 0, %s100
    %s117 = sphi 0, %s101
    %s125 = sphi 0, %s127
    %s128 = sphi 0, %s125
    %s129 = sphi 0, %s128
    %s145 = sphi 0, %s129
    %s153 = sphi 0, %s155
    %s156 = sphi 0, %s153
    %s157 = sphi 0, %s156
    %s173 = sphi 0, %s157
  $region4: #{_lambda_.44} parent=0 // loop_header_branch
    %13 = sbr.rel (%p11) target = $region8
  $region5: #{_lambda_.44} parent=0 // loop_body
    %s15 = ssub.s32 %s10, 1
    %s16 = ssub.s32 %s10, 2
    %s26 = sadd.s32 1, %s19
    %p27 = scmp.ge.s32.totalorder %s26, 1
    %s28 = scalar_select %p27, 0, %s26
    %s29 = sadd.s32 1, %s18
    %s30 = scalar_select %p27, %s29, %s18
    %p31 = scmp.ge.s32.totalorder %s30, 1
    %s32 = scalar_select %p31, 0, %s30
    %s33 = sadd.s32 1, %s17
    %s34 = scalar_select %p31, %s33, %s17
    %p35 = scmp.ge.s32.totalorder %s34, 2
    %s36 = scalar_select %p35, 0, %s34
    %s37 = ssub.s32 %s17, %s36
    %s38 = ssub.s32 %s18, %s32
    %s39 = sor.u32 %s37, %s38
    %p40 = scmp.eq.s32.totalorder %s39, 0
    %s42 = sadd.s32 %s41, 1
    %s43 = scalar_select %p40, %s41, %s42
    %p46 = pneg %p40
    %p47 = scmp.eq.s32.totalorder %s10, 1
    %p48 = por %p46, %p47
    %p49 = scmp.ne.s32.totalorder %s41, %s44
    %p50 = scmp.eq.s32.totalorder %s10, 0
    %p51 = por %p49, %p50
    %p52 = scmp.ne.s32.totalorder %s41, %s44
    %p53 = scmp.eq.s32.totalorder %s15, 1
    %p54 = por %p52, %p53
    %p55 = scmp.ne.s32.totalorder %s44, %s45
    %p56 = scmp.eq.s32.totalorder %s15, 0
    %p57 = por %p55, %p56
    %p58 = scmp.ne.s32.totalorder %s44, %s45
    %p59 = scmp.eq.s32.totalorder %s16, 1
    %p60 = por %p58, %p59
    %p62 = scmp.ne.s32.totalorder %s45, %s61
    %p63 = scmp.eq.s32.totalorder %s16, 0
    %p64 = por %p62, %p63
    %s65 = ssub.s32 %s17, %s36
    %s66 = ssub.s32 %s19, %s28
    %s67 = sor.u32 %s65, %s66
    %p68 = scmp.eq.s32.totalorder %s67, 0
    %s70 = sadd.s32 %s69, 1
    %s71 = scalar_select %p68, %s69, %s70
    %p74 = pneg %p68
    %p75 = scmp.eq.s32.totalorder %s10, 1
    %p76 = por %p74, %p75
    %p77 = scmp.ne.s32.totalorder %s69, %s72
    %p78 = scmp.eq.s32.totalorder %s10, 0
    %p79 = por %p77, %p78
    %p80 = scmp.ne.s32.totalorder %s69, %s72
    %p81 = scmp.eq.s32.totalorder %s15, 1
    %p82 = por %p80, %p81
    %p83 = scmp.ne.s32.totalorder %s72, %s73
    %p84 = scmp.eq.s32.totalorder %s15, 0
    %p85 = por %p83, %p84
    %p86 = scmp.ne.s32.totalorder %s72, %s73
    %p87 = scmp.eq.s32.totalorder %s16, 1
    %p88 = por %p86, %p87
    %p90 = scmp.ne.s32.totalorder %s73, %s89
    %p91 = scmp.eq.s32.totalorder %s16, 0
    %p92 = por %p90, %p91
    %s93 = ssub.s32 %s17, %s36
    %s94 = ssub.s32 %s19, %s28
    %s95 = sor.u32 %s93, %s94
    %p96 = scmp.eq.s32.totalorder %s95, 0
    %s98 = sadd.s32 %s97, 1
    %s99 = scalar_select %p96, %s97, %s98
    %p102 = pneg %p96
    %p103 = scmp.eq.s32.totalorder %s10, 1
    %p104 = por %p102, %p103
    %p105 = scmp.ne.s32.totalorder %s97, %s100
    %p106 = scmp.eq.s32.totalorder %s10, 0
    %p107 = por %p105, %p106
    %p108 = scmp.ne.s32.totalorder %s97, %s100
    %p109 = scmp.eq.s32.totalorder %s15, 1
    %p110 = por %p108, %p109
    %p111 = scmp.ne.s32.totalorder %s100, %s101
    %p112 = scmp.eq.s32.totalorder %s15, 0
    %p113 = por %p111, %p112
    %p114 = scmp.ne.s32.totalorder %s100, %s101
    %p115 = scmp.eq.s32.totalorder %s16, 1
    %p116 = por %p114, %p115
    %p118 = scmp.ne.s32.totalorder %s101, %s117
    %p119 = scmp.eq.s32.totalorder %s16, 0
    %p120 = por %p118, %p119
    %s121 = ssub.s32 %s17, %s36
    %s122 = ssub.s32 %s19, %s28
    %s123 = sor.u32 %s121, %s122
    %p124 = scmp.eq.s32.totalorder %s123, 0
    %s126 = sadd.s32 %s125, 1
    %s127 = scalar_select %p124, %s125, %s126
    %p130 = pneg %p124
    %p131 = scmp.eq.s32.totalorder %s10, 1
    %p132 = por %p130, %p131
    %p133 = scmp.ne.s32.totalorder %s125, %s128
    %p134 = scmp.eq.s32.totalorder %s10, 0
    %p135 = por %p133, %p134
    %p136 = scmp.ne.s32.totalorder %s125, %s128
    %p137 = scmp.eq.s32.totalorder %s15, 1
    %p138 = por %p136, %p137
    %p139 = scmp.ne.s32.totalorder %s128, %s129
    %p140 = scmp.eq.s32.totalorder %s15, 0
    %p141 = por %p139, %p140
    %p142 = scmp.ne.s32.totalorder %s128, %s129
    %p143 = scmp.eq.s32.totalorder %s16, 1
    %p144 = por %p142, %p143
    %p146 = scmp.ne.s32.totalorder %s129, %s145
    %p147 = scmp.eq.s32.totalorder %s16, 0
    %p148 = por %p146, %p147
    %s149 = ssub.s32 %s17, %s36
    %s150 = ssub.s32 %s18, %s32
    %s151 = sor.u32 %s149, %s150
    %p152 = scmp.eq.s32.totalorder %s151, 0
    %s154 = sadd.s32 %s153, 1
    %s155 = scalar_select %p152, %s153, %s154
    %p158 = pneg %p152
    %p159 = scmp.eq.s32.totalorder %s10, 1
    %p160 = por %p158, %p159
    %p161 = scmp.ne.s32.totalorder %s153, %s156
    %p162 = scmp.eq.s32.totalorder %s10, 0
    %p163 = por %p161, %p162
    %p164 = scmp.ne.s32.totalorder %s153, %s156
    %p165 = scmp.eq.s32.totalorder %s15, 1
    %p166 = por %p164, %p165
    %p167 = scmp.ne.s32.totalorder %s156, %s157
    %p168 = scmp.eq.s32.totalorder %s15, 0
    %p169 = por %p167, %p168
    %p170 = scmp.ne.s32.totalorder %s156, %s157
    %p171 = scmp.eq.s32.totalorder %s16, 1
    %p172 = por %p170, %p171
    %p174 = scmp.ne.s32.totalorder %s157, %s173
    %p175 = scmp.eq.s32.totalorder %s16, 0
    %p176 = por %p174, %p175
    %p177 = scmp.le.s32.totalorder 1, %s10
    %p178 = scmp.lt.s32.totalorder %s10, 3
    %p179 = pnand %p177, %p178
    %p180 = pneg %p179
    // Predicated region
    $region9: #{_lambda_.44} parent=5 // pred_check
      _
    $region10: #{_lambda_.44} parent=5 // pred_check_branch
      %182 = sbr.rel (%p179) target = $region12
    $region11: #{_lambda_.44} parent=5 // pred_region
      %s183 = ssub.s32 %s10, 1
    $region12: #{_lambda_.44} parent=5 // pred_fallthru
      _
    %p184 = scmp.lt.s32.totalorder %s10, 2
    // Predicated region
    $region13: #{_lambda_.44} parent=5 // pred_check
      %p185 = pneg %p184
    $region14: #{_lambda_.44} parent=5 // pred_check_branch
      %187 = sbr.rel (%p185) target = $region16
    $region15: #{_lambda_.44} parent=5 // pred_region
      // Predicated region
      $region17: #{_lambda_.44} parent=15 // pred_check
        %p188 = pneg %p51
      $region18: #{_lambda_.44} parent=15 // pred_check_branch
        %190 = sbr.rel (%p188) target = $region20
      $region19: #{_lambda_.44} parent=15 // pred_region
        %s191 = smul.u32 2, %s18
        %p192 = scmp.lt.s32.totalorder %s17, 1
        %s193 = scalar_select %p192, %s17, 1
        %p194 = scmp.lt.s32.totalorder %s191, 1
        %s195 = scalar_select %p194, %s191, 1
        %s196 = smul.addr %s193, 8
        %s197 = sadd.s32 %s195, %s196
        %s198 = smul.addr %s197, 4
        %s199 = scalar_lea.vmem %s0, %s198
        %s200 = smul.u32 2, %s18
      $region20: #{_lambda_.44} parent=15 // pred_fallthru
        _
      // Predicated region
      $region21: #{_lambda_.44} parent=15 // pred_check
        %p201 = pneg %p79
      $region22: #{_lambda_.44} parent=15 // pred_check_branch
        %203 = sbr.rel (%p201) target = $region24
      $region23: #{_lambda_.44} parent=15 // pred_region
        %s204 = smul.u32 2, %s19
        %p205 = scmp.lt.s32.totalorder %s17, 1
        %s206 = scalar_select %p205, %s17, 1
        %p207 = scmp.lt.s32.totalorder %s204, 1
        %s208 = scalar_select %p207, %s204, 1
        %s209 = smul.addr %s206, 8
        %s210 = sadd.s32 %s208, %s209
        %s211 = smul.addr %s210, 4
        %s212 = scalar_lea.vmem %s1, %s211
        %s213 = smul.u32 2, %s19
      $region24: #{_lambda_.44} parent=15 // pred_fallthru
        _
      // Predicated region
      $region25: #{_lambda_.44} parent=15 // pred_check
        %p214 = pneg %p107
      $region26: #{_lambda_.44} parent=15 // pred_check_branch
        %216 = sbr.rel (%p214) target = $region28
      $region27: #{_lambda_.44} parent=15 // pred_region
        %s217 = smul.u32 2, %s19
        %p218 = scmp.lt.s32.totalorder %s17, 1
        %s219 = scalar_select %p218, %s17, 1
        %p220 = scmp.lt.s32.totalorder %s217, 1
        %s221 = scalar_select %p220, %s217, 1
        %s222 = smul.addr %s219, 8
        %s223 = sadd.s32 %s221, %s222
        %s224 = smul.addr %s223, 4
        %s225 = scalar_lea.vmem %s2, %s224
        %s226 = smul.u32 2, %s19
      $region28: #{_lambda_.44} parent=15 // pred_fallthru
        _
      // Predicated region
      $region29: #{_lambda_.44} parent=15 // pred_check
        %p227 = pneg %p135
      $region30: #{_lambda_.44} parent=15 // pred_check_branch
        %229 = sbr.rel (%p227) target = $region32
      $region31: #{_lambda_.44} parent=15 // pred_region
        %p230 = scmp.lt.s32.totalorder %s17, 1
        %s231 = scalar_select %p230, %s17, 1
        %p232 = scmp.lt.s32.totalorder %s19, 0
        %s233 = scalar_select %p232, %s19, 0
        %s234 = sadd.s32 %s233, %s231
        %s235 = scalar_lea.vmem %s3, %s234
      $region32: #{_lambda_.44} parent=15 // pred_fallthru
        _
    $region16: #{_lambda_.44} parent=5 // pred_fallthru
      _
    %p236 = scmp.le.s32.totalorder 1, %s10
    %p237 = scmp.lt.s32.totalorder %s10, 3
    %p238 = pnand %p236, %p237
    %p239 = pneg %p238
    // Predicated region
    $region33: #{_lambda_.44} parent=5 // pred_check
      _
    $region34: #{_lambda_.44} parent=5 // pred_check_branch
      %241 = sbr.rel (%p238) target = $region36
    $region35: #{_lambda_.44} parent=5 // pred_region
      %s242 = ssub.s32 %s10, 1
      %s243 = smul.u32 2, %s21
      %p244 = scmp.lt.s32.totalorder %s20, 1
      %s245 = scalar_select %p244, %s20, 1
      %p246 = scmp.lt.s32.totalorder %s243, 1
      %s247 = scalar_select %p246, %s243, 1
      %s248 = smul.addr %s245, 8
      %s249 = sadd.s32 %s247, %s248
      %s250 = smul.addr %s249, 4
      %s251 = scalar_lea.vmem %s0, %s250
      %p252 = pneg %p57
      %p253 = pneg %p54
      %s254 = smul.u32 2, %s22
      %p255 = scmp.lt.s32.totalorder %s20, 1
      %s256 = scalar_select %p255, %s20, 1
      %p257 = scmp.lt.s32.totalorder %s254, 1
      %s258 = scalar_select %p257, %s254, 1
      %s259 = smul.addr %s256, 8
      %s260 = sadd.s32 %s258, %s259
      %s261 = smul.addr %s260, 4
      %s262 = scalar_lea.vmem %s1, %s261
      %p263 = pneg %p85
      %p264 = pneg %p82
      %s265 = smul.u32 2, %s22
      %p266 = scmp.lt.s32.totalorder %s20, 1
      %s267 = scalar_select %p266, %s20, 1
      %p268 = scmp.lt.s32.totalorder %s265, 1
      %s269 = scalar_select %p268, %s265, 1
      %s270 = smul.addr %s267, 8
      %s271 = sadd.s32 %s269, %s270
      %s272 = smul.addr %s271, 4
      %s273 = scalar_lea.vmem %s2, %s272
      %p274 = pneg %p113
      %p275 = pneg %p110
      %p276 = scmp.lt.s32.totalorder %s20, 1
      %s277 = scalar_select %p276, %s20, 1
      %p278 = scmp.lt.s32.totalorder %s22, 0
      %s279 = scalar_select %p278, %s22, 0
      %s280 = sadd.s32 %s279, %s277
      %s281 = scalar_lea.vmem %s3, %s280
      %p282 = pneg %p141
      %p283 = pneg %p138
      %p284 = pneg %p169
      %p285 = pneg %p166
      %s286 = smul.u32 2, %s21
      %p287 = scmp.lt.s32.totalorder %s20, 1
      %s288 = scalar_select %p287, %s20, 1
      %p289 = scmp.lt.s32.totalorder %s286, 1
      %s290 = scalar_select %p289, %s286, 1
      %s291 = smul.addr %s288, 8
      %s292 = sadd.s32 %s290, %s291
      %s293 = smul.addr %s292, 4
      %s294 = scalar_lea.vmem %s4, %s293
      %s295 = smul.u32 2, %s21
      %p296 = scmp.lt.s32.totalorder %s20, 1
      %s297 = scalar_select %p296, %s20, 1
      %p298 = scmp.lt.s32.totalorder %s295, 1
      %s299 = scalar_select %p298, %s295, 1
      %s300 = smul.addr %s297, 8
      %s301 = sadd.s32 %s299, %s300
      %s302 = smul.addr %s301, 4
      %s303 = scalar_lea.vmem %s0, %s302
      %s304 = smul.u32 2, %s21
      %s305 = smul.u32 2, %s22
      %p306 = scmp.lt.s32.totalorder %s20, 1
      %s307 = scalar_select %p306, %s20, 1
      %p308 = scmp.lt.s32.totalorder %s305, 1
      %s309 = scalar_select %p308, %s305, 1
      %s310 = smul.addr %s307, 8
      %s311 = sadd.s32 %s309, %s310
      %s312 = smul.addr %s311, 4
      %s313 = scalar_lea.vmem %s1, %s312
      %s314 = smul.u32 2, %s22
      %s315 = smul.u32 2, %s22
      %p316 = scmp.lt.s32.totalorder %s20, 1
      %s317 = scalar_select %p316, %s20, 1
      %p318 = scmp.lt.s32.totalorder %s315, 1
      %s319 = scalar_select %p318, %s315, 1
      %s320 = smul.addr %s317, 8
      %s321 = sadd.s32 %s319, %s320
      %s322 = smul.addr %s321, 4
      %s323 = scalar_lea.vmem %s2, %s322
      %s324 = smul.u32 2, %s22
      %p325 = scmp.lt.s32.totalorder %s20, 1
      %s326 = scalar_select %p325, %s20, 1
      %p327 = scmp.lt.s32.totalorder %s22, 0
      %s328 = scalar_select %p327, %s22, 0
      %s329 = sadd.s32 %s328, %s326
      %s330 = scalar_lea.vmem %s3, %s329
      %s331 = smul.u32 2, %s21
      %p332 = scmp.lt.s32.totalorder %s20, 1
      %s333 = scalar_select %p332, %s20, 1
      %p334 = scmp.lt.s32.totalorder %s331, 1
      %s335 = scalar_select %p334, %s331, 1
      %s336 = smul.addr %s333, 8
      %s337 = sadd.s32 %s335, %s336
      %s338 = smul.addr %s337, 4
      %s339 = scalar_lea.vmem %s4, %s338
      %s340 = smul.u32 2, %s21
      %p342 = scmp.eq.s32.totalorder %s22, 0
      // Predicated region
      $region37: #{_lambda_.44} parent=35 // pred_check
        %p343 = pneg %p342
      $region38: #{_lambda_.44} parent=35 // pred_check_branch
        %345 = sbr.rel (%p343) target = $region40
      $region39: #{_lambda_.44} parent=35 // pred_region
        %vm346 = vcmask 7168
        %347 = vst.msk [vmem:[#allocation2] sm:$0xff] %vm346, -1e+09
        %348 = vst.msk [vmem:[#allocation2 + $0x8] sm:$0xff] %vm346, -1e+09
        %349 = vst.msk [vmem:[#allocation2 + $0x10] sm:$0xff] %vm346, -1e+09
        %350 = vst.msk [vmem:[#allocation2 + $0x18] sm:$0xff] %vm346, -1e+09
        %351 = vst.msk [vmem:[#allocation2 + $0x20] sm:$0xff] %vm346, -1e+09
        %352 = vst.msk [vmem:[#allocation2 + $0x28] sm:$0xff] %vm346, -1e+09
        %353 = vst.msk [vmem:[#allocation2 + $0x30] sm:$0xff] %vm346, -1e+09
        %354 = vst.msk [vmem:[#allocation2 + $0x38] sm:$0xff] %vm346, -1e+09
        %355 = vst.msk [vmem:[#allocation3] sm:$0xff] %vm346, 0.0
        %356 = vst.msk [vmem:[#allocation3 + $0x8] sm:$0xff] %vm346, 0.0
        %357 = vst.msk [vmem:[#allocation3 + $0x10] sm:$0xff] %vm346, 0.0
        %358 = vst.msk [vmem:[#allocation3 + $0x18] sm:$0xff] %vm346, 0.0
        %359 = vst.msk [vmem:[#allocation3 + $0x20] sm:$0xff] %vm346, 0.0
        %360 = vst.msk [vmem:[#allocation3 + $0x28] sm:$0xff] %vm346, 0.0
        %361 = vst.msk [vmem:[#allocation3 + $0x30] sm:$0xff] %vm346, 0.0
        %362 = vst.msk [vmem:[#allocation3 + $0x38] sm:$0xff] %vm346, 0.0
        %vm363 = vcmask 64512
        %364 = vst.msk [vmem:[#allocation4] sm:$0xff] %vm363, 0.0
        %365 = vst.msk [vmem:[#allocation4 + $0x8] sm:$0xff] %vm363, 0.0
        %366 = vst.msk [vmem:[#allocation4 + $0x10] sm:$0xff] %vm363, 0.0
        %367 = vst.msk [vmem:[#allocation4 + $0x18] sm:$0xff] %vm363, 0.0
        %368 = vst.msk [vmem:[#allocation4 + $0x20] sm:$0xff] %vm363, 0.0
        %369 = vst.msk [vmem:[#allocation4 + $0x28] sm:$0xff] %vm363, 0.0
        %370 = vst.msk [vmem:[#allocation4 + $0x30] sm:$0xff] %vm363, 0.0
        %371 = vst.msk [vmem:[#allocation4 + $0x38] sm:$0xff] %vm363, 0.0
      $region40: #{_lambda_.44} parent=35 // pred_fallthru
        _
      %v372 = vld [vmem:[%s303] sm:$0xf]
      %v373 = vld [vmem:[%s303 + $0x4] sm:$0xf]
      %v374 = vld [vmem:[%s303 + $0x8] sm:$0xf]
      %v375 = vld [vmem:[%s303 + $0xc] sm:$0xf]
      %v376 = vld [vmem:[%s303 + $0x10] sm:$0xf]
      %v377 = vld [vmem:[%s303 + $0x14] sm:$0xf]
      %v378 = vld [vmem:[%s303 + $0x18] sm:$0xf]
      %v379 = vld [vmem:[%s303 + $0x1c] sm:$0xf]
      %v380 = vld [vmem:[%s313] sm:$0xf]
      %v381 = vld [vmem:[%s313 + $0x4] sm:$0xf]
      %v382 = vld [vmem:[%s313 + $0x8] sm:$0xf]
      %v383 = vld [vmem:[%s313 + $0xc] sm:$0xf]
      %v384 = vld [vmem:[%s313 + $0x10] sm:$0xf]
      %v385 = vld [vmem:[%s313 + $0x14] sm:$0xf]
      %v386 = vld [vmem:[%s313 + $0x18] sm:$0xf]
      %v387 = vld [vmem:[%s313 + $0x1c] sm:$0xf]
      %v390 = vunpack.c.l.b16 %v372
      %v391 = vunpack.c.l.b16 %v373
      %v392 = vpack.c.b16 %v391, %v390
      %v395 = vunpack.c.l.b16 %v380
      %v396 = vunpack.c.l.b16 %v381
      %v397 = vpack.c.b16 %v396, %v395
      %vm398 = vcmask 64512
      %v400 = vsel %vm398, %v392, 0
      %v403 = vsel %vm398, %v397, 0
      %405 = vmatprep.subr.bf16.mxu0 0
      %406 = vmatpush1.bf16.xpose.msra.mxu0 %v403
      %407 = vmatprep.subr.bf16.mxu0 0
      %408 = vmatpush1.bf16.xpose.msra.mxu0 0
      %409 = vmatprep.subr.bf16.mxu0 0
      %410 = vmatpush1.bf16.xpose.msra.mxu0 0
      %411 = vmatprep.subr.bf16.mxu0 0
      %412 = vmatpush1.bf16.xpose.msra.mxu0 0
      %413 = vmatprep.subr.bf16.mxu0 0
      %414 = vmatpush1.bf16.xpose.msra.mxu0 0
      %415 = vmatprep.subr.bf16.mxu0 0
      %416 = vmatpush1.bf16.xpose.msra.mxu0 0
      %417 = vmatprep.subr.bf16.mxu0 0
      %418 = vmatpush1.bf16.xpose.msra.mxu0 0
      %419 = vmatprep.subr.bf16.mxu0 0
      %420 = vmatpush1.bf16.xpose.msra.mxu0 0
      %421 = vmatprep.subr.bf16.mxu0 0
      %422 = vmatpush1.bf16.xpose.msra.mxu0 0
      %423 = vmatprep.subr.bf16.mxu0 0
      %424 = vmatpush1.bf16.xpose.msra.mxu0 0
      %425 = vmatprep.subr.bf16.mxu0 0
      %426 = vmatpush1.bf16.xpose.msra.mxu0 0
      %427 = vmatprep.subr.bf16.mxu0 0
      %428 = vmatpush1.bf16.xpose.msra.mxu0 0
      %429 = vmatprep.subr.bf16.mxu0 0
      %430 = vmatpush1.bf16.xpose.msra.mxu0 0
      %431 = vmatprep.subr.bf16.mxu0 0
      %432 = vmatpush1.bf16.xpose.msra.mxu0 0
      %433 = vmatprep.subr.bf16.mxu0 0
      %434 = vmatpush1.bf16.xpose.msra.mxu0 0
      %435 = vmatprep.subr.bf16.mxu0 0
      %436 = vmatpush1.bf16.xpose.msra.mxu0 0
      %437 = vmatprep.mubr.bf16.mxu0 0
      %438 = vmatmul.mubr.bf16.gmra.mrb[0].mxu0 %v400
      %v439 = vpop.f32.mrb[0].mxu0
      %v440 = vadd.f32 0.0, %v439
      %v441 = vpop.f32.mrb[0].mxu0
      %v442 = vpop.f32.mrb[0].mxu0
      %v443 = vadd.f32 0.0, %v442
      %v444 = vpop.f32.mrb[0].mxu0
      %445 = vdwg.mxu0
      %v448 = vunpack.c.l.b16 %v374
      %v449 = vunpack.c.l.b16 %v375
      %v450 = vpack.c.b16 %v449, %v448
      %v453 = vunpack.c.l.b16 %v382
      %v454 = vunpack.c.l.b16 %v383
      %v455 = vpack.c.b16 %v454, %v453
      %v457 = vsel %vm398, %v450, 0
      %v460 = vsel %vm398, %v455, 0
      %462 = vmatprep.subr.bf16.mxu0 0
      %463 = vmatpush1.bf16.xpose.msra.mxu0 %v460
      %464 = vmatprep.subr.bf16.mxu0 0
      %465 = vmatpush1.bf16.xpose.msra.mxu0 0
      %466 = vmatprep.subr.bf16.mxu0 0
      %467 = vmatpush1.bf16.xpose.msra.mxu0 0
      %468 = vmatprep.subr.bf16.mxu0 0
      %469 = vmatpush1.bf16.xpose.msra.mxu0 0
      %470 = vmatprep.subr.bf16.mxu0 0
      %471 = vmatpush1.bf16.xpose.msra.mxu0 0
      %472 = vmatprep.subr.bf16.mxu0 0
      %473 = vmatpush1.bf16.xpose.msra.mxu0 0
      %474 = vmatprep.subr.bf16.mxu0 0
      %475 = vmatpush1.bf16.xpose.msra.mxu0 0
      %476 = vmatprep.subr.bf16.mxu0 0
      %477 = vmatpush1.bf16.xpose.msra.mxu0 0
      %478 = vmatprep.subr.bf16.mxu0 0
      %479 = vmatpush1.bf16.xpose.msra.mxu0 0
      %480 = vmatprep.subr.bf16.mxu0 0
      %481 = vmatpush1.bf16.xpose.msra.mxu0 0
      %482 = vmatprep.subr.bf16.mxu0 0
      %483 = vmatpush1.bf16.xpose.msra.mxu0 0
      %484 = vmatprep.subr.bf16.mxu0 0
      %485 = vmatpush1.bf16.xpose.msra.mxu0 0
      %486 = vmatprep.subr.bf16.mxu0 0
      %487 = vmatpush1.bf16.xpose.msra.mxu0 0
      %488 = vmatprep.subr.bf16.mxu0 0
      %489 = vmatpush1.bf16.xpose.msra.mxu0 0
      %490 = vmatprep.subr.bf16.mxu0 0
      %491 = vmatpush1.bf16.xpose.msra.mxu0 0
      %492 = vmatprep.subr.bf16.mxu0 0
      %493 = vmatpush1.bf16.xpose.msra.mxu0 0
      %494 = vmatprep.mubr.bf16.mxu0 0
      %495 = vmatmul.mubr.bf16.gmra.mrb[0].mxu0 %v457
      %v496 = vpop.f32.mrb[0].mxu0
      %v497 = vadd.f32 0.0, %v496
      %v498 = vpop.f32.mrb[0].mxu0
      %v499 = vpop.f32.mrb[0].mxu0
      %v500 = vadd.f32 0.0, %v499
      %v501 = vpop.f32.mrb[0].mxu0
      %502 = vdwg.mxu0
      %v505 = vunpack.c.l.b16 %v376
      %v506 = vunpack.c.l.b16 %v377
      %v507 = vpack.c.b16 %v506, %v505
      %v510 = vunpack.c.l.b16 %v384
      %v511 = vunpack.c.l.b16 %v385
      %v512 = vpack.c.b16 %v511, %v510
      %v514 = vsel %vm398, %v507, 0
      %v517 = vsel %vm398, %v512, 0
      %519 = vmatprep.subr.bf16.mxu0 0
      %520 = vmatpush1.bf16.xpose.msra.mxu0 %v517
      %521 = vmatprep.subr.bf16.mxu0 0
      %522 = vmatpush1.bf16.xpose.msra.mxu0 0
      %523 = vmatprep.subr.bf16.mxu0 0
      %524 = vmatpush1.bf16.xpose.msra.mxu0 0
      %525 = vmatprep.subr.bf16.mxu0 0
      %526 = vmatpush1.bf16.xpose.msra.mxu0 0
      %527 = vmatprep.subr.bf16.mxu0 0
      %528 = vmatpush1.bf16.xpose.msra.mxu0 0
      %529 = vmatprep.subr.bf16.mxu0 0
      %530 = vmatpush1.bf16.xpose.msra.mxu0 0
      %531 = vmatprep.subr.bf16.mxu0 0
      %532 = vmatpush1.bf16.xpose.msra.mxu0 0
      %533 = vmatprep.subr.bf16.mxu0 0
      %534 = vmatpush1.bf16.xpose.msra.mxu0 0
      %535 = vmatprep.subr.bf16.mxu0 0
      %536 = vmatpush1.bf16.xpose.msra.mxu0 0
      %537 = vmatprep.subr.bf16.mxu0 0
      %538 = vmatpush1.bf16.xpose.msra.mxu0 0
      %539 = vmatprep.subr.bf16.mxu0 0
      %540 = vmatpush1.bf16.xpose.msra.mxu0 0
      %541 = vmatprep.subr.bf16.mxu0 0
      %542 = vmatpush1.bf16.xpose.msra.mxu0 0
      %543 = vmatprep.subr.bf16.mxu0 0
      %544 = vmatpush1.bf16.xpose.msra.mxu0 0
      %545 = vmatprep.subr.bf16.mxu0 0
      %546 = vmatpush1.bf16.xpose.msra.mxu0 0
      %547 = vmatprep.subr.bf16.mxu0 0
      %548 = vmatpush1.bf16.xpose.msra.mxu0 0
      %549 = vmatprep.subr.bf16.mxu0 0
      %550 = vmatpush1.bf16.xpose.msra.mxu0 0
      %551 = vmatprep.mubr.bf16.mxu0 0
      %552 = vmatmul.mubr.bf16.gmra.mrb[0].mxu0 %v514
      %v553 = vpop.f32.mrb[0].mxu0
      %v554 = vadd.f32 0.0, %v553
      %v555 = vpop.f32.mrb[0].mxu0
      %v556 = vpop.f32.mrb[0].mxu0
      %v557 = vadd.f32 0.0, %v556
      %v558 = vpop.f32.mrb[0].mxu0
      %559 = vdwg.mxu0
      %v562 = vunpack.c.l.b16 %v378
      %v563 = vunpack.c.l.b16 %v379
      %v564 = vpack.c.b16 %v563, %v562
      %v567 = vunpack.c.l.b16 %v386
      %v568 = vunpack.c.l.b16 %v387
      %v569 = vpack.c.b16 %v568, %v567
      %v571 = vsel %vm398, %v564, 0
      %v574 = vsel %vm398, %v569, 0
      %576 = vmatprep.subr.bf16.mxu0 0
      %577 = vmatpush1.bf16.xpose.msra.mxu0 %v574
      %578 = vmatprep.subr.bf16.mxu0 0
      %579 = vmatpush1.bf16.xpose.msra.mxu0 0
      %580 = vmatprep.subr.bf16.mxu0 0
      %581 = vmatpush1.bf16.xpose.msra.mxu0 0
      %582 = vmatprep.subr.bf16.mxu0 0
      %583 = vmatpush1.bf16.xpose.msra.mxu0 0
      %584 = vmatprep.subr.bf16.mxu0 0
      %585 = vmatpush1.bf16.xpose.msra.mxu0 0
      %586 = vmatprep.subr.bf16.mxu0 0
      %587 = vmatpush1.bf16.xpose.msra.mxu0 0
      %588 = vmatprep.subr.bf16.mxu0 0
      %589 = vmatpush1.bf16.xpose.msra.mxu0 0
      %590 = vmatprep.subr.bf16.mxu0 0
      %591 = vmatpush1.bf16.xpose.msra.mxu0 0
      %592 = vmatprep.subr.bf16.mxu0 0
      %593 = vmatpush1.bf16.xpose.msra.mxu0 0
      %594 = vmatprep.subr.bf16.mxu0 0
      %595 = vmatpush1.bf16.xpose.msra.mxu0 0
      %596 = vmatprep.subr.bf16.mxu0 0
      %597 = vmatpush1.bf16.xpose.msra.mxu0 0
      %598 = vmatprep.subr.bf16.mxu0 0
      %599 = vmatpush1.bf16.xpose.msra.mxu0 0
      %600 = vmatprep.subr.bf16.mxu0 0
      %601 = vmatpush1.bf16.xpose.msra.mxu0 0
      %602 = vmatprep.subr.bf16.mxu0 0
      %603 = vmatpush1.bf16.xpose.msra.mxu0 0
      %604 = vmatprep.subr.bf16.mxu0 0
      %605 = vmatpush1.bf16.xpose.msra.mxu0 0
      %606 = vmatprep.subr.bf16.mxu0 0
      %607 = vmatpush1.bf16.xpose.msra.mxu0 0
      %608 = vmatprep.mubr.bf16.mxu0 0
      %609 = vmatmul.mubr.bf16.gmra.mrb[0].mxu0 %v571
      %v610 = vpop.f32.mrb[0].mxu0
      %v611 = vadd.f32 0.0, %v610
      %v612 = vpop.f32.mrb[0].mxu0
      %v613 = vpop.f32.mrb[0].mxu0
      %v614 = vadd.f32 0.0, %v613
      %v615 = vpop.f32.mrb[0].mxu0
      %616 = vdwg.mxu0
      %v617 = vld [vmem:[%s330] sm:$0x1]
      %vm618 = vcmp.gt.f32.partialorder %v617, 0.5
      %v619 = vsel %vm618, 1, 0
      %v620 = vlaneseq
      %v621 = vshrl.u32 %v620, 7
      %v622 = vsub.s32 0, %v621
      %v623 = vrot.slane %v619, %v622
      %vm624 = vcmp.eq.s32.totalorder %v623, 1
      %v625 = vsel %vm624, %v440, -1e+09
      %v626 = vsel %vm624, %v443, -1e+09
      %v627 = vsel %vm624, %v497, -1e+09
      %v628 = vsel %vm624, %v500, -1e+09
      %v629 = vsel %vm624, %v554, -1e+09
      %v630 = vsel %vm624, %v557, -1e+09
      %v631 = vsel %vm624, %v611, -1e+09
      %v632 = vsel %vm624, %v614, -1e+09
      %v633 = vld [vmem:[#allocation2] sm:$0xff]
      %v634 = vld [vmem:[#allocation2 + $0x8] sm:$0xff]
      %v635 = vld [vmem:[#allocation2 + $0x10] sm:$0xff]
      %v636 = vld [vmem:[#allocation2 + $0x18] sm:$0xff]
      %v637 = vld [vmem:[#allocation2 + $0x20] sm:$0xff]
      %v638 = vld [vmem:[#allocation2 + $0x28] sm:$0xff]
      %v639 = vld [vmem:[#allocation2 + $0x30] sm:$0xff]
      %v640 = vld [vmem:[#allocation2 + $0x38] sm:$0xff]
      %vm641 = vcmask 130048
      %v642 = vsel %vm641, %v625, -inf
      %643 = vmax.xlane.f32.xlu0 %v642
      %v644 = vpop.xlane.xlu0 %643
      %v645 = vsel %vm641, %v626, -inf
      %646 = vmax.xlane.f32.xlu0 %v645
      %v647 = vpop.xlane.xlu0 %646
      %v648 = vsel %vm641, %v627, -inf
      %649 = vmax.xlane.f32.xlu0 %v648
      %v650 = vpop.xlane.xlu0 %649
      %v651 = vsel %vm641, %v628, -inf
      %652 = vmax.xlane.f32.xlu0 %v651
      %v653 = vpop.xlane.xlu0 %652
      %v654 = vsel %vm641, %v629, -inf
      %655 = vmax.xlane.f32.xlu0 %v654
      %v656 = vpop.xlane.xlu0 %655
      %v657 = vsel %vm641, %v630, -inf
      %658 = vmax.xlane.f32.xlu0 %v657
      %v659 = vpop.xlane.xlu0 %658
      %v660 = vsel %vm641, %v631, -inf
      %661 = vmax.xlane.f32.xlu0 %v660
      %v662 = vpop.xlane.xlu0 %661
      %v663 = vsel %vm641, %v632, -inf
      %664 = vmax.xlane.f32.xlu0 %v663
      %v665 = vpop.xlane.xlu0 %664
      %v666 = vmax.f32 %v633, %v644
      %v667 = vmax.f32 %v634, %v647
      %v668 = vmax.f32 %v635, %v650
      %v669 = vmax.f32 %v636, %v653
      %v670 = vmax.f32 %v637, %v656
      %v671 = vmax.f32 %v638, %v659
      %v672 = vmax.f32 %v639, %v662
      %v673 = vmax.f32 %v640, %v665
      %v674 = vsub.f32 %v633, %v666
      %v675 = vsub.f32 %v634, %v667
      %v676 = vsub.f32 %v635, %v668
      %v677 = vsub.f32 %v636, %v669
      %v678 = vsub.f32 %v637, %v670
      %v679 = vsub.f32 %v638, %v671
      %v680 = vsub.f32 %v639, %v672
      %v681 = vsub.f32 %v640, %v673
      %v682 = vmul.f32 %v674, 1.442695
      %v683 = vpow.pop %v682
      %v684 = vmul.f32 %v675, 1.442695
      %v685 = vpow.pop %v684
      %v686 = vmul.f32 %v676, 1.442695
      %v687 = vpow.pop %v686
      %v688 = vmul.f32 %v677, 1.442695
      %v689 = vpow.pop %v688
      %v690 = vmul.f32 %v678, 1.442695
      %v691 = vpow.pop %v690
      %v692 = vmul.f32 %v679, 1.442695
      %v693 = vpow.pop %v692
      %v694 = vmul.f32 %v680, 1.442695
      %v695 = vpow.pop %v694
      %v696 = vmul.f32 %v681, 1.442695
      %v697 = vpow.pop %v696
      %699 = vset.pattern.permute.xlu0 0
      %700 = vperm.xlu0 %699, %v666
      %v701 = vpop.permute.xlu0 %700
      %704 = vset.pattern.permute.xlu0 0
      %705 = vperm.xlu0 %704, %v667
      %v706 = vpop.permute.xlu0 %705
      %709 = vset.pattern.permute.xlu0 0
      %710 = vperm.xlu0 %709, %v668
      %v711 = vpop.permute.xlu0 %710
      %714 = vset.pattern.permute.xlu0 0
      %715 = vperm.xlu0 %714, %v669
      %v716 = vpop.permute.xlu0 %715
      %719 = vset.pattern.permute.xlu0 0
      %720 = vperm.xlu0 %719, %v670
      %v721 = vpop.permute.xlu0 %720
      %724 = vset.pattern.permute.xlu0 0
      %725 = vperm.xlu0 %724, %v671
      %v726 = vpop.permute.xlu0 %725
      %729 = vset.pattern.permute.xlu0 0
      %730 = vperm.xlu0 %729, %v672
      %v731 = vpop.permute.xlu0 %730
      %734 = vset.pattern.permute.xlu0 0
      %735 = vperm.xlu0 %734, %v673
      %v736 = vpop.permute.xlu0 %735
      %v738 = vsub.f32 %v625, %v701
      %v739 = vsub.f32 %v626, %v706
      %v740 = vsub.f32 %v627, %v711
      %v741 = vsub.f32 %v628, %v716
      %v742 = vsub.f32 %v629, %v721
      %v743 = vsub.f32 %v630, %v726
      %v744 = vsub.f32 %v631, %v731
      %v745 = vsub.f32 %v632, %v736
      %v746 = vmul.f32 %v738, 1.442695
      %v747 = vpow.pop %v746
      %v748 = vmul.f32 %v739, 1.442695
      %v749 = vpow.pop %v748
      %v750 = vmul.f32 %v740, 1.442695
      %v751 = vpow.pop %v750
      %v752 = vmul.f32 %v741, 1.442695
      %v753 = vpow.pop %v752
      %v754 = vmul.f32 %v742, 1.442695
      %v755 = vpow.pop %v754
      %v756 = vmul.f32 %v743, 1.442695
      %v757 = vpow.pop %v756
      %v758 = vmul.f32 %v744, 1.442695
      %v759 = vpow.pop %v758
      %v760 = vmul.f32 %v745, 1.442695
      %v761 = vpow.pop %v760
      %v762 = vld [vmem:[#allocation3] sm:$0xff]
      %v763 = vld [vmem:[#allocation3 + $0x8] sm:$0xff]
      %v764 = vld [vmem:[#allocation3 + $0x10] sm:$0xff]
      %v765 = vld [vmem:[#allocation3 + $0x18] sm:$0xff]
      %v766 = vld [vmem:[#allocation3 + $0x20] sm:$0xff]
      %v767 = vld [vmem:[#allocation3 + $0x28] sm:$0xff]
      %v768 = vld [vmem:[#allocation3 + $0x30] sm:$0xff]
      %v769 = vld [vmem:[#allocation3 + $0x38] sm:$0xff]
      %v770 = vmul.f32 %v683, %v762
      %v771 = vmul.f32 %v685, %v763
      %v772 = vmul.f32 %v687, %v764
      %v773 = vmul.f32 %v689, %v765
      %v774 = vmul.f32 %v691, %v766
      %v775 = vmul.f32 %v693, %v767
      %v776 = vmul.f32 %v695, %v768
      %v777 = vmul.f32 %v697, %v769
      %v778 = vsel %vm641, %v747, 0.0
      %779 = vadd.xlane.f32.xlu0 %v778
      %v780 = vpop.xlane.xlu0 %779
      %v781 = vsel %vm641, %v749, 0.0
      %782 = vadd.xlane.f32.xlu0 %v781
      %v783 = vpop.xlane.xlu0 %782
      %v784 = vsel %vm641, %v751, 0.0
      %785 = vadd.xlane.f32.xlu0 %v784
      %v786 = vpop.xlane.xlu0 %785
      %v787 = vsel %vm641, %v753, 0.0
      %788 = vadd.xlane.f32.xlu0 %v787
      %v789 = vpop.xlane.xlu0 %788
      %v790 = vsel %vm641, %v755, 0.0
      %791 = vadd.xlane.f32.xlu0 %v790
      %v792 = vpop.xlane.xlu0 %791
      %v793 = vsel %vm641, %v757, 0.0
      %794 = vadd.xlane.f32.xlu0 %v793
      %v795 = vpop.xlane.xlu0 %794
      %v796 = vsel %vm641, %v759, 0.0
      %797 = vadd.xlane.f32.xlu0 %v796
      %v798 = vpop.xlane.xlu0 %797
      %v799 = vsel %vm641, %v761, 0.0
      %800 = vadd.xlane.f32.xlu0 %v799
      %v801 = vpop.xlane.xlu0 %800
      %v802 = vadd.f32 %v770, %v780
      %v803 = vadd.f32 %v771, %v783
      %v804 = vadd.f32 %v772, %v786
      %v805 = vadd.f32 %v773, %v789
      %v806 = vadd.f32 %v774, %v792
      %v807 = vadd.f32 %v775, %v795
      %v808 = vadd.f32 %v776, %v798
      %v809 = vadd.f32 %v777, %v801
      %vm810 = vcmask 7168
      %811 = vst.msk [vmem:[#allocation3] sm:$0xff] %vm810, %v802
      %812 = vst.msk [vmem:[#allocation3 + $0x8] sm:$0xff] %vm810, %v803
      %813 = vst.msk [vmem:[#allocation3 + $0x10] sm:$0xff] %vm810, %v804
      %814 = vst.msk [vmem:[#allocation3 + $0x18] sm:$0xff] %vm810, %v805
      %815 = vst.msk [vmem:[#allocation3 + $0x20] sm:$0xff] %vm810, %v806
      %816 = vst.msk [vmem:[#allocation3 + $0x28] sm:$0xff] %vm810, %v807
      %817 = vst.msk [vmem:[#allocation3 + $0x30] sm:$0xff] %vm810, %v808
      %818 = vst.msk [vmem:[#allocation3 + $0x38] sm:$0xff] %vm810, %v809
      %v819 = vld [vmem:[#allocation4] sm:$0xff]
      %v820 = vld [vmem:[#allocation4 + $0x8] sm:$0xff]
      %v821 = vld [vmem:[#allocation4 + $0x10] sm:$0xff]
      %v822 = vld [vmem:[#allocation4 + $0x18] sm:$0xff]
      %v823 = vld [vmem:[#allocation4 + $0x20] sm:$0xff]
      %v824 = vld [vmem:[#allocation4 + $0x28] sm:$0xff]
      %v825 = vld [vmem:[#allocation4 + $0x30] sm:$0xff]
      %v826 = vld [vmem:[#allocation4 + $0x38] sm:$0xff]
      %828 = vset.pattern.permute.xlu0 0
      %829 = vperm.xlu0 %828, %v683
      %v830 = vpop.permute.xlu0 %829
      %833 = vset.pattern.permute.xlu0 0
      %834 = vperm.xlu0 %833, %v685
      %v835 = vpop.permute.xlu0 %834
      %838 = vset.pattern.permute.xlu0 0
      %839 = vperm.xlu0 %838, %v687
      %v840 = vpop.permute.xlu0 %839
      %843 = vset.pattern.permute.xlu0 0
      %844 = vperm.xlu0 %843, %v689
      %v845 = vpop.permute.xlu0 %844
      %848 = vset.pattern.permute.xlu0 0
      %849 = vperm.xlu0 %848, %v691
      %v850 = vpop.permute.xlu0 %849
      %853 = vset.pattern.permute.xlu0 0
      %854 = vperm.xlu0 %853, %v693
      %v855 = vpop.permute.xlu0 %854
      %858 = vset.pattern.permute.xlu0 0
      %859 = vperm.xlu0 %858, %v695
      %v860 = vpop.permute.xlu0 %859
      %863 = vset.pattern.permute.xlu0 0
      %864 = vperm.xlu0 %863, %v697
      %v865 = vpop.permute.xlu0 %864
      %v867 = vmul.f32 %v830, %v819
      %v868 = vmul.f32 %v835, %v820
      %v869 = vmul.f32 %v840, %v821
      %v870 = vmul.f32 %v845, %v822
      %v871 = vmul.f32 %v850, %v823
      %v872 = vmul.f32 %v855, %v824
      %v873 = vmul.f32 %v860, %v825
      %v874 = vmul.f32 %v865, %v826
      %v875 = vpack.c.bf16 %v749, %v747
      %v876 = vpack.c.bf16 %v753, %v751
      %v877 = vpack.c.bf16 %v757, %v755
      %v878 = vpack.c.bf16 %v761, %v759
      %v879 = vld [vmem:[%s323] sm:$0xf]
      %v880 = vld [vmem:[%s323 + $0x4] sm:$0xf]
      %v881 = vld [vmem:[%s323 + $0x8] sm:$0xf]
      %v882 = vld [vmem:[%s323 + $0xc] sm:$0xf]
      %v883 = vld [vmem:[%s323 + $0x10] sm:$0xf]
      %v884 = vld [vmem:[%s323 + $0x14] sm:$0xf]
      %v885 = vld [vmem:[%s323 + $0x18] sm:$0xf]
      %v886 = vld [vmem:[%s323 + $0x1c] sm:$0xf]
      %v889 = vunpack.c.l.b16 %v879
      %v890 = vunpack.c.l.b16 %v880
      %v891 = vpack.c.b16 %v890, %v889
      %v894 = vsel %vm641, %v875, 0
      %896 = vmatprep.subr.bf16.mxu0 0
      %897 = vmatpush1.bf16.msra.mxu0 %v891
      %898 = vmatprep.subr.bf16.mxu0 0
      %899 = vmatpush1.bf16.msra.mxu0 0
      %900 = vmatprep.subr.bf16.mxu0 0
      %901 = vmatpush1.bf16.msra.mxu0 0
      %902 = vmatprep.subr.bf16.mxu0 0
      %903 = vmatpush1.bf16.msra.mxu0 0
      %904 = vmatprep.subr.bf16.mxu0 0
      %905 = vmatpush1.bf16.msra.mxu0 0
      %906 = vmatprep.subr.bf16.mxu0 0
      %907 = vmatpush1.bf16.msra.mxu0 0
      %908 = vmatprep.subr.bf16.mxu0 0
      %909 = vmatpush1.bf16.msra.mxu0 0
      %910 = vmatprep.subr.bf16.mxu0 0
      %911 = vmatpush1.bf16.msra.mxu0 0
      %912 = vmatprep.subr.bf16.mxu0 0
      %913 = vmatpush1.bf16.msra.mxu0 0
      %914 = vmatprep.subr.bf16.mxu0 0
      %915 = vmatpush1.bf16.msra.mxu0 0
      %916 = vmatprep.subr.bf16.mxu0 0
      %917 = vmatpush1.bf16.msra.mxu0 0
      %918 = vmatprep.subr.bf16.mxu0 0
      %919 = vmatpush1.bf16.msra.mxu0 0
      %920 = vmatprep.subr.bf16.mxu0 0
      %921 = vmatpush1.bf16.msra.mxu0 0
      %922 = vmatprep.subr.bf16.mxu0 0
      %923 = vmatpush1.bf16.msra.mxu0 0
      %924 = vmatprep.subr.bf16.mxu0 0
      %925 = vmatpush1.bf16.msra.mxu0 0
      %926 = vmatprep.subr.bf16.mxu0 0
      %927 = vmatpush1.bf16.msra.mxu0 0
      %928 = vmatprep.mubr.bf16.mxu0 0
      %929 = vmatmul.mubr.bf16.gmra.mrb[0].mxu0 %v894
      %v930 = vpop.f32.mrb[0].mxu0
      %v931 = vadd.f32 0.0, %v930
      %v932 = vpop.f32.mrb[0].mxu0
      %v933 = vpop.f32.mrb[0].mxu0
      %v934 = vadd.f32 0.0, %v933
      %v935 = vpop.f32.mrb[0].mxu0
      %936 = vdwg.mxu0
      %v939 = vunpack.c.l.b16 %v881
      %v940 = vunpack.c.l.b16 %v882
      %v941 = vpack.c.b16 %v940, %v939
      %v944 = vsel %vm641, %v876, 0
      %946 = vmatprep.subr.bf16.mxu0 0
      %947 = vmatpush1.bf16.msra.mxu0 %v941
      %948 = vmatprep.subr.bf16.mxu0 0
      %949 = vmatpush1.bf16.msra.mxu0 0
      %950 = vmatprep.subr.bf16.mxu0 0
      %951 = vmatpush1.bf16.msra.mxu0 0
      %952 = vmatprep.subr.bf16.mxu0 0
      %953 = vmatpush1.bf16.msra.mxu0 0
      %954 = vmatprep.subr.bf16.mxu0 0
      %955 = vmatpush1.bf16.msra.mxu0 0
      %956 = vmatprep.subr.bf16.mxu0 0
      %957 = vmatpush1.bf16.msra.mxu0 0
      %958 = vmatprep.subr.bf16.mxu0 0
      %959 = vmatpush1.bf16.msra.mxu0 0
      %960 = vmatprep.subr.bf16.mxu0 0
      %961 = vmatpush1.bf16.msra.mxu0 0
      %962 = vmatprep.subr.bf16.mxu0 0
      %963 = vmatpush1.bf16.msra.mxu0 0
      %964 = vmatprep.subr.bf16.mxu0 0
      %965 = vmatpush1.bf16.msra.mxu0 0
      %966 = vmatprep.subr.bf16.mxu0 0
      %967 = vmatpush1.bf16.msra.mxu0 0
      %968 = vmatprep.subr.bf16.mxu0 0
      %969 = vmatpush1.bf16.msra.mxu0 0
      %970 = vmatprep.subr.bf16.mxu0 0
      %971 = vmatpush1.bf16.msra.mxu0 0
      %972 = vmatprep.subr.bf16.mxu0 0
      %973 = vmatpush1.bf16.msra.mxu0 0
      %974 = vmatprep.subr.bf16.mxu0 0
      %975 = vmatpush1.bf16.msra.mxu0 0
      %976 = vmatprep.subr.bf16.mxu0 0
      %977 = vmatpush1.bf16.msra.mxu0 0
      %978 = vmatprep.mubr.bf16.mxu0 0
      %979 = vmatmul.mubr.bf16.gmra.mrb[0].mxu0 %v944
      %v980 = vpop.f32.mrb[0].mxu0
      %v981 = vadd.f32 0.0, %v980
      %v982 = vpop.f32.mrb[0].mxu0
      %v983 = vpop.f32.mrb[0].mxu0
      %v984 = vadd.f32 0.0, %v983
      %v985 = vpop.f32.mrb[0].mxu0
      %986 = vdwg.mxu0
      %v989 = vunpack.c.l.b16 %v883
      %v990 = vunpack.c.l.b16 %v884
      %v991 = vpack.c.b16 %v990, %v989
      %v994 = vsel %vm641, %v877, 0
      %996 = vmatprep.subr.bf16.mxu0 0
      %997 = vmatpush1.bf16.msra.mxu0 %v991
      %998 = vmatprep.subr.bf16.mxu0 0
      %999 = vmatpush1.bf16.msra.mxu0 0
      %1000 = vmatprep.subr.bf16.mxu0 0
      %1001 = vmatpush1.bf16.msra.mxu0 0
      %1002 = vmatprep.subr.bf16.mxu0 0
      %1003 = vmatpush1.bf16.msra.mxu0 0
      %1004 = vmatprep.subr.bf16.mxu0 0
      %1005 = vmatpush1.bf16.msra.mxu0 0
      %1006 = vmatprep.subr.bf16.mxu0 0
      %1007 = vmatpush1.bf16.msra.mxu0 0
      %1008 = vmatprep.subr.bf16.mxu0 0
      %1009 = vmatpush1.bf16.msra.mxu0 0
      %1010 = vmatprep.subr.bf16.mxu0 0
      %1011 = vmatpush1.bf16.msra.mxu0 0
      %1012 = vmatprep.subr.bf16.mxu0 0
      %1013 = vmatpush1.bf16.msra.mxu0 0
      %1014 = vmatprep.subr.bf16.mxu0 0
      %1015 = vmatpush1.bf16.msra.mxu0 0
      %1016 = vmatprep.subr.bf16.mxu0 0
      %1017 = vmatpush1.bf16.msra.mxu0 0
      %1018 = vmatprep.subr.bf16.mxu0 0
      %1019 = vmatpush1.bf16.msra.mxu0 0
      %1020 = vmatprep.subr.bf16.mxu0 0
      %1021 = vmatpush1.bf16.msra.mxu0 0
      %1022 = vmatprep.subr.bf16.mxu0 0
      %1023 = vmatpush1.bf16.msra.mxu0 0
      %1024 = vmatprep.subr.bf16.mxu0 0
      %1025 = vmatpush1.bf16.msra.mxu0 0
      %1026 = vmatprep.subr.bf16.mxu0 0
      %1027 = vmatpush1.bf16.msra.mxu0 0
      %1028 = vmatprep.mubr.bf16.mxu0 0
      %1029 = vmatmul.mubr.bf16.gmra.mrb[0].mxu0 %v994
      %v1030 = vpop.f32.mrb[0].mxu0
      %v1031 = vadd.f32 0.0, %v1030
      %v1032 = vpop.f32.mrb[0].mxu0
      %v1033 = vpop.f32.mrb[0].mxu0
      %v1034 = vadd.f32 0.0, %v1033
      %v1035 = vpop.f32.mrb[0].mxu0
      %1036 = vdwg.mxu0
      %v1039 = vunpack.c.l.b16 %v885
      %v1040 = vunpack.c.l.b16 %v886
      %v1041 = vpack.c.b16 %v1040, %v1039
      %v1044 = vsel %vm641, %v878, 0
      %1046 = vmatprep.subr.bf16.mxu0 0
      %1047 = vmatpush1.bf16.msra.mxu0 %v1041
      %1048 = vmatprep.subr.bf16.mxu0 0
      %1049 = vmatpush1.bf16.msra.mxu0 0
      %1050 = vmatprep.subr.bf16.mxu0 0
      %1051 = vmatpush1.bf16.msra.mxu0 0
      %1052 = vmatprep.subr.bf16.mxu0 0
      %1053 = vmatpush1.bf16.msra.mxu0 0
      %1054 = vmatprep.subr.bf16.mxu0 0
      %1055 = vmatpush1.bf16.msra.mxu0 0
      %1056 = vmatprep.subr.bf16.mxu0 0
      %1057 = vmatpush1.bf16.msra.mxu0 0
      %1058 = vmatprep.subr.bf16.mxu0 0
      %1059 = vmatpush1.bf16.msra.mxu0 0
      %1060 = vmatprep.subr.bf16.mxu0 0
      %1061 = vmatpush1.bf16.msra.mxu0 0
      %1062 = vmatprep.subr.bf16.mxu0 0
      %1063 = vmatpush1.bf16.msra.mxu0 0
      %1064 = vmatprep.subr.bf16.mxu0 0
      %1065 = vmatpush1.bf16.msra.mxu0 0
      %1066 = vmatprep.subr.bf16.mxu0 0
      %1067 = vmatpush1.bf16.msra.mxu0 0
      %1068 = vmatprep.subr.bf16.mxu0 0
      %1069 = vmatpush1.bf16.msra.mxu0 0
      %1070 = vmatprep.subr.bf16.mxu0 0
      %1071 = vmatpush1.bf16.msra.mxu0 0
      %1072 = vmatprep.subr.bf16.mxu0 0
      %1073 = vmatpush1.bf16.msra.mxu0 0
      %1074 = vmatprep.subr.bf16.mxu0 0
      %1075 = vmatpush1.bf16.msra.mxu0 0
      %1076 = vmatprep.subr.bf16.mxu0 0
      %1077 = vmatpush1.bf16.msra.mxu0 0
      %1078 = vmatprep.mubr.bf16.mxu0 0
      %1079 = vmatmul.mubr.bf16.gmra.mrb[0].mxu0 %v1044
      %v1080 = vpop.f32.mrb[0].mxu0
      %v1081 = vadd.f32 0.0, %v1080
      %v1082 = vpop.f32.mrb[0].mxu0
      %v1083 = vpop.f32.mrb[0].mxu0
      %v1084 = vadd.f32 0.0, %v1083
      %v1085 = vpop.f32.mrb[0].mxu0
      %1086 = vdwg.mxu0
      %v1087 = vadd.f32 %v867, %v931
      %v1088 = vadd.f32 %v868, %v934
      %v1089 = vadd.f32 %v869, %v981
      %v1090 = vadd.f32 %v870, %v984
      %v1091 = vadd.f32 %v871, %v1031
      %v1092 = vadd.f32 %v872, %v1034
      %v1093 = vadd.f32 %v873, %v1081
      %v1094 = vadd.f32 %v874, %v1084
      %1095 = vst.msk [vmem:[#allocation4] sm:$0xff] %vm398, %v1087
      %1096 = vst.msk [vmem:[#allocation4 + $0x8] sm:$0xff] %vm398, %v1088
      %1097 = vst.msk [vmem:[#allocation4 + $0x10] sm:$0xff] %vm398, %v1089
      %1098 = vst.msk [vmem:[#allocation4 + $0x18] sm:$0xff] %vm398, %v1090
      %1099 = vst.msk [vmem:[#allocation4 + $0x20] sm:$0xff] %vm398, %v1091
      %1100 = vst.msk [vmem:[#allocation4 + $0x28] sm:$0xff] %vm398, %v1092
      %1101 = vst.msk [vmem:[#allocation4 + $0x30] sm:$0xff] %vm398, %v1093
      %1102 = vst.msk [vmem:[#allocation4 + $0x38] sm:$0xff] %vm398, %v1094
      %1103 = vst.msk [vmem:[#allocation2] sm:$0xff] %vm810, %v666
      %1104 = vst.msk [vmem:[#allocation2 + $0x8] sm:$0xff] %vm810, %v667
      %1105 = vst.msk [vmem:[#allocation2 + $0x10] sm:$0xff] %vm810, %v668
      %1106 = vst.msk [vmem:[#allocation2 + $0x18] sm:$0xff] %vm810, %v669
      %1107 = vst.msk [vmem:[#allocation2 + $0x20] sm:$0xff] %vm810, %v670
      %1108 = vst.msk [vmem:[#allocation2 + $0x28] sm:$0xff] %vm810, %v671
      %1109 = vst.msk [vmem:[#allocation2 + $0x30] sm:$0xff] %vm810, %v672
      %1110 = vst.msk [vmem:[#allocation2 + $0x38] sm:$0xff] %vm810, %v673
      // Predicated region
      $region41: #{_lambda_.44} parent=35 // pred_check
        %p1111 = pneg %p342
      $region42: #{_lambda_.44} parent=35 // pred_check_branch
        %1113 = sbr.rel (%p1111) target = $region44
      $region43: #{_lambda_.44} parent=35 // pred_region
        %v1114 = vld [vmem:[#allocation4] sm:$0xff]
        %v1115 = vld [vmem:[#allocation4 + $0x8] sm:$0xff]
        %v1116 = vld [vmem:[#allocation4 + $0x10] sm:$0xff]
        %v1117 = vld [vmem:[#allocation4 + $0x18] sm:$0xff]
        %v1118 = vld [vmem:[#allocation4 + $0x20] sm:$0xff]
        %v1119 = vld [vmem:[#allocation4 + $0x28] sm:$0xff]
        %v1120 = vld [vmem:[#allocation4 + $0x30] sm:$0xff]
        %v1121 = vld [vmem:[#allocation4 + $0x38] sm:$0xff]
        %v1122 = vld [vmem:[#allocation3] sm:$0xff]
        %v1123 = vld [vmem:[#allocation3 + $0x8] sm:$0xff]
        %v1124 = vld [vmem:[#allocation3 + $0x10] sm:$0xff]
        %v1125 = vld [vmem:[#allocation3 + $0x18] sm:$0xff]
        %v1126 = vld [vmem:[#allocation3 + $0x20] sm:$0xff]
        %v1127 = vld [vmem:[#allocation3 + $0x28] sm:$0xff]
        %v1128 = vld [vmem:[#allocation3 + $0x30] sm:$0xff]
        %v1129 = vld [vmem:[#allocation3 + $0x38] sm:$0xff]
        %v1130 = vrcp.pop %v1122
        %v1131 = vrcp.pop %v1123
        %v1132 = vrcp.pop %v1124
        %v1133 = vrcp.pop %v1125
        %v1134 = vrcp.pop %v1126
        %v1135 = vrcp.pop %v1127
        %v1136 = vrcp.pop %v1128
        %v1137 = vrcp.pop %v1129
        %1139 = vset.pattern.permute.xlu0 0
        %1140 = vperm.xlu0 %1139, %v1130
        %v1141 = vpop.permute.xlu0 %1140
        %1144 = vset.pattern.permute.xlu0 0
        %1145 = vperm.xlu0 %1144, %v1131
        %v1146 = vpop.permute.xlu0 %1145
        %1149 = vset.pattern.permute.xlu0 0
        %1150 = vperm.xlu0 %1149, %v1132
        %v1151 = vpop.permute.xlu0 %1150
        %1154 = vset.pattern.permute.xlu0 0
        %1155 = vperm.xlu0 %1154, %v1133
        %v1156 = vpop.permute.xlu0 %1155
        %1159 = vset.pattern.permute.xlu0 0
        %1160 = vperm.xlu0 %1159, %v1134
        %v1161 = vpop.permute.xlu0 %1160
        %1164 = vset.pattern.permute.xlu0 0
        %1165 = vperm.xlu0 %1164, %v1135
        %v1166 = vpop.permute.xlu0 %1165
        %1169 = vset.pattern.permute.xlu0 0
        %1170 = vperm.xlu0 %1169, %v1136
        %v1171 = vpop.permute.xlu0 %1170
        %1174 = vset.pattern.permute.xlu0 0
        %1175 = vperm.xlu0 %1174, %v1137
        %v1176 = vpop.permute.xlu0 %1175
        %v1178 = vmul.f32 %v1114, %v1141
        %v1179 = vmul.f32 %v1115, %v1146
        %v1180 = vmul.f32 %v1116, %v1151
        %v1181 = vmul.f32 %v1117, %v1156
        %v1182 = vmul.f32 %v1118, %v1161
        %v1183 = vmul.f32 %v1119, %v1166
        %v1184 = vmul.f32 %v1120, %v1171
        %v1185 = vmul.f32 %v1121, %v1176
        %v1186 = vpack.c.bf16 %v1179, %v1178
        %v1187 = vpack.c.bf16 %v1181, %v1180
        %v1188 = vpack.c.bf16 %v1183, %v1182
        %v1189 = vpack.c.bf16 %v1185, %v1184
        %v1194 = vunpack.c.l.b16 %v1186
        %v1195 = vunpack.c.h.b16 %v1186
        %v1196 = vunpack.c.l.b16 %v1187
        %v1197 = vunpack.c.h.b16 %v1187
        %v1198 = vunpack.c.l.b16 %v1188
        %v1199 = vunpack.c.h.b16 %v1188
        %v1200 = vunpack.c.l.b16 %v1189
        %v1201 = vunpack.c.h.b16 %v1189
        %v1202 = vpack.c.b16 %v1194, %v1194
        %v1203 = vpack.c.b16 %v1195, %v1195
        %v1204 = vpack.c.b16 %v1196, %v1196
        %v1205 = vpack.c.b16 %v1197, %v1197
        %v1206 = vpack.c.b16 %v1198, %v1198
        %v1207 = vpack.c.b16 %v1199, %v1199
        %v1208 = vpack.c.b16 %v1200, %v1200
        %v1209 = vpack.c.b16 %v1201, %v1201
        %vm1218 = vcmask 60416
        %1219 = vst.msk [vmem:[%s339] sm:$0xf] %vm1218, %v1202
        %1220 = vst.msk [vmem:[%s339 + $0x4] sm:$0xf] %vm1218, %v1203
        %1221 = vst.msk [vmem:[%s339 + $0x8] sm:$0xf] %vm1218, %v1204
        %1222 = vst.msk [vmem:[%s339 + $0xc] sm:$0xf] %vm1218, %v1205
        %1223 = vst.msk [vmem:[%s339 + $0x10] sm:$0xf] %vm1218, %v1206
        %1224 = vst.msk [vmem:[%s339 + $0x14] sm:$0xf] %vm1218, %v1207
        %1225 = vst.msk [vmem:[%s339 + $0x18] sm:$0xf] %vm1218, %v1208
        %1226 = vst.msk [vmem:[%s339 + $0x1c] sm:$0xf] %vm1218, %v1209
      $region44: #{_lambda_.44} parent=35 // pred_fallthru
        _
      %s1227 = smul.u32 2, %s21
      %p1228 = scmp.lt.s32.totalorder %s20, 1
      %s1229 = scalar_select %p1228, %s20, 1
      %p1230 = scmp.lt.s32.totalorder %s1227, 1
      %s1231 = scalar_select %p1230, %s1227, 1
      %s1232 = smul.addr %s1229, 8
      %s1233 = sadd.s32 %s1231, %s1232
      %s1234 = smul.addr %s1233, 4
      %s1235 = scalar_lea.vmem %s4, %s1234
      // Predicated region
      $region45: #{_lambda_.44} parent=35 // pred_check
        %p1236 = pneg %p166
      $region46: #{_lambda_.44} parent=35 // pred_check_branch
        %1238 = sbr.rel (%p1236) target = $region48
      $region47: #{_lambda_.44} parent=35 // pred_region
        %s1239 = smul.u32 2, %s21
      $region48: #{_lambda_.44} parent=35 // pred_fallthru
        _
    $region36: #{_lambda_.44} parent=5 // pred_fallthru
      _
    %p1240 = scmp.le.s32.totalorder 2, %s10
    // Predicated region
    $region49: #{_lambda_.44} parent=5 // pred_check
      %p1241 = pneg %p1240
    $region50: #{_lambda_.44} parent=5 // pred_check_branch
      %1243 = sbr.rel (%p1241) target = $region52
    $region51: #{_lambda_.44} parent=5 // pred_region
      %s1244 = ssub.s32 %s10, 2
      // Predicated region
      $region53: #{_lambda_.44} parent=51 // pred_check
        %p1245 = pneg %p172
      $region54: #{_lambda_.44} parent=51 // pred_check_branch
        %1247 = sbr.rel (%p1245) target = $region56
      $region55: #{_lambda_.44} parent=51 // pred_region
        %s1248 = smul.u32 2, %s24
        %p1249 = scmp.lt.s32.totalorder %s23, 1
        %s1250 = scalar_select %p1249, %s23, 1
        %p1251 = scmp.lt.s32.totalorder %s1248, 1
        %s1252 = scalar_select %p1251, %s1248, 1
        %s1253 = smul.addr %s1250, 8
        %s1254 = sadd.s32 %s1252, %s1253
        %s1255 = smul.addr %s1254, 4
        %s1256 = scalar_lea.vmem %s4, %s1255
      $region56: #{_lambda_.44} parent=51 // pred_fallthru
        _
    $region52: #{_lambda_.44} parent=5 // pred_fallthru
      _
  $region6: #{_lambda_.44} parent=0 // loop_footer
    %s14 = sadd.s32 1, %s10
  $region7: #{_lambda_.44} parent=0 // loop_footer_branch
    %9 = sbr.rel target = $region3
  $region8: #{_lambda_.44} parent=0 // loop_exit
    _

// kernel: _lambda_.49
$region0: #{_lambda_.49}
  #allocation0 [shape = 'u32[]', space=smem, size = 0x4, offset = 0x4, fixed_abs, tag = 'smem constant byte address 0x4 - core index']
  #allocation1 [shape = 'u32[144,128]{1,0:T(1,128)}', space=vmem, size = 0x12000, scoped, tag = 'internal scratch']
  %s0 = inlined_call_operand.vmem [shape: bf16[32,32], index: 0, kind: input, shape index: {}]
  %s1 = inlined_call_operand.vmem [shape: bf16[32,32], index: 1, kind: input, shape index: {}]
  %s2 = inlined_call_operand.vmem [shape: f32[32,1], index: 2, kind: input, shape index: {}]
  %s3 = inlined_call_operand.vmem [shape: f32[1,32], index: 3, kind: input, shape index: {}]
  %s4 = inlined_call_operand.vmem [shape: f32[1,32], index: 4, kind: input, shape index: {}]
  %s5 = inlined_call_operand.vmem [shape: bf16[32,32], index: 5, kind: output, shape index: {}]
  %s6 = sld [smem:[#allocation0]]
  $region30: #{_lambda_.49} parent=0
    _
  %s8 = ssub.s32 1, %s6
  %s9 = scalar_select 0, %s8, %s6
  // Predicated region
  $region2: #{_lambda_.49} parent=0 // pred_check
    _
  $region3: #{_lambda_.49} parent=0 // pred_check_branch
    %11 = sbr.rel (0) target = $region5
  $region4: #{_lambda_.49} parent=0 // pred_region
    _
  $region5: #{_lambda_.49} parent=0 // pred_fallthru
    _
  // Predicated region
  $region6: #{_lambda_.49} parent=0 // pred_check
    _
  $region7: #{_lambda_.49} parent=0 // pred_check_branch
    %13 = sbr.rel (0) target = $region9
  $region8: #{_lambda_.49} parent=0 // pred_region
    _
  $region9: #{_lambda_.49} parent=0 // pred_fallthru
    _
  // Predicated region
  $region10: #{_lambda_.49} parent=0 // pred_check
    _
  $region11: #{_lambda_.49} parent=0 // pred_check_branch
    %15 = sbr.rel (0) target = $region13
  $region12: #{_lambda_.49} parent=0 // pred_region
    _
  $region13: #{_lambda_.49} parent=0 // pred_fallthru
    _
  // Predicated region
  $region14: #{_lambda_.49} parent=0 // pred_check
    _
  $region15: #{_lambda_.49} parent=0 // pred_check_branch
    %17 = sbr.rel (0) target = $region17
  $region16: #{_lambda_.49} parent=0 // pred_region
    _
  $region17: #{_lambda_.49} parent=0 // pred_fallthru
    _
  // Predicated region
  $region18: #{_lambda_.49} parent=0 // pred_check
    _
  $region19: #{_lambda_.49} parent=0 // pred_check_branch
    %19 = sbr.rel (0) target = $region21
  $region20: #{_lambda_.49} parent=0 // pred_region
    _
  $region21: #{_lambda_.49} parent=0 // pred_fallthru
    _
  %v20 = vld [vmem:[%s0] sm:$0xf]
  %v21 = vld [vmem:[%s0 + $0x4] sm:$0xf]
  %v22 = vld [vmem:[%s0 + $0x8] sm:$0xf]
  %v23 = vld [vmem:[%s0 + $0xc] sm:$0xf]
  %v24 = vunpack.c.l.bf16 %v20
  %v25 = vunpack.c.l.bf16 %v21
  %v26 = vunpack.c.l.bf16 %v22
  %v27 = vunpack.c.l.bf16 %v23
  %v28 = vld [vmem:[%s1] sm:$0xf]
  %v29 = vld [vmem:[%s1 + $0x4] sm:$0xf]
  %v30 = vld [vmem:[%s1 + $0x8] sm:$0xf]
  %v31 = vld [vmem:[%s1 + $0xc] sm:$0xf]
  %v32 = vunpack.c.l.bf16 %v28
  %v33 = vunpack.c.l.bf16 %v29
  %v34 = vunpack.c.l.bf16 %v30
  %v35 = vunpack.c.l.bf16 %v31
  %v36 = vadd.f32 %v24, %v32
  %v37 = vadd.f32 %v25, %v33
  %v38 = vadd.f32 %v26, %v34
  %v39 = vadd.f32 %v27, %v35
  %v40 = vld [vmem:[%s2] sm:$0xff]
  %v41 = vld [vmem:[%s2 + $0x8] sm:$0xff]
  %v42 = vld [vmem:[%s2 + $0x10] sm:$0xff]
  %v43 = vld [vmem:[%s2 + $0x18] sm:$0xff]
  %vm44 = vcmask 261120
  %v45 = vsel %vm44, %v36, 0.0
  %46 = vadd.xlane.f32.xlu0 %v45
  %v47 = vpop.xlane.xlu0 %46
  %v48 = vsel %vm44, %v37, 0.0
  %49 = vadd.xlane.f32.xlu0 %v48
  %v50 = vpop.xlane.xlu0 %49
  %v51 = vsel %vm44, %v38, 0.0
  %52 = vadd.xlane.f32.xlu0 %v51
  %v53 = vpop.xlane.xlu0 %52
  %v54 = vsel %vm44, %v39, 0.0
  %55 = vadd.xlane.f32.xlu0 %v54
  %v56 = vpop.xlane.xlu0 %55
  %v57 = vrcp.pop 32.0
  %v58 = vmul.f32 %v47, %v57
  %v59 = vmul.f32 %v50, %v57
  %v60 = vmul.f32 %v53, %v57
  %v61 = vmul.f32 %v56, %v57
  %v62 = vsub.f32 %v36, %v58
  %v63 = vsub.f32 %v37, %v59
  %v64 = vsub.f32 %v38, %v60
  %v65 = vsub.f32 %v39, %v61
  %v66 = vmul.f32 %v62, %v62
  %v67 = vmul.f32 %v63, %v63
  %v68 = vmul.f32 %v64, %v64
  %v69 = vmul.f32 %v65, %v65
  %v70 = vsel %vm44, %v66, 0.0
  %71 = vadd.xlane.f32.xlu0 %v70
  %v72 = vpop.xlane.xlu0 %71
  %v73 = vsel %vm44, %v67, 0.0
  %74 = vadd.xlane.f32.xlu0 %v73
  %v75 = vpop.xlane.xlu0 %74
  %v76 = vsel %vm44, %v68, 0.0
  %77 = vadd.xlane.f32.xlu0 %v76
  %v78 = vpop.xlane.xlu0 %77
  %v79 = vsel %vm44, %v69, 0.0
  %80 = vadd.xlane.f32.xlu0 %v79
  %v81 = vpop.xlane.xlu0 %80
  %v82 = vmul.f32 %v72, %v57
  %v83 = vmul.f32 %v75, %v57
  %v84 = vmul.f32 %v78, %v57
  %v85 = vmul.f32 %v81, %v57
  %v86 = vadd.f32 %v82, 1e-05
  %v87 = vadd.f32 %v83, 1e-05
  %v88 = vadd.f32 %v84, 1e-05
  %v89 = vadd.f32 %v85, 1e-05
  %v90 = vrsqrt.pop %v86
  %v91 = vrsqrt.pop %v87
  %v92 = vrsqrt.pop %v88
  %v93 = vrsqrt.pop %v89
  %v94 = vmul.f32 %v62, %v90
  %v95 = vmul.f32 %v63, %v91
  %v96 = vmul.f32 %v64, %v92
  %v97 = vmul.f32 %v65, %v93
  %v98 = vld [vmem:[%s3] sm:$0x1]
  %v100 = vlaneseq
  %v101 = vshrl.u32 %v100, 7
  %v102 = vsub.s32 0, %v101
  %v103 = vrot.slane %v98, %v102
  %v105 = vmul.f32 %v94, %v103
  %v106 = vmul.f32 %v95, %v103
  %v107 = vmul.f32 %v96, %v103
  %v108 = vmul.f32 %v97, %v103
  %v109 = vld [vmem:[%s4] sm:$0x1]
  %v111 = vlaneseq
  %v112 = vshrl.u32 %v111, 7
  %v113 = vsub.s32 0, %v112
  %v114 = vrot.slane %v109, %v113
  %v116 = vadd.f32 %v105, %v114
  %v117 = vadd.f32 %v106, %v114
  %v118 = vadd.f32 %v107, %v114
  %v119 = vadd.f32 %v108, %v114
  %121 = vset.pattern.permute.xlu0 0
  %122 = vperm.xlu0 %121, %v40
  %v123 = vpop.permute.xlu0 %122
  %126 = vset.pattern.permute.xlu0 0
  %127 = vperm.xlu0 %126, %v41
  %v128 = vpop.permute.xlu0 %127
  %131 = vset.pattern.permute.xlu0 0
  %132 = vperm.xlu0 %131, %v42
  %v133 = vpop.permute.xlu0 %132
  %136 = vset.pattern.permute.xlu0 0
  %137 = vperm.xlu0 %136, %v43
  %v138 = vpop.permute.xlu0 %137
  %v140 = vmul.f32 %v116, %v123
  %v141 = vmul.f32 %v117, %v128
  %v142 = vmul.f32 %v118, %v133
  %v143 = vmul.f32 %v119, %v138
  %v144 = vpack.c.bf16 %v141, %v140
  %v145 = vpack.c.bf16 %v143, %v142
  %v148 = vunpack.c.l.b16 %v144
  %v149 = vunpack.c.h.b16 %v144
  %v150 = vunpack.c.l.b16 %v145
  %v151 = vunpack.c.h.b16 %v145
  %v152 = vpack.c.b16 %v148, %v148
  %v153 = vpack.c.b16 %v149, %v149
  %v154 = vpack.c.b16 %v150, %v150
  %v155 = vpack.c.b16 %v151, %v151
  %vm160 = vcmask 257024
  %161 = vst.msk [vmem:[%s5] sm:$0xf] %vm160, %v152
  %162 = vst.msk [vmem:[%s5 + $0x4] sm:$0xf] %vm160, %v153
  %163 = vst.msk [vmem:[%s5 + $0x8] sm:$0xf] %vm160, %v154
  %164 = vst.msk [vmem:[%s5 + $0xc] sm:$0xf] %vm160, %v155
  // Predicated region
  $region22: #{_lambda_.49} parent=0 // pred_check
    _
  $region23: #{_lambda_.49} parent=0 // pred_check_branch
    %166 = sbr.rel (0) target = $region25
  $region24: #{_lambda_.49} parent=0 // pred_region
    _
  $region25: #{_lambda_.49} parent=0 // pred_fallthru
    _
  // Predicated region
  $region26: #{_lambda_.49} parent=0 // pred_check
    _
  $region27: #{_lambda_.49} parent=0 // pred_check_branch
    %168 = sbr.rel (0) target = $region29
  $region28: #{_lambda_.49} parent=0 // pred_region
    _
  $region29: #{_lambda_.49} parent=0 // pred_fallthru
    _

// kernel: _lambda_.65
$region0: #{_lambda_.65}
  #allocation0 [shape = 'u32[]', space=smem, size = 0x4, offset = 0x4, fixed_abs, tag = 'smem constant byte address 0x4 - core index']
  #allocation1 [shape = 'u32[144,128]{1,0:T(1,128)}', space=vmem, size = 0x12000, scoped, tag = 'internal scratch']
  %s0 = inlined_call_operand.vmem [shape: bf16[16,32], index: 0, kind: input, shape index: {}]
  %s1 = inlined_call_operand.vmem [shape: bf16[16,32], index: 1, kind: input, shape index: {}]
  %s2 = inlined_call_operand.vmem [shape: f32[16,1], index: 2, kind: input, shape index: {}]
  %s3 = inlined_call_operand.vmem [shape: f32[1,32], index: 3, kind: input, shape index: {}]
  %s4 = inlined_call_operand.vmem [shape: f32[1,32], index: 4, kind: input, shape index: {}]
  %s5 = inlined_call_operand.vmem [shape: bf16[16,32], index: 5, kind: output, shape index: {}]
  %s6 = sld [smem:[#allocation0]]
  $region30: #{_lambda_.65} parent=0
    _
  %s8 = ssub.s32 1, %s6
  %s9 = scalar_select 0, %s8, %s6
  // Predicated region
  $region2: #{_lambda_.65} parent=0 // pred_check
    _
  $region3: #{_lambda_.65} parent=0 // pred_check_branch
    %11 = sbr.rel (0) target = $region5
  $region4: #{_lambda_.65} parent=0 // pred_region
    _
  $region5: #{_lambda_.65} parent=0 // pred_fallthru
    _
  // Predicated region
  $region6: #{_lambda_.65} parent=0 // pred_check
    _
  $region7: #{_lambda_.65} parent=0 // pred_check_branch
    %13 = sbr.rel (0) target = $region9
  $region8: #{_lambda_.65} parent=0 // pred_region
    _
  $region9: #{_lambda_.65} parent=0 // pred_fallthru
    _
  // Predicated region
  $region10: #{_lambda_.65} parent=0 // pred_check
    _
  $region11: #{_lambda_.65} parent=0 // pred_check_branch
    %15 = sbr.rel (0) target = $region13
  $region12: #{_lambda_.65} parent=0 // pred_region
    _
  $region13: #{_lambda_.65} parent=0 // pred_fallthru
    _
  // Predicated region
  $region14: #{_lambda_.65} parent=0 // pred_check
    _
  $region15: #{_lambda_.65} parent=0 // pred_check_branch
    %17 = sbr.rel (0) target = $region17
  $region16: #{_lambda_.65} parent=0 // pred_region
    _
  $region17: #{_lambda_.65} parent=0 // pred_fallthru
    _
  // Predicated region
  $region18: #{_lambda_.65} parent=0 // pred_check
    _
  $region19: #{_lambda_.65} parent=0 // pred_check_branch
    %19 = sbr.rel (0) target = $region21
  $region20: #{_lambda_.65} parent=0 // pred_region
    _
  $region21: #{_lambda_.65} parent=0 // pred_fallthru
    _
  %v20 = vld [vmem:[%s0] sm:$0xf]
  %v21 = vld [vmem:[%s0 + $0x4] sm:$0xf]
  %v22 = vunpack.c.l.bf16 %v20
  %v23 = vunpack.c.l.bf16 %v21
  %v24 = vld [vmem:[%s1] sm:$0xf]
  %v25 = vld [vmem:[%s1 + $0x4] sm:$0xf]
  %v26 = vunpack.c.l.bf16 %v24
  %v27 = vunpack.c.l.bf16 %v25
  %v28 = vadd.f32 %v22, %v26
  %v29 = vadd.f32 %v23, %v27
  %v30 = vld [vmem:[%s2] sm:$0xff]
  %v31 = vld [vmem:[%s2 + $0x8] sm:$0xff]
  %vm32 = vcmask 261120
  %v33 = vsel %vm32, %v28, 0.0
  %34 = vadd.xlane.f32.xlu0 %v33
  %v35 = vpop.xlane.xlu0 %34
  %v36 = vsel %vm32, %v29, 0.0
  %37 = vadd.xlane.f32.xlu0 %v36
  %v38 = vpop.xlane.xlu0 %37
  %v39 = vrcp.pop 32.0
  %v40 = vmul.f32 %v35, %v39
  %v41 = vmul.f32 %v38, %v39
  %v42 = vsub.f32 %v28, %v40
  %v43 = vsub.f32 %v29, %v41
  %v44 = vmul.f32 %v42, %v42
  %v45 = vmul.f32 %v43, %v43
  %v46 = vsel %vm32, %v44, 0.0
  %47 = vadd.xlane.f32.xlu0 %v46
  %v48 = vpop.xlane.xlu0 %47
  %v49 = vsel %vm32, %v45, 0.0
  %50 = vadd.xlane.f32.xlu0 %v49
  %v51 = vpop.xlane.xlu0 %50
  %v52 = vmul.f32 %v48, %v39
  %v53 = vmul.f32 %v51, %v39
  %v54 = vadd.f32 %v52, 1e-05
  %v55 = vadd.f32 %v53, 1e-05
  %v56 = vrsqrt.pop %v54
  %v57 = vrsqrt.pop %v55
  %v58 = vmul.f32 %v42, %v56
  %v59 = vmul.f32 %v43, %v57
  %v60 = vld [vmem:[%s3] sm:$0x1]
  %v62 = vlaneseq
  %v63 = vshrl.u32 %v62, 7
  %v64 = vsub.s32 0, %v63
  %v65 = vrot.slane %v60, %v64
  %v67 = vmul.f32 %v58, %v65
  %v68 = vmul.f32 %v59, %v65
  %v69 = vld [vmem:[%s4] sm:$0x1]
  %v71 = vlaneseq
  %v72 = vshrl.u32 %v71, 7
  %v73 = vsub.s32 0, %v72
  %v74 = vrot.slane %v69, %v73
  %v76 = vadd.f32 %v67, %v74
  %v77 = vadd.f32 %v68, %v74
  %79 = vset.pattern.permute.xlu0 0
  %80 = vperm.xlu0 %79, %v30
  %v81 = vpop.permute.xlu0 %80
  %84 = vset.pattern.permute.xlu0 0
  %85 = vperm.xlu0 %84, %v31
  %v86 = vpop.permute.xlu0 %85
  %v88 = vmul.f32 %v76, %v81
  %v89 = vmul.f32 %v77, %v86
  %v90 = vpack.c.bf16 %v89, %v88
  %v92 = vunpack.c.l.b16 %v90
  %v93 = vunpack.c.h.b16 %v90
  %v94 = vpack.c.b16 %v92, %v92
  %v95 = vpack.c.b16 %v93, %v93
  %vm98 = vcmask 257024
  %99 = vst.msk [vmem:[%s5] sm:$0xf] %vm98, %v94
  %100 = vst.msk [vmem:[%s5 + $0x4] sm:$0xf] %vm98, %v95
  // Predicated region
  $region22: #{_lambda_.65} parent=0 // pred_check
    _
  $region23: #{_lambda_.65} parent=0 // pred_check_branch
    %102 = sbr.rel (0) target = $region25
  $region24: #{_lambda_.65} parent=0 // pred_region
    _
  $region25: #{_lambda_.65} parent=0 // pred_fallthru
    _
  // Predicated region
  $region26: #{_lambda_.65} parent=0 // pred_check
    _
  $region27: #{_lambda_.65} parent=0 // pred_check_branch
    %104 = sbr.rel (0) target = $region29
  $region28: #{_lambda_.65} parent=0 // pred_region
    _
  $region29: #{_lambda_.65} parent=0 // pred_fallthru
    _

// kernel: _lambda_.66
$region0: #{_lambda_.66}
  #allocation0 [shape = 'u32[]', space=smem, size = 0x4, offset = 0x4, fixed_abs, tag = 'smem constant byte address 0x4 - core index']
  #allocation1 [shape = 'u32[144,128]{1,0:T(1,128)}', space=vmem, size = 0x12000, scoped, tag = 'internal scratch']
  #allocation2 [shape = 'f32[16,128]{1,0:T(8,128)}', space=vmem, size = 0x2000, scoped, tag = 'scratch operand']
  %s0 = inlined_call_operand.vmem [shape: bf16[16,128], index: 0, kind: input, shape index: {}]
  %s1 = inlined_call_operand.vmem [shape: bf16[128,128], index: 1, kind: input, shape index: {}]
  %s2 = inlined_call_operand.vmem [shape: f32[1,128], index: 2, kind: input, shape index: {}]
  %s3 = inlined_call_operand.vmem [shape: bf16[16,128], index: 3, kind: output, shape index: {}]
  %s4 = sld [smem:[#allocation0]]
  $region30: #{_lambda_.66} parent=0
    _
  %s6 = ssub.s32 1, %s4
  %s7 = scalar_select 0, %s6, %s4
  // Predicated region
  $region2: #{_lambda_.66} parent=0 // pred_check
    _
  $region3: #{_lambda_.66} parent=0 // pred_check_branch
    %9 = sbr.rel (0) target = $region5
  $region4: #{_lambda_.66} parent=0 // pred_region
    _
  $region5: #{_lambda_.66} parent=0 // pred_fallthru
    _
  // Predicated region
  $region6: #{_lambda_.66} parent=0 // pred_check
    _
  $region7: #{_lambda_.66} parent=0 // pred_check_branch
    %11 = sbr.rel (0) target = $region9
  $region8: #{_lambda_.66} parent=0 // pred_region
    _
  $region9: #{_lambda_.66} parent=0 // pred_fallthru
    _
  // Predicated region
  $region10: #{_lambda_.66} parent=0 // pred_check
    _
  $region11: #{_lambda_.66} parent=0 // pred_check_branch
    %13 = sbr.rel (0) target = $region13
  $region12: #{_lambda_.66} parent=0 // pred_region
    _
  $region13: #{_lambda_.66} parent=0 // pred_fallthru
    _
  %p15 = scmp.eq.s32.totalorder 0, 0
  // Predicated region
  $region14: #{_lambda_.66} parent=0 // pred_check
    %p16 = pneg %p15
  $region15: #{_lambda_.66} parent=0 // pred_check_branch
    %18 = sbr.rel (%p16) target = $region17
  $region16: #{_lambda_.66} parent=0 // pred_region
    %19 = vst [vmem:[#allocation2] sm:$0xff] 0.0
    %20 = vst [vmem:[#allocation2 + $0x8] sm:$0xff] 0.0
  $region17: #{_lambda_.66} parent=0 // pred_fallthru
    _
  %v21 = vld [vmem:[#allocation2] sm:$0xff]
  %v22 = vld [vmem:[#allocation2 + $0x8] sm:$0xff]
  %v23 = vld [vmem:[%s0] sm:$0xf]
  %v24 = vld [vmem:[%s0 + $0x4] sm:$0xf]
  %v25 = vld [vmem:[%s1] sm:$0xf]
  %v26 = vld [vmem:[%s1 + $0x4] sm:$0xf]
  %v27 = vld [vmem:[%s1 + $0x8] sm:$0xf]
  %v28 = vld [vmem:[%s1 + $0xc] sm:$0xf]
  %v29 = vld [vmem:[%s1 + $0x10] sm:$0xf]
  %v30 = vld [vmem:[%s1 + $0x14] sm:$0xf]
  %v31 = vld [vmem:[%s1 + $0x18] sm:$0xf]
  %v32 = vld [vmem:[%s1 + $0x1c] sm:$0xf]
  %v33 = vld [vmem:[%s1 + $0x20] sm:$0xf]
  %v34 = vld [vmem:[%s1 + $0x24] sm:$0xf]
  %v35 = vld [vmem:[%s1 + $0x28] sm:$0xf]
  %v36 = vld [vmem:[%s1 + $0x2c] sm:$0xf]
  %v37 = vld [vmem:[%s1 + $0x30] sm:$0xf]
  %v38 = vld [vmem:[%s1 + $0x34] sm:$0xf]
  %v39 = vld [vmem:[%s1 + $0x38] sm:$0xf]
  %v40 = vld [vmem:[%s1 + $0x3c] sm:$0xf]
  %v43 = vunpack.c.l.b16 %v23
  %v44 = vunpack.c.l.b16 %v24
  %v45 = vpack.c.b16 %v44, %v43
  %v63 = vunpack.c.l.b16 %v25
  %v64 = vunpack.c.l.b16 %v26
  %v65 = vunpack.c.l.b16 %v27
  %v66 = vunpack.c.l.b16 %v28
  %v67 = vunpack.c.l.b16 %v29
  %v68 = vunpack.c.l.b16 %v30
  %v69 = vunpack.c.l.b16 %v31
  %v70 = vunpack.c.l.b16 %v32
  %v71 = vunpack.c.l.b16 %v33
  %v72 = vunpack.c.l.b16 %v34
  %v73 = vunpack.c.l.b16 %v35
  %v74 = vunpack.c.l.b16 %v36
  %v75 = vunpack.c.l.b16 %v37
  %v76 = vunpack.c.l.b16 %v38
  %v77 = vunpack.c.l.b16 %v39
  %v78 = vunpack.c.l.b16 %v40
  %v79 = vpack.c.b16 %v64, %v63
  %v80 = vpack.c.b16 %v66, %v65
  %v81 = vpack.c.b16 %v68, %v67
  %v82 = vpack.c.b16 %v70, %v69
  %v83 = vpack.c.b16 %v72, %v71
  %v84 = vpack.c.b16 %v74, %v73
  %v85 = vpack.c.b16 %v76, %v75
  %v86 = vpack.c.b16 %v78, %v77
  %95 = vmatprep.subr.bf16.mxu0 0
  %96 = vmatpush1.bf16.msra.mxu0 %v79
  %97 = vmatprep.subr.bf16.mxu0 0
  %98 = vmatpush1.bf16.msra.mxu0 %v80
  %99 = vmatprep.subr.bf16.mxu0 0
  %100 = vmatpush1.bf16.msra.mxu0 %v81
  %101 = vmatprep.subr.bf16.mxu0 0
  %102 = vmatpush1.bf16.msra.mxu0 %v82
  %103 = vmatprep.subr.bf16.mxu0 0
  %104 = vmatpush1.bf16.msra.mxu0 %v83
  %105 = vmatprep.subr.bf16.mxu0 0
  %106 = vmatpush1.bf16.msra.mxu0 %v84
  %107 = vmatprep.subr.bf16.mxu0 0
  %108 = vmatpush1.bf16.msra.mxu0 %v85
  %109 = vmatprep.subr.bf16.mxu0 0
  %110 = vmatpush1.bf16.msra.mxu0 %v86
  %111 = vmatprep.subr.bf16.mxu0 0
  %112 = vmatpush1.bf16.msra.mxu0 0
  %113 = vmatprep.subr.bf16.mxu0 0
  %114 = vmatpush1.bf16.msra.mxu0 0
  %115 = vmatprep.subr.bf16.mxu0 0
  %116 = vmatpush1.bf16.msra.mxu0 0
  %117 = vmatprep.subr.bf16.mxu0 0
  %118 = vmatpush1.bf16.msra.mxu0 0
  %119 = vmatprep.subr.bf16.mxu0 0
  %120 = vmatpush1.bf16.msra.mxu0 0
  %121 = vmatprep.subr.bf16.mxu0 0
  %122 = vmatpush1.bf16.msra.mxu0 0
  %123 = vmatprep.subr.bf16.mxu0 0
  %124 = vmatpush1.bf16.msra.mxu0 0
  %125 = vmatprep.subr.bf16.mxu0 0
  %126 = vmatpush1.bf16.msra.mxu0 0
  %127 = vmatprep.mubr.bf16.mxu0 0
  %128 = vmatmul.mubr.bf16.gmra.mrb[0].mxu0 %v45
  %v129 = vpop.f32.mrb[0].mxu0
  %v130 = vadd.f32 0.0, %v129
  %v131 = vpop.f32.mrb[0].mxu0
  %v132 = vpop.f32.mrb[0].mxu0
  %v133 = vadd.f32 0.0, %v132
  %v134 = vpop.f32.mrb[0].mxu0
  %135 = vdwg.mxu0
  %v136 = vadd.f32 %v21, %v130
  %v137 = vadd.f32 %v22, %v133
  %138 = vst [vmem:[#allocation2] sm:$0xff] %v136
  %139 = vst [vmem:[#allocation2 + $0x8] sm:$0xff] %v137
  // Predicated region
  $region18: #{_lambda_.66} parent=0 // pred_check
    %p140 = pneg %p15
  $region19: #{_lambda_.66} parent=0 // pred_check_branch
    %142 = sbr.rel (%p140) target = $region21
  $region20: #{_lambda_.66} parent=0 // pred_region
    %v143 = vld [vmem:[#allocation2] sm:$0xff]
    %v144 = vld [vmem:[#allocation2 + $0x8] sm:$0xff]
    %v145 = vld [vmem:[%s2] sm:$0x1]
    %v147 = vlaneseq
    %v148 = vshrl.u32 %v147, 7
    %v149 = vsub.s32 0, %v148
    %v150 = vrot.slane %v145, %v149
    %v152 = vadd.f32 %v143, %v150
    %v153 = vadd.f32 %v144, %v150
    %v154 = vmax.f32 %v152, 0.0
    %v155 = vmax.f32 %v153, 0.0
    %v156 = vpack.c.bf16 %v155, %v154
    %v158 = vunpack.c.l.b16 %v156
    %v159 = vunpack.c.h.b16 %v156
    %v160 = vpack.c.b16 %v158, %v158
    %v161 = vpack.c.b16 %v159, %v159
    %164 = vst [vmem:[%s3] sm:$0xf] %v160
    %165 = vst [vmem:[%s3 + $0x4] sm:$0xf] %v161
  $region21: #{_lambda_.66} parent=0 // pred_fallthru
    _
  // Predicated region
  $region22: #{_lambda_.66} parent=0 // pred_check
    _
  $region23: #{_lambda_.66} parent=0 // pred_check_branch
    %167 = sbr.rel (0) target = $region25
  $region24: #{_lambda_.66} parent=0 // pred_region
    _
  $region25: #{_lambda_.66} parent=0 // pred_fallthru
    _
  // Predicated region
  $region26: #{_lambda_.66} parent=0 // pred_check
    _
  $region27: #{_lambda_.66} parent=0 // pred_check_branch
    %169 = sbr.rel (0) target = $region29
  $region28: #{_lambda_.66} parent=0 // pred_region
    _
  $region29: #{_lambda_.66} parent=0 // pred_fallthru
    _

// kernel: _lambda_.81
$region0: #{_lambda_.81}
  #allocation0 [shape = 'u32[]', space=smem, size = 0x4, offset = 0x4, fixed_abs, tag = 'smem constant byte address 0x4 - core index']
  #allocation1 [shape = 'u32[144,128]{1,0:T(1,128)}', space=vmem, size = 0x12000, scoped, tag = 'internal scratch']
  #allocation2 [shape = 'f32[16,128]{1,0:T(8,128)}', space=vmem, size = 0x2000, scoped, tag = 'scratch operand']
  %s0 = inlined_call_operand.vmem [shape: bf16[16,128], index: 0, kind: input, shape index: {}]
  %s1 = inlined_call_operand.vmem [shape: bf16[128,128], index: 1, kind: input, shape index: {}]
  %s2 = inlined_call_operand.vmem [shape: f32[1,128], index: 2, kind: input, shape index: {}]
  %s3 = inlined_call_operand.vmem [shape: f32[16,128], index: 3, kind: output, shape index: {}]
  %s4 = sld [smem:[#allocation0]]
  $region30: #{_lambda_.81} parent=0
    _
  %s6 = ssub.s32 1, %s4
  %s7 = scalar_select 0, %s6, %s4
  // Predicated region
  $region2: #{_lambda_.81} parent=0 // pred_check
    _
  $region3: #{_lambda_.81} parent=0 // pred_check_branch
    %9 = sbr.rel (0) target = $region5
  $region4: #{_lambda_.81} parent=0 // pred_region
    _
  $region5: #{_lambda_.81} parent=0 // pred_fallthru
    _
  // Predicated region
  $region6: #{_lambda_.81} parent=0 // pred_check
    _
  $region7: #{_lambda_.81} parent=0 // pred_check_branch
    %11 = sbr.rel (0) target = $region9
  $region8: #{_lambda_.81} parent=0 // pred_region
    _
  $region9: #{_lambda_.81} parent=0 // pred_fallthru
    _
  // Predicated region
  $region10: #{_lambda_.81} parent=0 // pred_check
    _
  $region11: #{_lambda_.81} parent=0 // pred_check_branch
    %13 = sbr.rel (0) target = $region13
  $region12: #{_lambda_.81} parent=0 // pred_region
    _
  $region13: #{_lambda_.81} parent=0 // pred_fallthru
    _
  %p15 = scmp.eq.s32.totalorder 0, 0
  // Predicated region
  $region14: #{_lambda_.81} parent=0 // pred_check
    %p16 = pneg %p15
  $region15: #{_lambda_.81} parent=0 // pred_check_branch
    %18 = sbr.rel (%p16) target = $region17
  $region16: #{_lambda_.81} parent=0 // pred_region
    %19 = vst [vmem:[#allocation2] sm:$0xff] 0.0
    %20 = vst [vmem:[#allocation2 + $0x8] sm:$0xff] 0.0
  $region17: #{_lambda_.81} parent=0 // pred_fallthru
    _
  %v21 = vld [vmem:[#allocation2] sm:$0xff]
  %v22 = vld [vmem:[#allocation2 + $0x8] sm:$0xff]
  %v23 = vld [vmem:[%s0] sm:$0xf]
  %v24 = vld [vmem:[%s0 + $0x4] sm:$0xf]
  %v25 = vld [vmem:[%s1] sm:$0xf]
  %v26 = vld [vmem:[%s1 + $0x4] sm:$0xf]
  %v27 = vld [vmem:[%s1 + $0x8] sm:$0xf]
  %v28 = vld [vmem:[%s1 + $0xc] sm:$0xf]
  %v29 = vld [vmem:[%s1 + $0x10] sm:$0xf]
  %v30 = vld [vmem:[%s1 + $0x14] sm:$0xf]
  %v31 = vld [vmem:[%s1 + $0x18] sm:$0xf]
  %v32 = vld [vmem:[%s1 + $0x1c] sm:$0xf]
  %v33 = vld [vmem:[%s1 + $0x20] sm:$0xf]
  %v34 = vld [vmem:[%s1 + $0x24] sm:$0xf]
  %v35 = vld [vmem:[%s1 + $0x28] sm:$0xf]
  %v36 = vld [vmem:[%s1 + $0x2c] sm:$0xf]
  %v37 = vld [vmem:[%s1 + $0x30] sm:$0xf]
  %v38 = vld [vmem:[%s1 + $0x34] sm:$0xf]
  %v39 = vld [vmem:[%s1 + $0x38] sm:$0xf]
  %v40 = vld [vmem:[%s1 + $0x3c] sm:$0xf]
  %v43 = vunpack.c.l.b16 %v23
  %v44 = vunpack.c.l.b16 %v24
  %v45 = vpack.c.b16 %v44, %v43
  %v63 = vunpack.c.l.b16 %v25
  %v64 = vunpack.c.l.b16 %v26
  %v65 = vunpack.c.l.b16 %v27
  %v66 = vunpack.c.l.b16 %v28
  %v67 = vunpack.c.l.b16 %v29
  %v68 = vunpack.c.l.b16 %v30
  %v69 = vunpack.c.l.b16 %v31
  %v70 = vunpack.c.l.b16 %v32
  %v71 = vunpack.c.l.b16 %v33
  %v72 = vunpack.c.l.b16 %v34
  %v73 = vunpack.c.l.b16 %v35
  %v74 = vunpack.c.l.b16 %v36
  %v75 = vunpack.c.l.b16 %v37
  %v76 = vunpack.c.l.b16 %v38
  %v77 = vunpack.c.l.b16 %v39
  %v78 = vunpack.c.l.b16 %v40
  %v79 = vpack.c.b16 %v64, %v63
  %v80 = vpack.c.b16 %v66, %v65
  %v81 = vpack.c.b16 %v68, %v67
  %v82 = vpack.c.b16 %v70, %v69
  %v83 = vpack.c.b16 %v72, %v71
  %v84 = vpack.c.b16 %v74, %v73
  %v85 = vpack.c.b16 %v76, %v75
  %v86 = vpack.c.b16 %v78, %v77
  %95 = vmatprep.subr.bf16.mxu0 0
  %96 = vmatpush1.bf16.msra.mxu0 %v79
  %97 = vmatprep.subr.bf16.mxu0 0
  %98 = vmatpush1.bf16.msra.mxu0 %v80
  %99 = vmatprep.subr.bf16.mxu0 0
  %100 = vmatpush1.bf16.msra.mxu0 %v81
  %101 = vmatprep.subr.bf16.mxu0 0
  %102 = vmatpush1.bf16.msra.mxu0 %v82
  %103 = vmatprep.subr.bf16.mxu0 0
  %104 = vmatpush1.bf16.msra.mxu0 %v83
  %105 = vmatprep.subr.bf16.mxu0 0
  %106 = vmatpush1.bf16.msra.mxu0 %v84
  %107 = vmatprep.subr.bf16.mxu0 0
  %108 = vmatpush1.bf16.msra.mxu0 %v85
  %109 = vmatprep.subr.bf16.mxu0 0
  %110 = vmatpush1.bf16.msra.mxu0 %v86
  %111 = vmatprep.subr.bf16.mxu0 0
  %112 = vmatpush1.bf16.msra.mxu0 0
  %113 = vmatprep.subr.bf16.mxu0 0
  %114 = vmatpush1.bf16.msra.mxu0 0
  %115 = vmatprep.subr.bf16.mxu0 0
  %116 = vmatpush1.bf16.msra.mxu0 0
  %117 = vmatprep.subr.bf16.mxu0 0
  %118 = vmatpush1.bf16.msra.mxu0 0
  %119 = vmatprep.subr.bf16.mxu0 0
  %120 = vmatpush1.bf16.msra.mxu0 0
  %121 = vmatprep.subr.bf16.mxu0 0
  %122 = vmatpush1.bf16.msra.mxu0 0
  %123 = vmatprep.subr.bf16.mxu0 0
  %124 = vmatpush1.bf16.msra.mxu0 0
  %125 = vmatprep.subr.bf16.mxu0 0
  %126 = vmatpush1.bf16.msra.mxu0 0
  %127 = vmatprep.mubr.bf16.mxu0 0
  %128 = vmatmul.mubr.bf16.gmra.mrb[0].mxu0 %v45
  %v129 = vpop.f32.mrb[0].mxu0
  %v130 = vadd.f32 0.0, %v129
  %v131 = vpop.f32.mrb[0].mxu0
  %v132 = vpop.f32.mrb[0].mxu0
  %v133 = vadd.f32 0.0, %v132
  %v134 = vpop.f32.mrb[0].mxu0
  %135 = vdwg.mxu0
  %v136 = vadd.f32 %v21, %v130
  %v137 = vadd.f32 %v22, %v133
  %138 = vst [vmem:[#allocation2] sm:$0xff] %v136
  %139 = vst [vmem:[#allocation2 + $0x8] sm:$0xff] %v137
  // Predicated region
  $region18: #{_lambda_.81} parent=0 // pred_check
    %p140 = pneg %p15
  $region19: #{_lambda_.81} parent=0 // pred_check_branch
    %142 = sbr.rel (%p140) target = $region21
  $region20: #{_lambda_.81} parent=0 // pred_region
    %v143 = vld [vmem:[#allocation2] sm:$0xff]
    %v144 = vld [vmem:[#allocation2 + $0x8] sm:$0xff]
    %v145 = vld [vmem:[%s2] sm:$0x1]
    %v147 = vlaneseq
    %v148 = vshrl.u32 %v147, 7
    %v149 = vsub.s32 0, %v148
    %v150 = vrot.slane %v145, %v149
    %v152 = vadd.f32 %v143, %v150
    %v153 = vadd.f32 %v144, %v150
    %154 = vst [vmem:[%s3] sm:$0xff] %v152
    %155 = vst [vmem:[%s3 + $0x8] sm:$0xff] %v153
  $region21: #{_lambda_.81} parent=0 // pred_fallthru
    _
  // Predicated region
  $region22: #{_lambda_.81} parent=0 // pred_check
    _
  $region23: #{_lambda_.81} parent=0 // pred_check_branch
    %157 = sbr.rel (0) target = $region25
  $region24: #{_lambda_.81} parent=0 // pred_region
    _
  $region25: #{_lambda_.81} parent=0 // pred_fallthru
    _
  // Predicated region
  $region26: #{_lambda_.81} parent=0 // pred_check
    _
  $region27: #{_lambda_.81} parent=0 // pred_check_branch
    %159 = sbr.rel (0) target = $region29
  $region28: #{_lambda_.81} parent=0 // pred_region
    _
  $region29: #{_lambda_.81} parent=0 // pred_fallthru
    _

</llo_original>
